<compile_context>
chip_gen: v5e
topology: v5e:2x2
jax: 0.10.0
libtpu: 0.0.40
codegen_flags: <defaults>
</compile_context>

<pallas_src>
import jax
import jax.numpy as jnp
from jax import lax
from jax.experimental import pallas as pl
from jax.experimental.pallas import tpu as pltpu


def siamese_lstm_kernel(x1_ref, x2_ref,
                        wih0_ref, whh_ref, b0_ref,
                        wih1_ref, b1_ref,
                        wout_ref, bout_ref,
                        out_ref,
                        xg_ref):
    H = wih1_ref.shape[0]      # hidden dim
    G = 4 * H                  # gates per layer

    wih0 = wih0_ref[...]       # (E, 4H)
    whh = whh_ref[...]         # (2H, 8H) block-diagonal [Whh0, 0; 0, Whh1]
    b0 = b0_ref[...]           # (1, 4H) = b_ih_l0 + b_hh_l0
    wih1 = wih1_ref[...]       # (H, 4H)
    b1 = b1_ref[...]           # (1, 4H) = b_ih_l1 + b_hh_l1
    wout = wout_ref[...]       # (1, H)
    bout = bout_ref[...]       # (1, 1)

    def gate_update(g, c):
        # Full-vreg transcendentals once each, then cheap static lane slices.
        sg = jax.nn.sigmoid(g)                    # (1, 4H)
        tg = jnp.tanh(g)                          # (1, 4H)
        i = sg[:, 0:H]
        f = sg[:, H:2 * H]
        gg = tg[:, 2 * H:3 * H]
        o = sg[:, 3 * H:4 * H]
        c_new = f * c + i * gg
        h_new = o * jnp.tanh(c_new)
        return h_new, c_new

    def run_seq(x_ref, carry):
        L = x_ref.shape[0]
        # Hoisted layer-0 input projection (combined bias folded in): one
        # (L, E) @ (E, 4H) matmul instead of L degenerate (1, E) matmuls.
        xg_ref[0:L, :] = (
            jnp.dot(x_ref[...], wih0, preferred_element_type=jnp.float32) + b0)

        def body(t, c):
            h_cat, c0, c1 = c                     # h_cat = [h0 | h1], (1, 2H)
            # Single fused recurrent matmul for both layers: (1,2H)@(2H,8H).
            gh = jnp.dot(h_cat, whh, preferred_element_type=jnp.float32)  # (1, 8H)
            # ---- layer 0 ----
            g0 = xg_ref[pl.ds(t, 1), :] + gh[:, 0:G]
            h0n, c0n = gate_update(g0, c0)
            # ---- layer 1 (depends on h0n of same step: unavoidably serial) ----
            g1 = (jnp.dot(h0n, wih1, preferred_element_type=jnp.float32)
                  + gh[:, G:2 * G] + b1)
            h1n, c1n = gate_update(g1, c1)
            return jnp.concatenate([h0n, h1n], axis=-1), c0n, c1n

        # L is static -> fully unrolled; gives the scheduler cross-step visibility.
        return lax.fori_loop(0, L, body, carry, unroll=True)

    zeros_h = jnp.zeros((1, 2 * H), jnp.float32)
    zeros_c = jnp.zeros((1, H), jnp.float32)
    carry = (zeros_h, zeros_c, zeros_c)

    # Sequence 1: hidden state starts at zeros (initHidden).
    carry = run_seq(x1_ref, carry)
    s1 = jnp.sum(carry[0][:, H:2 * H] * wout, axis=-1, keepdims=True) + bout  # (1,1)

    # Sequence 2: state carried over (PyTorch module does not reset self.hidden).
    carry = run_seq(x2_ref, carry)
    s2 = jnp.sum(carry[0][:, H:2 * H] * wout, axis=-1, keepdims=True) + bout  # (1,1)

    d = -jnp.abs(s1 - s2)
    # Softmax over a length-1 axis (== 1.0); kept to match F.softmax in PyTorch.
    out_ref[...] = jax.nn.softmax(d, axis=-1)


def siamese_lstm_forward(input1, input2, params):
    emb = params["embedding"]
    # TODO(synk): embedding lookup is a data-dependent gather; kept in plain JAX.
    x1 = jnp.take(emb, input1, axis=0).astype(jnp.float32)   # (seq1, E)
    x2 = jnp.take(emb, input2, axis=0).astype(jnp.float32)   # (seq2, E)

    H = params["whh0_t"].shape[0]
    # Host-side packing of the two recurrent weights into one block-diagonal
    # (2H, 8H) operand so the kernel issues one recurrent matmul per step.
    whh_pack = jnp.zeros((2 * H, 8 * H), jnp.float32)
    whh_pack = whh_pack.at[:H, :4 * H].set(params["whh0_t"])
    whh_pack = whh_pack.at[H:, 4 * H:].set(params["whh1_t"])

    kernel_args = (
        x1, x2,
        params["wih0_t"], whh_pack, params["b0"],
        params["wih1_t"], params["b1"],
        params["wout_t"], params["bout"],
    )
    max_len = max(x1.shape[0], x2.shape[0])
    vmem = pl.BlockSpec(memory_space=pltpu.MemorySpace.VMEM)
    out = pl.pallas_call(
        siamese_lstm_kernel,
        out_shape=jax.ShapeDtypeStruct((1, 1), jnp.float32),
        in_specs=[vmem] * len(kernel_args),
        out_specs=vmem,
        scratch_shapes=[pltpu.VMEM((max_len, 4 * H), jnp.float32)],
    )(*kernel_args)
    return out.reshape((1,))   # same shape as PyTorch F.softmax result


def init_params(key, vocab_size, embedding_dim, hdim):
    ks = jax.random.split(key, 9)
    s = float(hdim) ** -0.5

    def u(k, shape):
        return jax.random.uniform(k, shape, jnp.float32, -s, s)

    return {
        "embedding": jax.random.normal(ks[0], (vocab_size, embedding_dim), jnp.float32),
        # layer 0 (weights pre-transposed so the kernel does x @ W)
        "wih0_t": u(ks[1], (embedding_dim, 4 * hdim)),
        "whh0_t": u(ks[2], (hdim, 4 * hdim)),
        "b0":     u(ks[3], (1, 4 * hdim)),          # b_ih_l0 + b_hh_l0 combined
        # layer 1
        "wih1_t": u(ks[4], (hdim, 4 * hdim)),
        "whh1_t": u(ks[5], (hdim, 4 * hdim)),
        "b1":     u(ks[6], (1, 4 * hdim)),          # b_ih_l1 + b_hh_l1 combined
        # output linear (hdim -> 1), stored as a row vector
        "wout_t": u(ks[7], (1, hdim)),
        "bout":   u(ks[8], (1, 1)),
    }


if __name__ == "__main__":
    vocab_size, embedding_dim, hdim = 50, 32, 16
    seq_len = 8

    key = jax.random.PRNGKey(0)
    pkey, k1, k2 = jax.random.split(key, 3)
    params = init_params(pkey, vocab_size, embedding_dim, hdim)

    input1 = jax.random.randint(k1, (seq_len,), 0, vocab_size, jnp.int32)
    input2 = jax.random.randint(k2, (seq_len,), 0, vocab_size, jnp.int32)

    fwd = jax.jit(siamese_lstm_forward)
    out = fwd(input1, input2, params)
    jax.block_until_ready(out)
    assert out.shape == (1,)
    print("KERNEL_OK")
</pallas_src>

<mosaic_0001>
module attributes {stable_mosaic.version = 11 : i64} {
  func.func @siamese_lstm_kernel(%arg0: memref<8x32xf32, #tpu.memory_space<vmem>>, %arg1: memref<8x32xf32, #tpu.memory_space<vmem>>, %arg2: memref<32x64xf32, #tpu.memory_space<vmem>>, %arg3: memref<32x128xf32, #tpu.memory_space<vmem>>, %arg4: memref<1x64xf32, #tpu.memory_space<vmem>>, %arg5: memref<16x64xf32, #tpu.memory_space<vmem>>, %arg6: memref<1x64xf32, #tpu.memory_space<vmem>>, %arg7: memref<1x16xf32, #tpu.memory_space<vmem>>, %arg8: memref<1x1xf32, #tpu.memory_space<vmem>>, %arg9: memref<1x1xf32, #tpu.memory_space<vmem>>, %arg10: memref<8x64xf32, #tpu.memory_space<vmem>>) attributes {dimension_semantics = [], scalar_prefetch = 0 : i64, scratch_operands = 1 : i64, tpu.core_type = #tpu.core_type<tc>} {
    %c0 = arith.constant 0 : index
    %c0_0 = arith.constant 0 : index
    %0 = vector.load %arg2[%c0, %c0_0] : memref<32x64xf32, #tpu.memory_space<vmem>>, vector<32x64xf32>
    %c0_1 = arith.constant 0 : index
    %c0_2 = arith.constant 0 : index
    %1 = vector.load %arg3[%c0_1, %c0_2] : memref<32x128xf32, #tpu.memory_space<vmem>>, vector<32x128xf32>
    %c0_3 = arith.constant 0 : index
    %c0_4 = arith.constant 0 : index
    %2 = vector.load %arg4[%c0_3, %c0_4] : memref<1x64xf32, #tpu.memory_space<vmem>>, vector<1x64xf32>
    %c0_5 = arith.constant 0 : index
    %c0_6 = arith.constant 0 : index
    %3 = vector.load %arg5[%c0_5, %c0_6] : memref<16x64xf32, #tpu.memory_space<vmem>>, vector<16x64xf32>
    %c0_7 = arith.constant 0 : index
    %c0_8 = arith.constant 0 : index
    %4 = vector.load %arg6[%c0_7, %c0_8] : memref<1x64xf32, #tpu.memory_space<vmem>>, vector<1x64xf32>
    %c0_9 = arith.constant 0 : index
    %c0_10 = arith.constant 0 : index
    %5 = vector.load %arg7[%c0_9, %c0_10] : memref<1x16xf32, #tpu.memory_space<vmem>>, vector<1x16xf32>
    %c0_11 = arith.constant 0 : index
    %c0_12 = arith.constant 0 : index
    %6 = vector.load %arg8[%c0_11, %c0_12] : memref<1x1xf32, #tpu.memory_space<vmem>>, vector<1x1xf32>
    %cst = arith.constant 0.000000e+00 : f32
    %7 = vector.broadcast %cst : f32 to vector<1x32xf32>
    %cst_13 = arith.constant 0.000000e+00 : f32
    %8 = vector.broadcast %cst_13 : f32 to vector<1x16xf32>
    %c0_14 = arith.constant 0 : index
    %c0_15 = arith.constant 0 : index
    %9 = vector.load %arg0[%c0_14, %c0_15] : memref<8x32xf32, #tpu.memory_space<vmem>>, vector<8x32xf32>
    %cst_16 = arith.constant dense<0.000000e+00> : vector<8x64xf32>
    %10 = tpu.matmul %9, %0, %cst_16 {dimension_numbers = #tpu.dot_dimension_numbers<[1], [0], [0], [1], [0, 0, 1, 1], [], []>} : vector<8x32xf32>, vector<32x64xf32>, vector<8x64xf32> -> vector<8x64xf32>
    %11 = vector.broadcast %2 : vector<1x64xf32> to vector<8x64xf32>
    %12 = arith.addf %10, %11 : vector<8x64xf32>
    %c0_17 = arith.constant 0 : index
    %c0_18 = arith.constant 0 : index
    %13 = vector.load %arg10[%c0_17, %c0_18] : memref<8x64xf32, #tpu.memory_space<vmem>>, vector<8x64xf32>
    tpu.vector_store %arg10[%c0_17, %c0_18], %12 {strides = array<i32>} : memref<8x64xf32, #tpu.memory_space<vmem>>, vector<8x64xf32>,
    %c0_i32 = arith.constant 0 : i32
    %cst_19 = arith.constant dense<0.000000e+00> : vector<1x128xf32>
    %14 = tpu.matmul %7, %1, %cst_19 {dimension_numbers = #tpu.dot_dimension_numbers<[1], [0], [0], [1], [0, 0, 1, 1], [], []>} : vector<1x32xf32>, vector<32x128xf32>, vector<1x128xf32> -> vector<1x128xf32>
    %15 = arith.index_cast %c0_i32 : i32 to index
    %c0_20 = arith.constant 0 : index
    %16 = vector.load %arg10[%15, %c0_20] : memref<8x64xf32, #tpu.memory_space<vmem>>, vector<1x64xf32>
    %17 = vector.extract_strided_slice %14 {offsets = [0, 0], sizes = [1, 64], strides = [1, 1]} : vector<1x128xf32> to vector<1x64xf32>
    %18 = arith.addf %16, %17 : vector<1x64xf32>
    %19 = arith.negf %18 : vector<1x64xf32>
    %20 = math.exp %19 : vector<1x64xf32>
    %cst_21 = arith.constant 1.000000e+00 : f32
    %21 = vector.broadcast %cst_21 : f32 to vector<1x64xf32>
    %22 = arith.addf %21, %20 : vector<1x64xf32>
    %23 = arith.divf %21, %22 : vector<1x64xf32>
    %24 = math.tanh %18 : vector<1x64xf32>
    %25 = vector.extract_strided_slice %23 {offsets = [0, 0], sizes = [1, 16], strides = [1, 1]} : vector<1x64xf32> to vector<1x16xf32>
    %26 = vector.extract_strided_slice %23 {offsets = [0, 16], sizes = [1, 16], strides = [1, 1]} : vector<1x64xf32> to vector<1x16xf32>
    %27 = vector.extract_strided_slice %24 {offsets = [0, 32], sizes = [1, 16], strides = [1, 1]} : vector<1x64xf32> to vector<1x16xf32>
    %28 = vector.extract_strided_slice %23 {offsets = [0, 48], sizes = [1, 16], strides = [1, 1]} : vector<1x64xf32> to vector<1x16xf32>
    %29 = arith.mulf %26, %8 : vector<1x16xf32>
    %30 = arith.mulf %25, %27 : vector<1x16xf32>
    %31 = arith.addf %29, %30 : vector<1x16xf32>
    %32 = math.tanh %31 : vector<1x16xf32>
    %33 = arith.mulf %28, %32 : vector<1x16xf32>
    %cst_22 = arith.constant dense<0.000000e+00> : vector<1x64xf32>
    %34 = tpu.matmul %33, %3, %cst_22 {dimension_numbers = #tpu.dot_dimension_numbers<[1], [0], [0], [1], [0, 0, 1, 1], [], []>} : vector<1x16xf32>, vector<16x64xf32>, vector<1x64xf32> -> vector<1x64xf32>
    %35 = vector.extract_strided_slice %14 {offsets = [0, 64], sizes = [1, 64], strides = [1, 1]} : vector<1x128xf32> to vector<1x64xf32>
    %36 = arith.addf %34, %35 : vector<1x64xf32>
    %37 = arith.addf %36, %4 : vector<1x64xf32>
    %38 = arith.negf %37 : vector<1x64xf32>
    %39 = math.exp %38 : vector<1x64xf32>
    %cst_23 = arith.constant 1.000000e+00 : f32
    %40 = vector.broadcast %cst_23 : f32 to vector<1x64xf32>
    %41 = arith.addf %40, %39 : vector<1x64xf32>
    %42 = arith.divf %40, %41 : vector<1x64xf32>
    %43 = math.tanh %37 : vector<1x64xf32>
    %44 = vector.extract_strided_slice %42 {offsets = [0, 0], sizes = [1, 16], strides = [1, 1]} : vector<1x64xf32> to vector<1x16xf32>
    %45 = vector.extract_strided_slice %42 {offsets = [0, 16], sizes = [1, 16], strides = [1, 1]} : vector<1x64xf32> to vector<1x16xf32>
    %46 = vector.extract_strided_slice %43 {offsets = [0, 32], sizes = [1, 16], strides = [1, 1]} : vector<1x64xf32> to vector<1x16xf32>
    %47 = vector.extract_strided_slice %42 {offsets = [0, 48], sizes = [1, 16], strides = [1, 1]} : vector<1x64xf32> to vector<1x16xf32>
    %48 = arith.mulf %45, %8 : vector<1x16xf32>
    %49 = arith.mulf %44, %46 : vector<1x16xf32>
    %50 = arith.addf %48, %49 : vector<1x16xf32>
    %51 = math.tanh %50 : vector<1x16xf32>
    %52 = arith.mulf %47, %51 : vector<1x16xf32>
    %53 = tpu.concatenate %33, %52 in 1 : vector<1x16xf32>, vector<1x16xf32> -> vector<1x32xf32>
    %c1_i32 = arith.constant 1 : i32
    %cst_24 = arith.constant dense<0.000000e+00> : vector<1x128xf32>
    %54 = tpu.matmul %53, %1, %cst_24 {dimension_numbers = #tpu.dot_dimension_numbers<[1], [0], [0], [1], [0, 0, 1, 1], [], []>} : vector<1x32xf32>, vector<32x128xf32>, vector<1x128xf32> -> vector<1x128xf32>
    %55 = arith.index_cast %c1_i32 : i32 to index
    %c0_25 = arith.constant 0 : index
    %56 = vector.load %arg10[%55, %c0_25] : memref<8x64xf32, #tpu.memory_space<vmem>>, vector<1x64xf32>
    %57 = vector.extract_strided_slice %54 {offsets = [0, 0], sizes = [1, 64], strides = [1, 1]} : vector<1x128xf32> to vector<1x64xf32>
    %58 = arith.addf %56, %57 : vector<1x64xf32>
    %59 = arith.negf %58 : vector<1x64xf32>
    %60 = math.exp %59 : vector<1x64xf32>
    %cst_26 = arith.constant 1.000000e+00 : f32
    %61 = vector.broadcast %cst_26 : f32 to vector<1x64xf32>
    %62 = arith.addf %61, %60 : vector<1x64xf32>
    %63 = arith.divf %61, %62 : vector<1x64xf32>
    %64 = math.tanh %58 : vector<1x64xf32>
    %65 = vector.extract_strided_slice %63 {offsets = [0, 0], sizes = [1, 16], strides = [1, 1]} : vector<1x64xf32> to vector<1x16xf32>
    %66 = vector.extract_strided_slice %63 {offsets = [0, 16], sizes = [1, 16], strides = [1, 1]} : vector<1x64xf32> to vector<1x16xf32>
    %67 = vector.extract_strided_slice %64 {offsets = [0, 32], sizes = [1, 16], strides = [1, 1]} : vector<1x64xf32> to vector<1x16xf32>
    %68 = vector.extract_strided_slice %63 {offsets = [0, 48], sizes = [1, 16], strides = [1, 1]} : vector<1x64xf32> to vector<1x16xf32>
    %69 = arith.mulf %66, %31 : vector<1x16xf32>
    %70 = arith.mulf %65, %67 : vector<1x16xf32>
    %71 = arith.addf %69, %70 : vector<1x16xf32>
    %72 = math.tanh %71 : vector<1x16xf32>
    %73 = arith.mulf %68, %72 : vector<1x16xf32>
    %cst_27 = arith.constant dense<0.000000e+00> : vector<1x64xf32>
    %74 = tpu.matmul %73, %3, %cst_27 {dimension_numbers = #tpu.dot_dimension_numbers<[1], [0], [0], [1], [0, 0, 1, 1], [], []>} : vector<1x16xf32>, vector<16x64xf32>, vector<1x64xf32> -> vector<1x64xf32>
    %75 = vector.extract_strided_slice %54 {offsets = [0, 64], sizes = [1, 64], strides = [1, 1]} : vector<1x128xf32> to vector<1x64xf32>
    %76 = arith.addf %74, %75 : vector<1x64xf32>
    %77 = arith.addf %76, %4 : vector<1x64xf32>
    %78 = arith.negf %77 : vector<1x64xf32>
    %79 = math.exp %78 : vector<1x64xf32>
    %cst_28 = arith.constant 1.000000e+00 : f32
    %80 = vector.broadcast %cst_28 : f32 to vector<1x64xf32>
    %81 = arith.addf %80, %79 : vector<1x64xf32>
    %82 = arith.divf %80, %81 : vector<1x64xf32>
    %83 = math.tanh %77 : vector<1x64xf32>
    %84 = vector.extract_strided_slice %82 {offsets = [0, 0], sizes = [1, 16], strides = [1, 1]} : vector<1x64xf32> to vector<1x16xf32>
    %85 = vector.extract_strided_slice %82 {offsets = [0, 16], sizes = [1, 16], strides = [1, 1]} : vector<1x64xf32> to vector<1x16xf32>
    %86 = vector.extract_strided_slice %83 {offsets = [0, 32], sizes = [1, 16], strides = [1, 1]} : vector<1x64xf32> to vector<1x16xf32>
    %87 = vector.extract_strided_slice %82 {offsets = [0, 48], sizes = [1, 16], strides = [1, 1]} : vector<1x64xf32> to vector<1x16xf32>
    %88 = arith.mulf %85, %50 : vector<1x16xf32>
    %89 = arith.mulf %84, %86 : vector<1x16xf32>
    %90 = arith.addf %88, %89 : vector<1x16xf32>
    %91 = math.tanh %90 : vector<1x16xf32>
    %92 = arith.mulf %87, %91 : vector<1x16xf32>
    %93 = tpu.concatenate %73, %92 in 1 : vector<1x16xf32>, vector<1x16xf32> -> vector<1x32xf32>
    %c2_i32 = arith.constant 2 : i32
    %cst_29 = arith.constant dense<0.000000e+00> : vector<1x128xf32>
    %94 = tpu.matmul %93, %1, %cst_29 {dimension_numbers = #tpu.dot_dimension_numbers<[1], [0], [0], [1], [0, 0, 1, 1], [], []>} : vector<1x32xf32>, vector<32x128xf32>, vector<1x128xf32> -> vector<1x128xf32>
    %95 = arith.index_cast %c2_i32 : i32 to index
    %c0_30 = arith.constant 0 : index
    %96 = vector.load %arg10[%95, %c0_30] : memref<8x64xf32, #tpu.memory_space<vmem>>, vector<1x64xf32>
    %97 = vector.extract_strided_slice %94 {offsets = [0, 0], sizes = [1, 64], strides = [1, 1]} : vector<1x128xf32> to vector<1x64xf32>
    %98 = arith.addf %96, %97 : vector<1x64xf32>
    %99 = arith.negf %98 : vector<1x64xf32>
    %100 = math.exp %99 : vector<1x64xf32>
    %cst_31 = arith.constant 1.000000e+00 : f32
    %101 = vector.broadcast %cst_31 : f32 to vector<1x64xf32>
    %102 = arith.addf %101, %100 : vector<1x64xf32>
    %103 = arith.divf %101, %102 : vector<1x64xf32>
    %104 = math.tanh %98 : vector<1x64xf32>
    %105 = vector.extract_strided_slice %103 {offsets = [0, 0], sizes = [1, 16], strides = [1, 1]} : vector<1x64xf32> to vector<1x16xf32>
    %106 = vector.extract_strided_slice %103 {offsets = [0, 16], sizes = [1, 16], strides = [1, 1]} : vector<1x64xf32> to vector<1x16xf32>
    %107 = vector.extract_strided_slice %104 {offsets = [0, 32], sizes = [1, 16], strides = [1, 1]} : vector<1x64xf32> to vector<1x16xf32>
    %108 = vector.extract_strided_slice %103 {offsets = [0, 48], sizes = [1, 16], strides = [1, 1]} : vector<1x64xf32> to vector<1x16xf32>
    %109 = arith.mulf %106, %71 : vector<1x16xf32>
    %110 = arith.mulf %105, %107 : vector<1x16xf32>
    %111 = arith.addf %109, %110 : vector<1x16xf32>
    %112 = math.tanh %111 : vector<1x16xf32>
    %113 = arith.mulf %108, %112 : vector<1x16xf32>
    %cst_32 = arith.constant dense<0.000000e+00> : vector<1x64xf32>
    %114 = tpu.matmul %113, %3, %cst_32 {dimension_numbers = #tpu.dot_dimension_numbers<[1], [0], [0], [1], [0, 0, 1, 1], [], []>} : vector<1x16xf32>, vector<16x64xf32>, vector<1x64xf32> -> vector<1x64xf32>
    %115 = vector.extract_strided_slice %94 {offsets = [0, 64], sizes = [1, 64], strides = [1, 1]} : vector<1x128xf32> to vector<1x64xf32>
    %116 = arith.addf %114, %115 : vector<1x64xf32>
    %117 = arith.addf %116, %4 : vector<1x64xf32>
    %118 = arith.negf %117 : vector<1x64xf32>
    %119 = math.exp %118 : vector<1x64xf32>
    %cst_33 = arith.constant 1.000000e+00 : f32
    %120 = vector.broadcast %cst_33 : f32 to vector<1x64xf32>
    %121 = arith.addf %120, %119 : vector<1x64xf32>
    %122 = arith.divf %120, %121 : vector<1x64xf32>
    %123 = math.tanh %117 : vector<1x64xf32>
    %124 = vector.extract_strided_slice %122 {offsets = [0, 0], sizes = [1, 16], strides = [1, 1]} : vector<1x64xf32> to vector<1x16xf32>
    %125 = vector.extract_strided_slice %122 {offsets = [0, 16], sizes = [1, 16], strides = [1, 1]} : vector<1x64xf32> to vector<1x16xf32>
    %126 = vector.extract_strided_slice %123 {offsets = [0, 32], sizes = [1, 16], strides = [1, 1]} : vector<1x64xf32> to vector<1x16xf32>
    %127 = vector.extract_strided_slice %122 {offsets = [0, 48], sizes = [1, 16], strides = [1, 1]} : vector<1x64xf32> to vector<1x16xf32>
    %128 = arith.mulf %125, %90 : vector<1x16xf32>
    %129 = arith.mulf %124, %126 : vector<1x16xf32>
    %130 = arith.addf %128, %129 : vector<1x16xf32>
    %131 = math.tanh %130 : vector<1x16xf32>
    %132 = arith.mulf %127, %131 : vector<1x16xf32>
    %133 = tpu.concatenate %113, %132 in 1 : vector<1x16xf32>, vector<1x16xf32> -> vector<1x32xf32>
    %c3_i32 = arith.constant 3 : i32
    %cst_34 = arith.constant dense<0.000000e+00> : vector<1x128xf32>
    %134 = tpu.matmul %133, %1, %cst_34 {dimension_numbers = #tpu.dot_dimension_numbers<[1], [0], [0], [1], [0, 0, 1, 1], [], []>} : vector<1x32xf32>, vector<32x128xf32>, vector<1x128xf32> -> vector<1x128xf32>
    %135 = arith.index_cast %c3_i32 : i32 to index
    %c0_35 = arith.constant 0 : index
    %136 = vector.load %arg10[%135, %c0_35] : memref<8x64xf32, #tpu.memory_space<vmem>>, vector<1x64xf32>
    %137 = vector.extract_strided_slice %134 {offsets = [0, 0], sizes = [1, 64], strides = [1, 1]} : vector<1x128xf32> to vector<1x64xf32>
    %138 = arith.addf %136, %137 : vector<1x64xf32>
    %139 = arith.negf %138 : vector<1x64xf32>
    %140 = math.exp %139 : vector<1x64xf32>
    %cst_36 = arith.constant 1.000000e+00 : f32
    %141 = vector.broadcast %cst_36 : f32 to vector<1x64xf32>
    %142 = arith.addf %141, %140 : vector<1x64xf32>
    %143 = arith.divf %141, %142 : vector<1x64xf32>
    %144 = math.tanh %138 : vector<1x64xf32>
    %145 = vector.extract_strided_slice %143 {offsets = [0, 0], sizes = [1, 16], strides = [1, 1]} : vector<1x64xf32> to vector<1x16xf32>
    %146 = vector.extract_strided_slice %143 {offsets = [0, 16], sizes = [1, 16], strides = [1, 1]} : vector<1x64xf32> to vector<1x16xf32>
    %147 = vector.extract_strided_slice %144 {offsets = [0, 32], sizes = [1, 16], strides = [1, 1]} : vector<1x64xf32> to vector<1x16xf32>
    %148 = vector.extract_strided_slice %143 {offsets = [0, 48], sizes = [1, 16], strides = [1, 1]} : vector<1x64xf32> to vector<1x16xf32>
    %149 = arith.mulf %146, %111 : vector<1x16xf32>
    %150 = arith.mulf %145, %147 : vector<1x16xf32>
    %151 = arith.addf %149, %150 : vector<1x16xf32>
    %152 = math.tanh %151 : vector<1x16xf32>
    %153 = arith.mulf %148, %152 : vector<1x16xf32>
    %cst_37 = arith.constant dense<0.000000e+00> : vector<1x64xf32>
    %154 = tpu.matmul %153, %3, %cst_37 {dimension_numbers = #tpu.dot_dimension_numbers<[1], [0], [0], [1], [0, 0, 1, 1], [], []>} : vector<1x16xf32>, vector<16x64xf32>, vector<1x64xf32> -> vector<1x64xf32>
    %155 = vector.extract_strided_slice %134 {offsets = [0, 64], sizes = [1, 64], strides = [1, 1]} : vector<1x128xf32> to vector<1x64xf32>
    %156 = arith.addf %154, %155 : vector<1x64xf32>
    %157 = arith.addf %156, %4 : vector<1x64xf32>
    %158 = arith.negf %157 : vector<1x64xf32>
    %159 = math.exp %158 : vector<1x64xf32>
    %cst_38 = arith.constant 1.000000e+00 : f32
    %160 = vector.broadcast %cst_38 : f32 to vector<1x64xf32>
    %161 = arith.addf %160, %159 : vector<1x64xf32>
    %162 = arith.divf %160, %161 : vector<1x64xf32>
    %163 = math.tanh %157 : vector<1x64xf32>
    %164 = vector.extract_strided_slice %162 {offsets = [0, 0], sizes = [1, 16], strides = [1, 1]} : vector<1x64xf32> to vector<1x16xf32>
    %165 = vector.extract_strided_slice %162 {offsets = [0, 16], sizes = [1, 16], strides = [1, 1]} : vector<1x64xf32> to vector<1x16xf32>
    %166 = vector.extract_strided_slice %163 {offsets = [0, 32], sizes = [1, 16], strides = [1, 1]} : vector<1x64xf32> to vector<1x16xf32>
    %167 = vector.extract_strided_slice %162 {offsets = [0, 48], sizes = [1, 16], strides = [1, 1]} : vector<1x64xf32> to vector<1x16xf32>
    %168 = arith.mulf %165, %130 : vector<1x16xf32>
    %169 = arith.mulf %164, %166 : vector<1x16xf32>
    %170 = arith.addf %168, %169 : vector<1x16xf32>
    %171 = math.tanh %170 : vector<1x16xf32>
    %172 = arith.mulf %167, %171 : vector<1x16xf32>
    %173 = tpu.concatenate %153, %172 in 1 : vector<1x16xf32>, vector<1x16xf32> -> vector<1x32xf32>
    %c4_i32 = arith.constant 4 : i32
    %cst_39 = arith.constant dense<0.000000e+00> : vector<1x128xf32>
    %174 = tpu.matmul %173, %1, %cst_39 {dimension_numbers = #tpu.dot_dimension_numbers<[1], [0], [0], [1], [0, 0, 1, 1], [], []>} : vector<1x32xf32>, vector<32x128xf32>, vector<1x128xf32> -> vector<1x128xf32>
    %175 = arith.index_cast %c4_i32 : i32 to index
    %c0_40 = arith.constant 0 : index
    %176 = vector.load %arg10[%175, %c0_40] : memref<8x64xf32, #tpu.memory_space<vmem>>, vector<1x64xf32>
    %177 = vector.extract_strided_slice %174 {offsets = [0, 0], sizes = [1, 64], strides = [1, 1]} : vector<1x128xf32> to vector<1x64xf32>
    %178 = arith.addf %176, %177 : vector<1x64xf32>
    %179 = arith.negf %178 : vector<1x64xf32>
    %180 = math.exp %179 : vector<1x64xf32>
    %cst_41 = arith.constant 1.000000e+00 : f32
    %181 = vector.broadcast %cst_41 : f32 to vector<1x64xf32>
    %182 = arith.addf %181, %180 : vector<1x64xf32>
    %183 = arith.divf %181, %182 : vector<1x64xf32>
    %184 = math.tanh %178 : vector<1x64xf32>
    %185 = vector.extract_strided_slice %183 {offsets = [0, 0], sizes = [1, 16], strides = [1, 1]} : vector<1x64xf32> to vector<1x16xf32>
    %186 = vector.extract_strided_slice %183 {offsets = [0, 16], sizes = [1, 16], strides = [1, 1]} : vector<1x64xf32> to vector<1x16xf32>
    %187 = vector.extract_strided_slice %184 {offsets = [0, 32], sizes = [1, 16], strides = [1, 1]} : vector<1x64xf32> to vector<1x16xf32>
    %188 = vector.extract_strided_slice %183 {offsets = [0, 48], sizes = [1, 16], strides = [1, 1]} : vector<1x64xf32> to vector<1x16xf32>
    %189 = arith.mulf %186, %151 : vector<1x16xf32>
    %190 = arith.mulf %185, %187 : vector<1x16xf32>
    %191 = arith.addf %189, %190 : vector<1x16xf32>
    %192 = math.tanh %191 : vector<1x16xf32>
    %193 = arith.mulf %188, %192 : vector<1x16xf32>
    %cst_42 = arith.constant dense<0.000000e+00> : vector<1x64xf32>
    %194 = tpu.matmul %193, %3, %cst_42 {dimension_numbers = #tpu.dot_dimension_numbers<[1], [0], [0], [1], [0, 0, 1, 1], [], []>} : vector<1x16xf32>, vector<16x64xf32>, vector<1x64xf32> -> vector<1x64xf32>
    %195 = vector.extract_strided_slice %174 {offsets = [0, 64], sizes = [1, 64], strides = [1, 1]} : vector<1x128xf32> to vector<1x64xf32>
    %196 = arith.addf %194, %195 : vector<1x64xf32>
    %197 = arith.addf %196, %4 : vector<1x64xf32>
    %198 = arith.negf %197 : vector<1x64xf32>
    %199 = math.exp %198 : vector<1x64xf32>
    %cst_43 = arith.constant 1.000000e+00 : f32
    %200 = vector.broadcast %cst_43 : f32 to vector<1x64xf32>
    %201 = arith.addf %200, %199 : vector<1x64xf32>
    %202 = arith.divf %200, %201 : vector<1x64xf32>
    %203 = math.tanh %197 : vector<1x64xf32>
    %204 = vector.extract_strided_slice %202 {offsets = [0, 0], sizes = [1, 16], strides = [1, 1]} : vector<1x64xf32> to vector<1x16xf32>
    %205 = vector.extract_strided_slice %202 {offsets = [0, 16], sizes = [1, 16], strides = [1, 1]} : vector<1x64xf32> to vector<1x16xf32>
    %206 = vector.extract_strided_slice %203 {offsets = [0, 32], sizes = [1, 16], strides = [1, 1]} : vector<1x64xf32> to vector<1x16xf32>
    %207 = vector.extract_strided_slice %202 {offsets = [0, 48], sizes = [1, 16], strides = [1, 1]} : vector<1x64xf32> to vector<1x16xf32>
    %208 = arith.mulf %205, %170 : vector<1x16xf32>
    %209 = arith.mulf %204, %206 : vector<1x16xf32>
    %210 = arith.addf %208, %209 : vector<1x16xf32>
    %211 = math.tanh %210 : vector<1x16xf32>
    %212 = arith.mulf %207, %211 : vector<1x16xf32>
    %213 = tpu.concatenate %193, %212 in 1 : vector<1x16xf32>, vector<1x16xf32> -> vector<1x32xf32>
    %c5_i32 = arith.constant 5 : i32
    %cst_44 = arith.constant dense<0.000000e+00> : vector<1x128xf32>
    %214 = tpu.matmul %213, %1, %cst_44 {dimension_numbers = #tpu.dot_dimension_numbers<[1], [0], [0], [1], [0, 0, 1, 1], [], []>} : vector<1x32xf32>, vector<32x128xf32>, vector<1x128xf32> -> vector<1x128xf32>
    %215 = arith.index_cast %c5_i32 : i32 to index
    %c0_45 = arith.constant 0 : index
    %216 = vector.load %arg10[%215, %c0_45] : memref<8x64xf32, #tpu.memory_space<vmem>>, vector<1x64xf32>
    %217 = vector.extract_strided_slice %214 {offsets = [0, 0], sizes = [1, 64], strides = [1, 1]} : vector<1x128xf32> to vector<1x64xf32>
    %218 = arith.addf %216, %217 : vector<1x64xf32>
    %219 = arith.negf %218 : vector<1x64xf32>
    %220 = math.exp %219 : vector<1x64xf32>
    %cst_46 = arith.constant 1.000000e+00 : f32
    %221 = vector.broadcast %cst_46 : f32 to vector<1x64xf32>
    %222 = arith.addf %221, %220 : vector<1x64xf32>
    %223 = arith.divf %221, %222 : vector<1x64xf32>
    %224 = math.tanh %218 : vector<1x64xf32>
    %225 = vector.extract_strided_slice %223 {offsets = [0, 0], sizes = [1, 16], strides = [1, 1]} : vector<1x64xf32> to vector<1x16xf32>
    %226 = vector.extract_strided_slice %223 {offsets = [0, 16], sizes = [1, 16], strides = [1, 1]} : vector<1x64xf32> to vector<1x16xf32>
    %227 = vector.extract_strided_slice %224 {offsets = [0, 32], sizes = [1, 16], strides = [1, 1]} : vector<1x64xf32> to vector<1x16xf32>
    %228 = vector.extract_strided_slice %223 {offsets = [0, 48], sizes = [1, 16], strides = [1, 1]} : vector<1x64xf32> to vector<1x16xf32>
    %229 = arith.mulf %226, %191 : vector<1x16xf32>
    %230 = arith.mulf %225, %227 : vector<1x16xf32>
    %231 = arith.addf %229, %230 : vector<1x16xf32>
    %232 = math.tanh %231 : vector<1x16xf32>
    %233 = arith.mulf %228, %232 : vector<1x16xf32>
    %cst_47 = arith.constant dense<0.000000e+00> : vector<1x64xf32>
    %234 = tpu.matmul %233, %3, %cst_47 {dimension_numbers = #tpu.dot_dimension_numbers<[1], [0], [0], [1], [0, 0, 1, 1], [], []>} : vector<1x16xf32>, vector<16x64xf32>, vector<1x64xf32> -> vector<1x64xf32>
    %235 = vector.extract_strided_slice %214 {offsets = [0, 64], sizes = [1, 64], strides = [1, 1]} : vector<1x128xf32> to vector<1x64xf32>
    %236 = arith.addf %234, %235 : vector<1x64xf32>
    %237 = arith.addf %236, %4 : vector<1x64xf32>
    %238 = arith.negf %237 : vector<1x64xf32>
    %239 = math.exp %238 : vector<1x64xf32>
    %cst_48 = arith.constant 1.000000e+00 : f32
    %240 = vector.broadcast %cst_48 : f32 to vector<1x64xf32>
    %241 = arith.addf %240, %239 : vector<1x64xf32>
    %242 = arith.divf %240, %241 : vector<1x64xf32>
    %243 = math.tanh %237 : vector<1x64xf32>
    %244 = vector.extract_strided_slice %242 {offsets = [0, 0], sizes = [1, 16], strides = [1, 1]} : vector<1x64xf32> to vector<1x16xf32>
    %245 = vector.extract_strided_slice %242 {offsets = [0, 16], sizes = [1, 16], strides = [1, 1]} : vector<1x64xf32> to vector<1x16xf32>
    %246 = vector.extract_strided_slice %243 {offsets = [0, 32], sizes = [1, 16], strides = [1, 1]} : vector<1x64xf32> to vector<1x16xf32>
    %247 = vector.extract_strided_slice %242 {offsets = [0, 48], sizes = [1, 16], strides = [1, 1]} : vector<1x64xf32> to vector<1x16xf32>
    %248 = arith.mulf %245, %210 : vector<1x16xf32>
    %249 = arith.mulf %244, %246 : vector<1x16xf32>
    %250 = arith.addf %248, %249 : vector<1x16xf32>
    %251 = math.tanh %250 : vector<1x16xf32>
    %252 = arith.mulf %247, %251 : vector<1x16xf32>
    %253 = tpu.concatenate %233, %252 in 1 : vector<1x16xf32>, vector<1x16xf32> -> vector<1x32xf32>
    %c6_i32 = arith.constant 6 : i32
    %cst_49 = arith.constant dense<0.000000e+00> : vector<1x128xf32>
    %254 = tpu.matmul %253, %1, %cst_49 {dimension_numbers = #tpu.dot_dimension_numbers<[1], [0], [0], [1], [0, 0, 1, 1], [], []>} : vector<1x32xf32>, vector<32x128xf32>, vector<1x128xf32> -> vector<1x128xf32>
    %255 = arith.index_cast %c6_i32 : i32 to index
    %c0_50 = arith.constant 0 : index
    %256 = vector.load %arg10[%255, %c0_50] : memref<8x64xf32, #tpu.memory_space<vmem>>, vector<1x64xf32>
    %257 = vector.extract_strided_slice %254 {offsets = [0, 0], sizes = [1, 64], strides = [1, 1]} : vector<1x128xf32> to vector<1x64xf32>
    %258 = arith.addf %256, %257 : vector<1x64xf32>
    %259 = arith.negf %258 : vector<1x64xf32>
    %260 = math.exp %259 : vector<1x64xf32>
    %cst_51 = arith.constant 1.000000e+00 : f32
    %261 = vector.broadcast %cst_51 : f32 to vector<1x64xf32>
    %262 = arith.addf %261, %260 : vector<1x64xf32>
    %263 = arith.divf %261, %262 : vector<1x64xf32>
    %264 = math.tanh %258 : vector<1x64xf32>
    %265 = vector.extract_strided_slice %263 {offsets = [0, 0], sizes = [1, 16], strides = [1, 1]} : vector<1x64xf32> to vector<1x16xf32>
    %266 = vector.extract_strided_slice %263 {offsets = [0, 16], sizes = [1, 16], strides = [1, 1]} : vector<1x64xf32> to vector<1x16xf32>
    %267 = vector.extract_strided_slice %264 {offsets = [0, 32], sizes = [1, 16], strides = [1, 1]} : vector<1x64xf32> to vector<1x16xf32>
    %268 = vector.extract_strided_slice %263 {offsets = [0, 48], sizes = [1, 16], strides = [1, 1]} : vector<1x64xf32> to vector<1x16xf32>
    %269 = arith.mulf %266, %231 : vector<1x16xf32>
    %270 = arith.mulf %265, %267 : vector<1x16xf32>
    %271 = arith.addf %269, %270 : vector<1x16xf32>
    %272 = math.tanh %271 : vector<1x16xf32>
    %273 = arith.mulf %268, %272 : vector<1x16xf32>
    %cst_52 = arith.constant dense<0.000000e+00> : vector<1x64xf32>
    %274 = tpu.matmul %273, %3, %cst_52 {dimension_numbers = #tpu.dot_dimension_numbers<[1], [0], [0], [1], [0, 0, 1, 1], [], []>} : vector<1x16xf32>, vector<16x64xf32>, vector<1x64xf32> -> vector<1x64xf32>
    %275 = vector.extract_strided_slice %254 {offsets = [0, 64], sizes = [1, 64], strides = [1, 1]} : vector<1x128xf32> to vector<1x64xf32>
    %276 = arith.addf %274, %275 : vector<1x64xf32>
    %277 = arith.addf %276, %4 : vector<1x64xf32>
    %278 = arith.negf %277 : vector<1x64xf32>
    %279 = math.exp %278 : vector<1x64xf32>
    %cst_53 = arith.constant 1.000000e+00 : f32
    %280 = vector.broadcast %cst_53 : f32 to vector<1x64xf32>
    %281 = arith.addf %280, %279 : vector<1x64xf32>
    %282 = arith.divf %280, %281 : vector<1x64xf32>
    %283 = math.tanh %277 : vector<1x64xf32>
    %284 = vector.extract_strided_slice %282 {offsets = [0, 0], sizes = [1, 16], strides = [1, 1]} : vector<1x64xf32> to vector<1x16xf32>
    %285 = vector.extract_strided_slice %282 {offsets = [0, 16], sizes = [1, 16], strides = [1, 1]} : vector<1x64xf32> to vector<1x16xf32>
    %286 = vector.extract_strided_slice %283 {offsets = [0, 32], sizes = [1, 16], strides = [1, 1]} : vector<1x64xf32> to vector<1x16xf32>
    %287 = vector.extract_strided_slice %282 {offsets = [0, 48], sizes = [1, 16], strides = [1, 1]} : vector<1x64xf32> to vector<1x16xf32>
    %288 = arith.mulf %285, %250 : vector<1x16xf32>
    %289 = arith.mulf %284, %286 : vector<1x16xf32>
    %290 = arith.addf %288, %289 : vector<1x16xf32>
    %291 = math.tanh %290 : vector<1x16xf32>
    %292 = arith.mulf %287, %291 : vector<1x16xf32>
    %293 = tpu.concatenate %273, %292 in 1 : vector<1x16xf32>, vector<1x16xf32> -> vector<1x32xf32>
    %c7_i32 = arith.constant 7 : i32
    %cst_54 = arith.constant dense<0.000000e+00> : vector<1x128xf32>
    %294 = tpu.matmul %293, %1, %cst_54 {dimension_numbers = #tpu.dot_dimension_numbers<[1], [0], [0], [1], [0, 0, 1, 1], [], []>} : vector<1x32xf32>, vector<32x128xf32>, vector<1x128xf32> -> vector<1x128xf32>
    %295 = arith.index_cast %c7_i32 : i32 to index
    %c0_55 = arith.constant 0 : index
    %296 = vector.load %arg10[%295, %c0_55] : memref<8x64xf32, #tpu.memory_space<vmem>>, vector<1x64xf32>
    %297 = vector.extract_strided_slice %294 {offsets = [0, 0], sizes = [1, 64], strides = [1, 1]} : vector<1x128xf32> to vector<1x64xf32>
    %298 = arith.addf %296, %297 : vector<1x64xf32>
    %299 = arith.negf %298 : vector<1x64xf32>
    %300 = math.exp %299 : vector<1x64xf32>
    %cst_56 = arith.constant 1.000000e+00 : f32
    %301 = vector.broadcast %cst_56 : f32 to vector<1x64xf32>
    %302 = arith.addf %301, %300 : vector<1x64xf32>
    %303 = arith.divf %301, %302 : vector<1x64xf32>
    %304 = math.tanh %298 : vector<1x64xf32>
    %305 = vector.extract_strided_slice %303 {offsets = [0, 0], sizes = [1, 16], strides = [1, 1]} : vector<1x64xf32> to vector<1x16xf32>
    %306 = vector.extract_strided_slice %303 {offsets = [0, 16], sizes = [1, 16], strides = [1, 1]} : vector<1x64xf32> to vector<1x16xf32>
    %307 = vector.extract_strided_slice %304 {offsets = [0, 32], sizes = [1, 16], strides = [1, 1]} : vector<1x64xf32> to vector<1x16xf32>
    %308 = vector.extract_strided_slice %303 {offsets = [0, 48], sizes = [1, 16], strides = [1, 1]} : vector<1x64xf32> to vector<1x16xf32>
    %309 = arith.mulf %306, %271 : vector<1x16xf32>
    %310 = arith.mulf %305, %307 : vector<1x16xf32>
    %311 = arith.addf %309, %310 : vector<1x16xf32>
    %312 = math.tanh %311 : vector<1x16xf32>
    %313 = arith.mulf %308, %312 : vector<1x16xf32>
    %cst_57 = arith.constant dense<0.000000e+00> : vector<1x64xf32>
    %314 = tpu.matmul %313, %3, %cst_57 {dimension_numbers = #tpu.dot_dimension_numbers<[1], [0], [0], [1], [0, 0, 1, 1], [], []>} : vector<1x16xf32>, vector<16x64xf32>, vector<1x64xf32> -> vector<1x64xf32>
    %315 = vector.extract_strided_slice %294 {offsets = [0, 64], sizes = [1, 64], strides = [1, 1]} : vector<1x128xf32> to vector<1x64xf32>
    %316 = arith.addf %314, %315 : vector<1x64xf32>
    %317 = arith.addf %316, %4 : vector<1x64xf32>
    %318 = arith.negf %317 : vector<1x64xf32>
    %319 = math.exp %318 : vector<1x64xf32>
    %cst_58 = arith.constant 1.000000e+00 : f32
    %320 = vector.broadcast %cst_58 : f32 to vector<1x64xf32>
    %321 = arith.addf %320, %319 : vector<1x64xf32>
    %322 = arith.divf %320, %321 : vector<1x64xf32>
    %323 = math.tanh %317 : vector<1x64xf32>
    %324 = vector.extract_strided_slice %322 {offsets = [0, 0], sizes = [1, 16], strides = [1, 1]} : vector<1x64xf32> to vector<1x16xf32>
    %325 = vector.extract_strided_slice %322 {offsets = [0, 16], sizes = [1, 16], strides = [1, 1]} : vector<1x64xf32> to vector<1x16xf32>
    %326 = vector.extract_strided_slice %323 {offsets = [0, 32], sizes = [1, 16], strides = [1, 1]} : vector<1x64xf32> to vector<1x16xf32>
    %327 = vector.extract_strided_slice %322 {offsets = [0, 48], sizes = [1, 16], strides = [1, 1]} : vector<1x64xf32> to vector<1x16xf32>
    %328 = arith.mulf %325, %290 : vector<1x16xf32>
    %329 = arith.mulf %324, %326 : vector<1x16xf32>
    %330 = arith.addf %328, %329 : vector<1x16xf32>
    %331 = math.tanh %330 : vector<1x16xf32>
    %332 = arith.mulf %327, %331 : vector<1x16xf32>
    %333 = tpu.concatenate %313, %332 in 1 : vector<1x16xf32>, vector<1x16xf32> -> vector<1x32xf32>
    %c8_i32 = arith.constant 8 : i32
    %334 = vector.extract_strided_slice %333 {offsets = [0, 16], sizes = [1, 16], strides = [1, 1]} : vector<1x32xf32> to vector<1x16xf32>
    %335 = arith.mulf %334, %5 : vector<1x16xf32>
    %cst_59 = arith.constant dense<0.000000e+00> : vector<1xf32>
    %336 = vector.multi_reduction <add>, %335, %cst_59 [1] : vector<1x16xf32> to vector<1xf32>
    %337 = vector.shape_cast %336 : vector<1xf32> to vector<1x1xf32>
    %338 = arith.addf %337, %6 : vector<1x1xf32>
    %c0_60 = arith.constant 0 : index
    %c0_61 = arith.constant 0 : index
    %339 = vector.load %arg1[%c0_60, %c0_61] : memref<8x32xf32, #tpu.memory_space<vmem>>, vector<8x32xf32>
    %cst_62 = arith.constant dense<0.000000e+00> : vector<8x64xf32>
    %340 = tpu.matmul %339, %0, %cst_62 {dimension_numbers = #tpu.dot_dimension_numbers<[1], [0], [0], [1], [0, 0, 1, 1], [], []>} : vector<8x32xf32>, vector<32x64xf32>, vector<8x64xf32> -> vector<8x64xf32>
    %341 = vector.broadcast %2 : vector<1x64xf32> to vector<8x64xf32>
    %342 = arith.addf %340, %341 : vector<8x64xf32>
    %c0_63 = arith.constant 0 : index
    %c0_64 = arith.constant 0 : index
    %343 = vector.load %arg10[%c0_63, %c0_64] : memref<8x64xf32, #tpu.memory_space<vmem>>, vector<8x64xf32>
    tpu.vector_store %arg10[%c0_63, %c0_64], %342 {strides = array<i32>} : memref<8x64xf32, #tpu.memory_space<vmem>>, vector<8x64xf32>,
    %c0_i32_65 = arith.constant 0 : i32
    %cst_66 = arith.constant dense<0.000000e+00> : vector<1x128xf32>
    %344 = tpu.matmul %333, %1, %cst_66 {dimension_numbers = #tpu.dot_dimension_numbers<[1], [0], [0], [1], [0, 0, 1, 1], [], []>} : vector<1x32xf32>, vector<32x128xf32>, vector<1x128xf32> -> vector<1x128xf32>
    %345 = arith.index_cast %c0_i32_65 : i32 to index
    %c0_67 = arith.constant 0 : index
    %346 = vector.load %arg10[%345, %c0_67] : memref<8x64xf32, #tpu.memory_space<vmem>>, vector<1x64xf32>
    %347 = vector.extract_strided_slice %344 {offsets = [0, 0], sizes = [1, 64], strides = [1, 1]} : vector<1x128xf32> to vector<1x64xf32>
    %348 = arith.addf %346, %347 : vector<1x64xf32>
    %349 = arith.negf %348 : vector<1x64xf32>
    %350 = math.exp %349 : vector<1x64xf32>
    %cst_68 = arith.constant 1.000000e+00 : f32
    %351 = vector.broadcast %cst_68 : f32 to vector<1x64xf32>
    %352 = arith.addf %351, %350 : vector<1x64xf32>
    %353 = arith.divf %351, %352 : vector<1x64xf32>
    %354 = math.tanh %348 : vector<1x64xf32>
    %355 = vector.extract_strided_slice %353 {offsets = [0, 0], sizes = [1, 16], strides = [1, 1]} : vector<1x64xf32> to vector<1x16xf32>
    %356 = vector.extract_strided_slice %353 {offsets = [0, 16], sizes = [1, 16], strides = [1, 1]} : vector<1x64xf32> to vector<1x16xf32>
    %357 = vector.extract_strided_slice %354 {offsets = [0, 32], sizes = [1, 16], strides = [1, 1]} : vector<1x64xf32> to vector<1x16xf32>
    %358 = vector.extract_strided_slice %353 {offsets = [0, 48], sizes = [1, 16], strides = [1, 1]} : vector<1x64xf32> to vector<1x16xf32>
    %359 = arith.mulf %356, %311 : vector<1x16xf32>
    %360 = arith.mulf %355, %357 : vector<1x16xf32>
    %361 = arith.addf %359, %360 : vector<1x16xf32>
    %362 = math.tanh %361 : vector<1x16xf32>
    %363 = arith.mulf %358, %362 : vector<1x16xf32>
    %cst_69 = arith.constant dense<0.000000e+00> : vector<1x64xf32>
    %364 = tpu.matmul %363, %3, %cst_69 {dimension_numbers = #tpu.dot_dimension_numbers<[1], [0], [0], [1], [0, 0, 1, 1], [], []>} : vector<1x16xf32>, vector<16x64xf32>, vector<1x64xf32> -> vector<1x64xf32>
    %365 = vector.extract_strided_slice %344 {offsets = [0, 64], sizes = [1, 64], strides = [1, 1]} : vector<1x128xf32> to vector<1x64xf32>
    %366 = arith.addf %364, %365 : vector<1x64xf32>
    %367 = arith.addf %366, %4 : vector<1x64xf32>
    %368 = arith.negf %367 : vector<1x64xf32>
    %369 = math.exp %368 : vector<1x64xf32>
    %cst_70 = arith.constant 1.000000e+00 : f32
    %370 = vector.broadcast %cst_70 : f32 to vector<1x64xf32>
    %371 = arith.addf %370, %369 : vector<1x64xf32>
    %372 = arith.divf %370, %371 : vector<1x64xf32>
    %373 = math.tanh %367 : vector<1x64xf32>
    %374 = vector.extract_strided_slice %372 {offsets = [0, 0], sizes = [1, 16], strides = [1, 1]} : vector<1x64xf32> to vector<1x16xf32>
    %375 = vector.extract_strided_slice %372 {offsets = [0, 16], sizes = [1, 16], strides = [1, 1]} : vector<1x64xf32> to vector<1x16xf32>
    %376 = vector.extract_strided_slice %373 {offsets = [0, 32], sizes = [1, 16], strides = [1, 1]} : vector<1x64xf32> to vector<1x16xf32>
    %377 = vector.extract_strided_slice %372 {offsets = [0, 48], sizes = [1, 16], strides = [1, 1]} : vector<1x64xf32> to vector<1x16xf32>
    %378 = arith.mulf %375, %330 : vector<1x16xf32>
    %379 = arith.mulf %374, %376 : vector<1x16xf32>
    %380 = arith.addf %378, %379 : vector<1x16xf32>
    %381 = math.tanh %380 : vector<1x16xf32>
    %382 = arith.mulf %377, %381 : vector<1x16xf32>
    %383 = tpu.concatenate %363, %382 in 1 : vector<1x16xf32>, vector<1x16xf32> -> vector<1x32xf32>
    %c1_i32_71 = arith.constant 1 : i32
    %cst_72 = arith.constant dense<0.000000e+00> : vector<1x128xf32>
    %384 = tpu.matmul %383, %1, %cst_72 {dimension_numbers = #tpu.dot_dimension_numbers<[1], [0], [0], [1], [0, 0, 1, 1], [], []>} : vector<1x32xf32>, vector<32x128xf32>, vector<1x128xf32> -> vector<1x128xf32>
    %385 = arith.index_cast %c1_i32_71 : i32 to index
    %c0_73 = arith.constant 0 : index
    %386 = vector.load %arg10[%385, %c0_73] : memref<8x64xf32, #tpu.memory_space<vmem>>, vector<1x64xf32>
    %387 = vector.extract_strided_slice %384 {offsets = [0, 0], sizes = [1, 64], strides = [1, 1]} : vector<1x128xf32> to vector<1x64xf32>
    %388 = arith.addf %386, %387 : vector<1x64xf32>
    %389 = arith.negf %388 : vector<1x64xf32>
    %390 = math.exp %389 : vector<1x64xf32>
    %cst_74 = arith.constant 1.000000e+00 : f32
    %391 = vector.broadcast %cst_74 : f32 to vector<1x64xf32>
    %392 = arith.addf %391, %390 : vector<1x64xf32>
    %393 = arith.divf %391, %392 : vector<1x64xf32>
    %394 = math.tanh %388 : vector<1x64xf32>
    %395 = vector.extract_strided_slice %393 {offsets = [0, 0], sizes = [1, 16], strides = [1, 1]} : vector<1x64xf32> to vector<1x16xf32>
    %396 = vector.extract_strided_slice %393 {offsets = [0, 16], sizes = [1, 16], strides = [1, 1]} : vector<1x64xf32> to vector<1x16xf32>
    %397 = vector.extract_strided_slice %394 {offsets = [0, 32], sizes = [1, 16], strides = [1, 1]} : vector<1x64xf32> to vector<1x16xf32>
    %398 = vector.extract_strided_slice %393 {offsets = [0, 48], sizes = [1, 16], strides = [1, 1]} : vector<1x64xf32> to vector<1x16xf32>
    %399 = arith.mulf %396, %361 : vector<1x16xf32>
    %400 = arith.mulf %395, %397 : vector<1x16xf32>
    %401 = arith.addf %399, %400 : vector<1x16xf32>
    %402 = math.tanh %401 : vector<1x16xf32>
    %403 = arith.mulf %398, %402 : vector<1x16xf32>
    %cst_75 = arith.constant dense<0.000000e+00> : vector<1x64xf32>
    %404 = tpu.matmul %403, %3, %cst_75 {dimension_numbers = #tpu.dot_dimension_numbers<[1], [0], [0], [1], [0, 0, 1, 1], [], []>} : vector<1x16xf32>, vector<16x64xf32>, vector<1x64xf32> -> vector<1x64xf32>
    %405 = vector.extract_strided_slice %384 {offsets = [0, 64], sizes = [1, 64], strides = [1, 1]} : vector<1x128xf32> to vector<1x64xf32>
    %406 = arith.addf %404, %405 : vector<1x64xf32>
    %407 = arith.addf %406, %4 : vector<1x64xf32>
    %408 = arith.negf %407 : vector<1x64xf32>
    %409 = math.exp %408 : vector<1x64xf32>
    %cst_76 = arith.constant 1.000000e+00 : f32
    %410 = vector.broadcast %cst_76 : f32 to vector<1x64xf32>
    %411 = arith.addf %410, %409 : vector<1x64xf32>
    %412 = arith.divf %410, %411 : vector<1x64xf32>
    %413 = math.tanh %407 : vector<1x64xf32>
    %414 = vector.extract_strided_slice %412 {offsets = [0, 0], sizes = [1, 16], strides = [1, 1]} : vector<1x64xf32> to vector<1x16xf32>
    %415 = vector.extract_strided_slice %412 {offsets = [0, 16], sizes = [1, 16], strides = [1, 1]} : vector<1x64xf32> to vector<1x16xf32>
    %416 = vector.extract_strided_slice %413 {offsets = [0, 32], sizes = [1, 16], strides = [1, 1]} : vector<1x64xf32> to vector<1x16xf32>
    %417 = vector.extract_strided_slice %412 {offsets = [0, 48], sizes = [1, 16], strides = [1, 1]} : vector<1x64xf32> to vector<1x16xf32>
    %418 = arith.mulf %415, %380 : vector<1x16xf32>
    %419 = arith.mulf %414, %416 : vector<1x16xf32>
    %420 = arith.addf %418, %419 : vector<1x16xf32>
    %421 = math.tanh %420 : vector<1x16xf32>
    %422 = arith.mulf %417, %421 : vector<1x16xf32>
    %423 = tpu.concatenate %403, %422 in 1 : vector<1x16xf32>, vector<1x16xf32> -> vector<1x32xf32>
    %c2_i32_77 = arith.constant 2 : i32
    %cst_78 = arith.constant dense<0.000000e+00> : vector<1x128xf32>
    %424 = tpu.matmul %423, %1, %cst_78 {dimension_numbers = #tpu.dot_dimension_numbers<[1], [0], [0], [1], [0, 0, 1, 1], [], []>} : vector<1x32xf32>, vector<32x128xf32>, vector<1x128xf32> -> vector<1x128xf32>
    %425 = arith.index_cast %c2_i32_77 : i32 to index
    %c0_79 = arith.constant 0 : index
    %426 = vector.load %arg10[%425, %c0_79] : memref<8x64xf32, #tpu.memory_space<vmem>>, vector<1x64xf32>
    %427 = vector.extract_strided_slice %424 {offsets = [0, 0], sizes = [1, 64], strides = [1, 1]} : vector<1x128xf32> to vector<1x64xf32>
    %428 = arith.addf %426, %427 : vector<1x64xf32>
    %429 = arith.negf %428 : vector<1x64xf32>
    %430 = math.exp %429 : vector<1x64xf32>
    %cst_80 = arith.constant 1.000000e+00 : f32
    %431 = vector.broadcast %cst_80 : f32 to vector<1x64xf32>
    %432 = arith.addf %431, %430 : vector<1x64xf32>
    %433 = arith.divf %431, %432 : vector<1x64xf32>
    %434 = math.tanh %428 : vector<1x64xf32>
    %435 = vector.extract_strided_slice %433 {offsets = [0, 0], sizes = [1, 16], strides = [1, 1]} : vector<1x64xf32> to vector<1x16xf32>
    %436 = vector.extract_strided_slice %433 {offsets = [0, 16], sizes = [1, 16], strides = [1, 1]} : vector<1x64xf32> to vector<1x16xf32>
    %437 = vector.extract_strided_slice %434 {offsets = [0, 32], sizes = [1, 16], strides = [1, 1]} : vector<1x64xf32> to vector<1x16xf32>
    %438 = vector.extract_strided_slice %433 {offsets = [0, 48], sizes = [1, 16], strides = [1, 1]} : vector<1x64xf32> to vector<1x16xf32>
    %439 = arith.mulf %436, %401 : vector<1x16xf32>
    %440 = arith.mulf %435, %437 : vector<1x16xf32>
    %441 = arith.addf %439, %440 : vector<1x16xf32>
    %442 = math.tanh %441 : vector<1x16xf32>
    %443 = arith.mulf %438, %442 : vector<1x16xf32>
    %cst_81 = arith.constant dense<0.000000e+00> : vector<1x64xf32>
    %444 = tpu.matmul %443, %3, %cst_81 {dimension_numbers = #tpu.dot_dimension_numbers<[1], [0], [0], [1], [0, 0, 1, 1], [], []>} : vector<1x16xf32>, vector<16x64xf32>, vector<1x64xf32> -> vector<1x64xf32>
    %445 = vector.extract_strided_slice %424 {offsets = [0, 64], sizes = [1, 64], strides = [1, 1]} : vector<1x128xf32> to vector<1x64xf32>
    %446 = arith.addf %444, %445 : vector<1x64xf32>
    %447 = arith.addf %446, %4 : vector<1x64xf32>
    %448 = arith.negf %447 : vector<1x64xf32>
    %449 = math.exp %448 : vector<1x64xf32>
    %cst_82 = arith.constant 1.000000e+00 : f32
    %450 = vector.broadcast %cst_82 : f32 to vector<1x64xf32>
    %451 = arith.addf %450, %449 : vector<1x64xf32>
    %452 = arith.divf %450, %451 : vector<1x64xf32>
    %453 = math.tanh %447 : vector<1x64xf32>
    %454 = vector.extract_strided_slice %452 {offsets = [0, 0], sizes = [1, 16], strides = [1, 1]} : vector<1x64xf32> to vector<1x16xf32>
    %455 = vector.extract_strided_slice %452 {offsets = [0, 16], sizes = [1, 16], strides = [1, 1]} : vector<1x64xf32> to vector<1x16xf32>
    %456 = vector.extract_strided_slice %453 {offsets = [0, 32], sizes = [1, 16], strides = [1, 1]} : vector<1x64xf32> to vector<1x16xf32>
    %457 = vector.extract_strided_slice %452 {offsets = [0, 48], sizes = [1, 16], strides = [1, 1]} : vector<1x64xf32> to vector<1x16xf32>
    %458 = arith.mulf %455, %420 : vector<1x16xf32>
    %459 = arith.mulf %454, %456 : vector<1x16xf32>
    %460 = arith.addf %458, %459 : vector<1x16xf32>
    %461 = math.tanh %460 : vector<1x16xf32>
    %462 = arith.mulf %457, %461 : vector<1x16xf32>
    %463 = tpu.concatenate %443, %462 in 1 : vector<1x16xf32>, vector<1x16xf32> -> vector<1x32xf32>
    %c3_i32_83 = arith.constant 3 : i32
    %cst_84 = arith.constant dense<0.000000e+00> : vector<1x128xf32>
    %464 = tpu.matmul %463, %1, %cst_84 {dimension_numbers = #tpu.dot_dimension_numbers<[1], [0], [0], [1], [0, 0, 1, 1], [], []>} : vector<1x32xf32>, vector<32x128xf32>, vector<1x128xf32> -> vector<1x128xf32>
    %465 = arith.index_cast %c3_i32_83 : i32 to index
    %c0_85 = arith.constant 0 : index
    %466 = vector.load %arg10[%465, %c0_85] : memref<8x64xf32, #tpu.memory_space<vmem>>, vector<1x64xf32>
    %467 = vector.extract_strided_slice %464 {offsets = [0, 0], sizes = [1, 64], strides = [1, 1]} : vector<1x128xf32> to vector<1x64xf32>
    %468 = arith.addf %466, %467 : vector<1x64xf32>
    %469 = arith.negf %468 : vector<1x64xf32>
    %470 = math.exp %469 : vector<1x64xf32>
    %cst_86 = arith.constant 1.000000e+00 : f32
    %471 = vector.broadcast %cst_86 : f32 to vector<1x64xf32>
    %472 = arith.addf %471, %470 : vector<1x64xf32>
    %473 = arith.divf %471, %472 : vector<1x64xf32>
    %474 = math.tanh %468 : vector<1x64xf32>
    %475 = vector.extract_strided_slice %473 {offsets = [0, 0], sizes = [1, 16], strides = [1, 1]} : vector<1x64xf32> to vector<1x16xf32>
    %476 = vector.extract_strided_slice %473 {offsets = [0, 16], sizes = [1, 16], strides = [1, 1]} : vector<1x64xf32> to vector<1x16xf32>
    %477 = vector.extract_strided_slice %474 {offsets = [0, 32], sizes = [1, 16], strides = [1, 1]} : vector<1x64xf32> to vector<1x16xf32>
    %478 = vector.extract_strided_slice %473 {offsets = [0, 48], sizes = [1, 16], strides = [1, 1]} : vector<1x64xf32> to vector<1x16xf32>
    %479 = arith.mulf %476, %441 : vector<1x16xf32>
    %480 = arith.mulf %475, %477 : vector<1x16xf32>
    %481 = arith.addf %479, %480 : vector<1x16xf32>
    %482 = math.tanh %481 : vector<1x16xf32>
    %483 = arith.mulf %478, %482 : vector<1x16xf32>
    %cst_87 = arith.constant dense<0.000000e+00> : vector<1x64xf32>
    %484 = tpu.matmul %483, %3, %cst_87 {dimension_numbers = #tpu.dot_dimension_numbers<[1], [0], [0], [1], [0, 0, 1, 1], [], []>} : vector<1x16xf32>, vector<16x64xf32>, vector<1x64xf32> -> vector<1x64xf32>
    %485 = vector.extract_strided_slice %464 {offsets = [0, 64], sizes = [1, 64], strides = [1, 1]} : vector<1x128xf32> to vector<1x64xf32>
    %486 = arith.addf %484, %485 : vector<1x64xf32>
    %487 = arith.addf %486, %4 : vector<1x64xf32>
    %488 = arith.negf %487 : vector<1x64xf32>
    %489 = math.exp %488 : vector<1x64xf32>
    %cst_88 = arith.constant 1.000000e+00 : f32
    %490 = vector.broadcast %cst_88 : f32 to vector<1x64xf32>
    %491 = arith.addf %490, %489 : vector<1x64xf32>
    %492 = arith.divf %490, %491 : vector<1x64xf32>
    %493 = math.tanh %487 : vector<1x64xf32>
    %494 = vector.extract_strided_slice %492 {offsets = [0, 0], sizes = [1, 16], strides = [1, 1]} : vector<1x64xf32> to vector<1x16xf32>
    %495 = vector.extract_strided_slice %492 {offsets = [0, 16], sizes = [1, 16], strides = [1, 1]} : vector<1x64xf32> to vector<1x16xf32>
    %496 = vector.extract_strided_slice %493 {offsets = [0, 32], sizes = [1, 16], strides = [1, 1]} : vector<1x64xf32> to vector<1x16xf32>
    %497 = vector.extract_strided_slice %492 {offsets = [0, 48], sizes = [1, 16], strides = [1, 1]} : vector<1x64xf32> to vector<1x16xf32>
    %498 = arith.mulf %495, %460 : vector<1x16xf32>
    %499 = arith.mulf %494, %496 : vector<1x16xf32>
    %500 = arith.addf %498, %499 : vector<1x16xf32>
    %501 = math.tanh %500 : vector<1x16xf32>
    %502 = arith.mulf %497, %501 : vector<1x16xf32>
    %503 = tpu.concatenate %483, %502 in 1 : vector<1x16xf32>, vector<1x16xf32> -> vector<1x32xf32>
    %c4_i32_89 = arith.constant 4 : i32
    %cst_90 = arith.constant dense<0.000000e+00> : vector<1x128xf32>
    %504 = tpu.matmul %503, %1, %cst_90 {dimension_numbers = #tpu.dot_dimension_numbers<[1], [0], [0], [1], [0, 0, 1, 1], [], []>} : vector<1x32xf32>, vector<32x128xf32>, vector<1x128xf32> -> vector<1x128xf32>
    %505 = arith.index_cast %c4_i32_89 : i32 to index
    %c0_91 = arith.constant 0 : index
    %506 = vector.load %arg10[%505, %c0_91] : memref<8x64xf32, #tpu.memory_space<vmem>>, vector<1x64xf32>
    %507 = vector.extract_strided_slice %504 {offsets = [0, 0], sizes = [1, 64], strides = [1, 1]} : vector<1x128xf32> to vector<1x64xf32>
    %508 = arith.addf %506, %507 : vector<1x64xf32>
    %509 = arith.negf %508 : vector<1x64xf32>
    %510 = math.exp %509 : vector<1x64xf32>
    %cst_92 = arith.constant 1.000000e+00 : f32
    %511 = vector.broadcast %cst_92 : f32 to vector<1x64xf32>
    %512 = arith.addf %511, %510 : vector<1x64xf32>
    %513 = arith.divf %511, %512 : vector<1x64xf32>
    %514 = math.tanh %508 : vector<1x64xf32>
    %515 = vector.extract_strided_slice %513 {offsets = [0, 0], sizes = [1, 16], strides = [1, 1]} : vector<1x64xf32> to vector<1x16xf32>
    %516 = vector.extract_strided_slice %513 {offsets = [0, 16], sizes = [1, 16], strides = [1, 1]} : vector<1x64xf32> to vector<1x16xf32>
    %517 = vector.extract_strided_slice %514 {offsets = [0, 32], sizes = [1, 16], strides = [1, 1]} : vector<1x64xf32> to vector<1x16xf32>
    %518 = vector.extract_strided_slice %513 {offsets = [0, 48], sizes = [1, 16], strides = [1, 1]} : vector<1x64xf32> to vector<1x16xf32>
    %519 = arith.mulf %516, %481 : vector<1x16xf32>
    %520 = arith.mulf %515, %517 : vector<1x16xf32>
    %521 = arith.addf %519, %520 : vector<1x16xf32>
    %522 = math.tanh %521 : vector<1x16xf32>
    %523 = arith.mulf %518, %522 : vector<1x16xf32>
    %cst_93 = arith.constant dense<0.000000e+00> : vector<1x64xf32>
    %524 = tpu.matmul %523, %3, %cst_93 {dimension_numbers = #tpu.dot_dimension_numbers<[1], [0], [0], [1], [0, 0, 1, 1], [], []>} : vector<1x16xf32>, vector<16x64xf32>, vector<1x64xf32> -> vector<1x64xf32>
    %525 = vector.extract_strided_slice %504 {offsets = [0, 64], sizes = [1, 64], strides = [1, 1]} : vector<1x128xf32> to vector<1x64xf32>
    %526 = arith.addf %524, %525 : vector<1x64xf32>
    %527 = arith.addf %526, %4 : vector<1x64xf32>
    %528 = arith.negf %527 : vector<1x64xf32>
    %529 = math.exp %528 : vector<1x64xf32>
    %cst_94 = arith.constant 1.000000e+00 : f32
    %530 = vector.broadcast %cst_94 : f32 to vector<1x64xf32>
    %531 = arith.addf %530, %529 : vector<1x64xf32>
    %532 = arith.divf %530, %531 : vector<1x64xf32>
    %533 = math.tanh %527 : vector<1x64xf32>
    %534 = vector.extract_strided_slice %532 {offsets = [0, 0], sizes = [1, 16], strides = [1, 1]} : vector<1x64xf32> to vector<1x16xf32>
    %535 = vector.extract_strided_slice %532 {offsets = [0, 16], sizes = [1, 16], strides = [1, 1]} : vector<1x64xf32> to vector<1x16xf32>
    %536 = vector.extract_strided_slice %533 {offsets = [0, 32], sizes = [1, 16], strides = [1, 1]} : vector<1x64xf32> to vector<1x16xf32>
    %537 = vector.extract_strided_slice %532 {offsets = [0, 48], sizes = [1, 16], strides = [1, 1]} : vector<1x64xf32> to vector<1x16xf32>
    %538 = arith.mulf %535, %500 : vector<1x16xf32>
    %539 = arith.mulf %534, %536 : vector<1x16xf32>
    %540 = arith.addf %538, %539 : vector<1x16xf32>
    %541 = math.tanh %540 : vector<1x16xf32>
    %542 = arith.mulf %537, %541 : vector<1x16xf32>
    %543 = tpu.concatenate %523, %542 in 1 : vector<1x16xf32>, vector<1x16xf32> -> vector<1x32xf32>
    %c5_i32_95 = arith.constant 5 : i32
    %cst_96 = arith.constant dense<0.000000e+00> : vector<1x128xf32>
    %544 = tpu.matmul %543, %1, %cst_96 {dimension_numbers = #tpu.dot_dimension_numbers<[1], [0], [0], [1], [0, 0, 1, 1], [], []>} : vector<1x32xf32>, vector<32x128xf32>, vector<1x128xf32> -> vector<1x128xf32>
    %545 = arith.index_cast %c5_i32_95 : i32 to index
    %c0_97 = arith.constant 0 : index
    %546 = vector.load %arg10[%545, %c0_97] : memref<8x64xf32, #tpu.memory_space<vmem>>, vector<1x64xf32>
    %547 = vector.extract_strided_slice %544 {offsets = [0, 0], sizes = [1, 64], strides = [1, 1]} : vector<1x128xf32> to vector<1x64xf32>
    %548 = arith.addf %546, %547 : vector<1x64xf32>
    %549 = arith.negf %548 : vector<1x64xf32>
    %550 = math.exp %549 : vector<1x64xf32>
    %cst_98 = arith.constant 1.000000e+00 : f32
    %551 = vector.broadcast %cst_98 : f32 to vector<1x64xf32>
    %552 = arith.addf %551, %550 : vector<1x64xf32>
    %553 = arith.divf %551, %552 : vector<1x64xf32>
    %554 = math.tanh %548 : vector<1x64xf32>
    %555 = vector.extract_strided_slice %553 {offsets = [0, 0], sizes = [1, 16], strides = [1, 1]} : vector<1x64xf32> to vector<1x16xf32>
    %556 = vector.extract_strided_slice %553 {offsets = [0, 16], sizes = [1, 16], strides = [1, 1]} : vector<1x64xf32> to vector<1x16xf32>
    %557 = vector.extract_strided_slice %554 {offsets = [0, 32], sizes = [1, 16], strides = [1, 1]} : vector<1x64xf32> to vector<1x16xf32>
    %558 = vector.extract_strided_slice %553 {offsets = [0, 48], sizes = [1, 16], strides = [1, 1]} : vector<1x64xf32> to vector<1x16xf32>
    %559 = arith.mulf %556, %521 : vector<1x16xf32>
    %560 = arith.mulf %555, %557 : vector<1x16xf32>
    %561 = arith.addf %559, %560 : vector<1x16xf32>
    %562 = math.tanh %561 : vector<1x16xf32>
    %563 = arith.mulf %558, %562 : vector<1x16xf32>
    %cst_99 = arith.constant dense<0.000000e+00> : vector<1x64xf32>
    %564 = tpu.matmul %563, %3, %cst_99 {dimension_numbers = #tpu.dot_dimension_numbers<[1], [0], [0], [1], [0, 0, 1, 1], [], []>} : vector<1x16xf32>, vector<16x64xf32>, vector<1x64xf32> -> vector<1x64xf32>
    %565 = vector.extract_strided_slice %544 {offsets = [0, 64], sizes = [1, 64], strides = [1, 1]} : vector<1x128xf32> to vector<1x64xf32>
    %566 = arith.addf %564, %565 : vector<1x64xf32>
    %567 = arith.addf %566, %4 : vector<1x64xf32>
    %568 = arith.negf %567 : vector<1x64xf32>
    %569 = math.exp %568 : vector<1x64xf32>
    %cst_100 = arith.constant 1.000000e+00 : f32
    %570 = vector.broadcast %cst_100 : f32 to vector<1x64xf32>
    %571 = arith.addf %570, %569 : vector<1x64xf32>
    %572 = arith.divf %570, %571 : vector<1x64xf32>
    %573 = math.tanh %567 : vector<1x64xf32>
    %574 = vector.extract_strided_slice %572 {offsets = [0, 0], sizes = [1, 16], strides = [1, 1]} : vector<1x64xf32> to vector<1x16xf32>
    %575 = vector.extract_strided_slice %572 {offsets = [0, 16], sizes = [1, 16], strides = [1, 1]} : vector<1x64xf32> to vector<1x16xf32>
    %576 = vector.extract_strided_slice %573 {offsets = [0, 32], sizes = [1, 16], strides = [1, 1]} : vector<1x64xf32> to vector<1x16xf32>
    %577 = vector.extract_strided_slice %572 {offsets = [0, 48], sizes = [1, 16], strides = [1, 1]} : vector<1x64xf32> to vector<1x16xf32>
    %578 = arith.mulf %575, %540 : vector<1x16xf32>
    %579 = arith.mulf %574, %576 : vector<1x16xf32>
    %580 = arith.addf %578, %579 : vector<1x16xf32>
    %581 = math.tanh %580 : vector<1x16xf32>
    %582 = arith.mulf %577, %581 : vector<1x16xf32>
    %583 = tpu.concatenate %563, %582 in 1 : vector<1x16xf32>, vector<1x16xf32> -> vector<1x32xf32>
    %c6_i32_101 = arith.constant 6 : i32
    %cst_102 = arith.constant dense<0.000000e+00> : vector<1x128xf32>
    %584 = tpu.matmul %583, %1, %cst_102 {dimension_numbers = #tpu.dot_dimension_numbers<[1], [0], [0], [1], [0, 0, 1, 1], [], []>} : vector<1x32xf32>, vector<32x128xf32>, vector<1x128xf32> -> vector<1x128xf32>
    %585 = arith.index_cast %c6_i32_101 : i32 to index
    %c0_103 = arith.constant 0 : index
    %586 = vector.load %arg10[%585, %c0_103] : memref<8x64xf32, #tpu.memory_space<vmem>>, vector<1x64xf32>
    %587 = vector.extract_strided_slice %584 {offsets = [0, 0], sizes = [1, 64], strides = [1, 1]} : vector<1x128xf32> to vector<1x64xf32>
    %588 = arith.addf %586, %587 : vector<1x64xf32>
    %589 = arith.negf %588 : vector<1x64xf32>
    %590 = math.exp %589 : vector<1x64xf32>
    %cst_104 = arith.constant 1.000000e+00 : f32
    %591 = vector.broadcast %cst_104 : f32 to vector<1x64xf32>
    %592 = arith.addf %591, %590 : vector<1x64xf32>
    %593 = arith.divf %591, %592 : vector<1x64xf32>
    %594 = math.tanh %588 : vector<1x64xf32>
    %595 = vector.extract_strided_slice %593 {offsets = [0, 0], sizes = [1, 16], strides = [1, 1]} : vector<1x64xf32> to vector<1x16xf32>
    %596 = vector.extract_strided_slice %593 {offsets = [0, 16], sizes = [1, 16], strides = [1, 1]} : vector<1x64xf32> to vector<1x16xf32>
    %597 = vector.extract_strided_slice %594 {offsets = [0, 32], sizes = [1, 16], strides = [1, 1]} : vector<1x64xf32> to vector<1x16xf32>
    %598 = vector.extract_strided_slice %593 {offsets = [0, 48], sizes = [1, 16], strides = [1, 1]} : vector<1x64xf32> to vector<1x16xf32>
    %599 = arith.mulf %596, %561 : vector<1x16xf32>
    %600 = arith.mulf %595, %597 : vector<1x16xf32>
    %601 = arith.addf %599, %600 : vector<1x16xf32>
    %602 = math.tanh %601 : vector<1x16xf32>
    %603 = arith.mulf %598, %602 : vector<1x16xf32>
    %cst_105 = arith.constant dense<0.000000e+00> : vector<1x64xf32>
    %604 = tpu.matmul %603, %3, %cst_105 {dimension_numbers = #tpu.dot_dimension_numbers<[1], [0], [0], [1], [0, 0, 1, 1], [], []>} : vector<1x16xf32>, vector<16x64xf32>, vector<1x64xf32> -> vector<1x64xf32>
    %605 = vector.extract_strided_slice %584 {offsets = [0, 64], sizes = [1, 64], strides = [1, 1]} : vector<1x128xf32> to vector<1x64xf32>
    %606 = arith.addf %604, %605 : vector<1x64xf32>
    %607 = arith.addf %606, %4 : vector<1x64xf32>
    %608 = arith.negf %607 : vector<1x64xf32>
    %609 = math.exp %608 : vector<1x64xf32>
    %cst_106 = arith.constant 1.000000e+00 : f32
    %610 = vector.broadcast %cst_106 : f32 to vector<1x64xf32>
    %611 = arith.addf %610, %609 : vector<1x64xf32>
    %612 = arith.divf %610, %611 : vector<1x64xf32>
    %613 = math.tanh %607 : vector<1x64xf32>
    %614 = vector.extract_strided_slice %612 {offsets = [0, 0], sizes = [1, 16], strides = [1, 1]} : vector<1x64xf32> to vector<1x16xf32>
    %615 = vector.extract_strided_slice %612 {offsets = [0, 16], sizes = [1, 16], strides = [1, 1]} : vector<1x64xf32> to vector<1x16xf32>
    %616 = vector.extract_strided_slice %613 {offsets = [0, 32], sizes = [1, 16], strides = [1, 1]} : vector<1x64xf32> to vector<1x16xf32>
    %617 = vector.extract_strided_slice %612 {offsets = [0, 48], sizes = [1, 16], strides = [1, 1]} : vector<1x64xf32> to vector<1x16xf32>
    %618 = arith.mulf %615, %580 : vector<1x16xf32>
    %619 = arith.mulf %614, %616 : vector<1x16xf32>
    %620 = arith.addf %618, %619 : vector<1x16xf32>
    %621 = math.tanh %620 : vector<1x16xf32>
    %622 = arith.mulf %617, %621 : vector<1x16xf32>
    %623 = tpu.concatenate %603, %622 in 1 : vector<1x16xf32>, vector<1x16xf32> -> vector<1x32xf32>
    %c7_i32_107 = arith.constant 7 : i32
    %cst_108 = arith.constant dense<0.000000e+00> : vector<1x128xf32>
    %624 = tpu.matmul %623, %1, %cst_108 {dimension_numbers = #tpu.dot_dimension_numbers<[1], [0], [0], [1], [0, 0, 1, 1], [], []>} : vector<1x32xf32>, vector<32x128xf32>, vector<1x128xf32> -> vector<1x128xf32>
    %625 = arith.index_cast %c7_i32_107 : i32 to index
    %c0_109 = arith.constant 0 : index
    %626 = vector.load %arg10[%625, %c0_109] : memref<8x64xf32, #tpu.memory_space<vmem>>, vector<1x64xf32>
    %627 = vector.extract_strided_slice %624 {offsets = [0, 0], sizes = [1, 64], strides = [1, 1]} : vector<1x128xf32> to vector<1x64xf32>
    %628 = arith.addf %626, %627 : vector<1x64xf32>
    %629 = arith.negf %628 : vector<1x64xf32>
    %630 = math.exp %629 : vector<1x64xf32>
    %cst_110 = arith.constant 1.000000e+00 : f32
    %631 = vector.broadcast %cst_110 : f32 to vector<1x64xf32>
    %632 = arith.addf %631, %630 : vector<1x64xf32>
    %633 = arith.divf %631, %632 : vector<1x64xf32>
    %634 = math.tanh %628 : vector<1x64xf32>
    %635 = vector.extract_strided_slice %633 {offsets = [0, 0], sizes = [1, 16], strides = [1, 1]} : vector<1x64xf32> to vector<1x16xf32>
    %636 = vector.extract_strided_slice %633 {offsets = [0, 16], sizes = [1, 16], strides = [1, 1]} : vector<1x64xf32> to vector<1x16xf32>
    %637 = vector.extract_strided_slice %634 {offsets = [0, 32], sizes = [1, 16], strides = [1, 1]} : vector<1x64xf32> to vector<1x16xf32>
    %638 = vector.extract_strided_slice %633 {offsets = [0, 48], sizes = [1, 16], strides = [1, 1]} : vector<1x64xf32> to vector<1x16xf32>
    %639 = arith.mulf %636, %601 : vector<1x16xf32>
    %640 = arith.mulf %635, %637 : vector<1x16xf32>
    %641 = arith.addf %639, %640 : vector<1x16xf32>
    %642 = math.tanh %641 : vector<1x16xf32>
    %643 = arith.mulf %638, %642 : vector<1x16xf32>
    %cst_111 = arith.constant dense<0.000000e+00> : vector<1x64xf32>
    %644 = tpu.matmul %643, %3, %cst_111 {dimension_numbers = #tpu.dot_dimension_numbers<[1], [0], [0], [1], [0, 0, 1, 1], [], []>} : vector<1x16xf32>, vector<16x64xf32>, vector<1x64xf32> -> vector<1x64xf32>
    %645 = vector.extract_strided_slice %624 {offsets = [0, 64], sizes = [1, 64], strides = [1, 1]} : vector<1x128xf32> to vector<1x64xf32>
    %646 = arith.addf %644, %645 : vector<1x64xf32>
    %647 = arith.addf %646, %4 : vector<1x64xf32>
    %648 = arith.negf %647 : vector<1x64xf32>
    %649 = math.exp %648 : vector<1x64xf32>
    %cst_112 = arith.constant 1.000000e+00 : f32
    %650 = vector.broadcast %cst_112 : f32 to vector<1x64xf32>
    %651 = arith.addf %650, %649 : vector<1x64xf32>
    %652 = arith.divf %650, %651 : vector<1x64xf32>
    %653 = math.tanh %647 : vector<1x64xf32>
    %654 = vector.extract_strided_slice %652 {offsets = [0, 0], sizes = [1, 16], strides = [1, 1]} : vector<1x64xf32> to vector<1x16xf32>
    %655 = vector.extract_strided_slice %652 {offsets = [0, 16], sizes = [1, 16], strides = [1, 1]} : vector<1x64xf32> to vector<1x16xf32>
    %656 = vector.extract_strided_slice %653 {offsets = [0, 32], sizes = [1, 16], strides = [1, 1]} : vector<1x64xf32> to vector<1x16xf32>
    %657 = vector.extract_strided_slice %652 {offsets = [0, 48], sizes = [1, 16], strides = [1, 1]} : vector<1x64xf32> to vector<1x16xf32>
    %658 = arith.mulf %655, %620 : vector<1x16xf32>
    %659 = arith.mulf %654, %656 : vector<1x16xf32>
    %660 = arith.addf %658, %659 : vector<1x16xf32>
    %661 = math.tanh %660 : vector<1x16xf32>
    %662 = arith.mulf %657, %661 : vector<1x16xf32>
    %663 = tpu.concatenate %643, %662 in 1 : vector<1x16xf32>, vector<1x16xf32> -> vector<1x32xf32>
    %c8_i32_113 = arith.constant 8 : i32
    %664 = vector.extract_strided_slice %663 {offsets = [0, 16], sizes = [1, 16], strides = [1, 1]} : vector<1x32xf32> to vector<1x16xf32>
    %665 = arith.mulf %664, %5 : vector<1x16xf32>
    %cst_114 = arith.constant dense<0.000000e+00> : vector<1xf32>
    %666 = vector.multi_reduction <add>, %665, %cst_114 [1] : vector<1x16xf32> to vector<1xf32>
    %667 = vector.shape_cast %666 : vector<1xf32> to vector<1x1xf32>
    %668 = arith.addf %667, %6 : vector<1x1xf32>
    %669 = arith.subf %338, %668 : vector<1x1xf32>
    %670 = math.absf %669 : vector<1x1xf32>
    %cst_115 = arith.constant 0.000000e+00 : f32
    %671 = vector.broadcast %cst_115 : f32 to vector<1x1xf32>
    %672 = arith.subf %671, %670 : vector<1x1xf32>
    %cst_116 = arith.constant dense<0xFF800000> : vector<1xf32>
    %673 = vector.multi_reduction <maximumf>, %672, %cst_116 [1] : vector<1x1xf32> to vector<1xf32>
    %cst_117 = arith.constant 0xFF800000 : f32
    %674 = vector.broadcast %cst_117 : f32 to vector<1xf32>
    %675 = arith.maximumf %674, %673 : vector<1xf32>
    %676 = vector.shape_cast %675 : vector<1xf32> to vector<1x1xf32>
    %677 = arith.subf %672, %676 : vector<1x1xf32>
    %678 = math.exp %677 : vector<1x1xf32>
    %cst_118 = arith.constant dense<0.000000e+00> : vector<1xf32>
    %679 = vector.multi_reduction <add>, %678, %cst_118 [1] : vector<1x1xf32> to vector<1xf32>
    %680 = vector.shape_cast %679 : vector<1xf32> to vector<1x1xf32>
    %681 = arith.divf %678, %680 : vector<1x1xf32>
    %c0_119 = arith.constant 0 : index
    %c0_120 = arith.constant 0 : index
    %682 = vector.load %arg9[%c0_119, %c0_120] : memref<1x1xf32, #tpu.memory_space<vmem>>, vector<1x1xf32>
    tpu.vector_store %arg9[%c0_119, %c0_120], %681 {strides = array<i32>} : memref<1x1xf32, #tpu.memory_space<vmem>>, vector<1x1xf32>,
    return
  }
}

</mosaic_0001>

<llo_original>
// kernel: siamese_lstm_forward.1
$region0: #{siamese_lstm_forward.1}
  #allocation0 [shape = 'u32[]', space=smem, size = 0x4, offset = 0x4, fixed_abs, tag = 'smem constant byte address 0x4 - core index']
  #allocation1 [shape = 'u32[72,128]{1,0:T(1,128)}', space=vmem, size = 0x9000, scoped, tag = 'internal scratch']
  #allocation2 [shape = 'f32[8,64]{1,0:T(8,128)}', space=vmem, size = 0x1000, scoped, tag = 'scratch operand']
  #allocation3 [shape = 'f32[1,1]{1,0:T(1,128)S(1)}', space=vmem, size = 0x200, scoped, tag = 'scoped memory for siamese_lstm_forward.1']
  %s0 = inlined_call_operand.vmem [shape: f32[8,32], index: 0, kind: input, shape index: {}]
  %s1 = inlined_call_operand.vmem [shape: f32[8,32], index: 1, kind: input, shape index: {}]
  %s2 = inlined_call_operand.vmem [shape: f32[32,64], index: 2, kind: input, shape index: {}]
  %s3 = inlined_call_operand.vmem [shape: f32[32,128], index: 3, kind: input, shape index: {}]
  %s4 = inlined_call_operand.vmem [shape: f32[1,64], index: 4, kind: input, shape index: {}]
  %s5 = inlined_call_operand.vmem [shape: f32[16,64], index: 5, kind: input, shape index: {}]
  %s6 = inlined_call_operand.vmem [shape: f32[1,64], index: 6, kind: input, shape index: {}]
  %s7 = inlined_call_operand.vmem [shape: f32[1,16], index: 7, kind: input, shape index: {}]
  %s8 = inlined_call_operand.<no memory space> [shape: f32[1,1], index: 8, kind: input, shape index: {}]
  %s9 = inlined_call_operand.hbm [shape: f32[1,1], index: 9, kind: output, shape index: {}]
  %s10 = sld [smem:[#allocation0]]
  $region46: #{siamese_lstm_forward.1} parent=0
    _
  %s12 = ssub.s32 1, %s10
  %s13 = scalar_select 0, %s12, %s10
  %v14 = vstv %s8
  %15 = vst [vmem:[#allocation3] sm:$0x1] %v14
  $region1: #{siamese_lstm_forward.1} parent=0
    #allocation4 [shape = 'u8[512]{0}', space=vmem, size = 0x400, scoped, tag = 'output window, operand 0, single buffered']
    #allocation5 [shape = 's32[1]{0}', space=sflag, size = 0x4, scoped, tag = 'scoped memory for siamese_lstm_forward.1']
    %16 = vsyncpa [#allocation5], 0
    // Predicated region
    $region2: #{siamese_lstm_forward.1} parent=1 // pred_check
      _
    $region3: #{siamese_lstm_forward.1} parent=1 // pred_check_branch
      %18 = sbr.rel (0) target = $region5
    $region4: #{siamese_lstm_forward.1} parent=1 // pred_region
      _
    $region5: #{siamese_lstm_forward.1} parent=1 // pred_fallthru
      _
    // Predicated region
    $region6: #{siamese_lstm_forward.1} parent=1 // pred_check
      _
    $region7: #{siamese_lstm_forward.1} parent=1 // pred_check_branch
      %20 = sbr.rel (0) target = $region9
    $region8: #{siamese_lstm_forward.1} parent=1 // pred_region
      _
    $region9: #{siamese_lstm_forward.1} parent=1 // pred_fallthru
      _
    // Predicated region
    $region10: #{siamese_lstm_forward.1} parent=1 // pred_check
      _
    $region11: #{siamese_lstm_forward.1} parent=1 // pred_check_branch
      %22 = sbr.rel (0) target = $region13
    $region12: #{siamese_lstm_forward.1} parent=1 // pred_region
      _
    $region13: #{siamese_lstm_forward.1} parent=1 // pred_fallthru
      _
    // Predicated region
    $region14: #{siamese_lstm_forward.1} parent=1 // pred_check
      _
    $region15: #{siamese_lstm_forward.1} parent=1 // pred_check_branch
      %24 = sbr.rel (0) target = $region17
    $region16: #{siamese_lstm_forward.1} parent=1 // pred_region
      _
    $region17: #{siamese_lstm_forward.1} parent=1 // pred_fallthru
      _
    // Predicated region
    $region18: #{siamese_lstm_forward.1} parent=1 // pred_check
      _
    $region19: #{siamese_lstm_forward.1} parent=1 // pred_check_branch
      %26 = sbr.rel (0) target = $region21
    $region20: #{siamese_lstm_forward.1} parent=1 // pred_region
      _
    $region21: #{siamese_lstm_forward.1} parent=1 // pred_fallthru
      _
    // Predicated region
    $region22: #{siamese_lstm_forward.1} parent=1 // pred_check
      _
    $region23: #{siamese_lstm_forward.1} parent=1 // pred_check_branch
      %28 = sbr.rel (0) target = $region25
    $region24: #{siamese_lstm_forward.1} parent=1 // pred_region
      _
    $region25: #{siamese_lstm_forward.1} parent=1 // pred_fallthru
      _
    // Predicated region
    $region26: #{siamese_lstm_forward.1} parent=1 // pred_check
      _
    $region27: #{siamese_lstm_forward.1} parent=1 // pred_check_branch
      %30 = sbr.rel (0) target = $region29
    $region28: #{siamese_lstm_forward.1} parent=1 // pred_region
      _
    $region29: #{siamese_lstm_forward.1} parent=1 // pred_fallthru
      _
    // Predicated region
    $region30: #{siamese_lstm_forward.1} parent=1 // pred_check
      _
    $region31: #{siamese_lstm_forward.1} parent=1 // pred_check_branch
      %32 = sbr.rel (0) target = $region33
    $region32: #{siamese_lstm_forward.1} parent=1 // pred_region
      _
    $region33: #{siamese_lstm_forward.1} parent=1 // pred_fallthru
      _
    // Predicated region
    $region34: #{siamese_lstm_forward.1} parent=1 // pred_check
      _
    $region35: #{siamese_lstm_forward.1} parent=1 // pred_check_branch
      %34 = sbr.rel (0) target = $region37
    $region36: #{siamese_lstm_forward.1} parent=1 // pred_region
      _
    $region37: #{siamese_lstm_forward.1} parent=1 // pred_fallthru
      _
    %v35 = vld [vmem:[%s2] sm:$0xff]
    %v36 = vld [vmem:[%s2 + $0x8] sm:$0xff]
    %v37 = vld [vmem:[%s2 + $0x10] sm:$0xff]
    %v38 = vld [vmem:[%s2 + $0x18] sm:$0xff]
    %v39 = vld [vmem:[%s3] sm:$0xff]
    %v40 = vld [vmem:[%s3 + $0x8] sm:$0xff]
    %v41 = vld [vmem:[%s3 + $0x10] sm:$0xff]
    %v42 = vld [vmem:[%s3 + $0x18] sm:$0xff]
    %v43 = vld [vmem:[%s4] sm:$0x1]
    %v44 = vld [vmem:[%s5] sm:$0xff]
    %v45 = vld [vmem:[%s5 + $0x8] sm:$0xff]
    %v46 = vld [vmem:[%s6] sm:$0x1]
    %v47 = vld [vmem:[%s7] sm:$0x1]
    %v48 = vld [vmem:[#allocation3] sm:$0x1]
    %v49 = vld [vmem:[%s0] sm:$0xff]
    %v51 = vperm.slane %v43, 0
    %vm53 = vcmask 261120
    %v55 = vsel %vm53, %v49, 0
    %57 = vmatpush.msra.mxu0 0.0
    %58 = vmatpush.msra.mxu0 0.0
    %59 = vmatpush.msra.mxu0 0.0
    %60 = vmatpush.msra.mxu0 0.0
    %61 = vmatpush.msra.mxu0 0.0
    %62 = vmatpush.msra.mxu0 0.0
    %63 = vmatpush.msra.mxu0 0.0
    %64 = vmatpush.msra.mxu0 0.0
    %65 = vmatpush.msra.mxu0 0.0
    %66 = vmatpush.msra.mxu0 0.0
    %67 = vmatpush.msra.mxu0 0.0
    %68 = vmatpush.msra.mxu0 0.0
    %69 = vmatpush.msra.mxu0 %v38
    %70 = vmatpush.msra.mxu0 %v37
    %71 = vmatpush.msra.mxu0 %v36
    %72 = vmatpush.msra.mxu0 %v35
    %73 = vmatmul.f32.gmra.mxu0 %v55
    %v74 = vpop.f32.mrf.mxu0
    %v75 = vadd.f32 %v51, %v74
    %76 = vdwg.mxu0
    %vm77 = vcmask 523264
    %78 = vst.msk [vmem:[#allocation2] sm:$0xff] %vm77, %v75
    %v80 = vsel %vm53, 0.0, 0
    %82 = vmatpush.msra.mxu0 0.0
    %83 = vmatpush.msra.mxu0 0.0
    %84 = vmatpush.msra.mxu0 0.0
    %85 = vmatpush.msra.mxu0 0.0
    %86 = vmatpush.msra.mxu0 0.0
    %87 = vmatpush.msra.mxu0 0.0
    %88 = vmatpush.msra.mxu0 0.0
    %89 = vmatpush.msra.mxu0 0.0
    %90 = vmatpush.msra.mxu0 0.0
    %91 = vmatpush.msra.mxu0 0.0
    %92 = vmatpush.msra.mxu0 0.0
    %93 = vmatpush.msra.mxu0 0.0
    %94 = vmatpush.msra.mxu0 %v42
    %95 = vmatpush.msra.mxu0 %v41
    %96 = vmatpush.msra.mxu0 %v40
    %97 = vmatpush.msra.mxu0 %v39
    %98 = vmatmul.f32.gmra.mxu0 %v80
    %v99 = vpop.f32.mrf.mxu0
    %v100 = vadd.f32 0.0, %v99
    %101 = vdwg.mxu0
    %v102 = vld [vmem:[#allocation2] sm:$0x1]
    %v103 = vadd.f32 %v102, %v100
    %v104 = vxor.u32 %v103, 2147483648
    %v105 = vmul.f32 %v104, 1.442695
    %v106 = vpow.pop %v105
    %v107 = vadd.f32 %v106, 1.0
    %v108 = vrcp.pop %v107
    %v109 = vmul.f32 %v107, %v108
    %v110 = vsub.f32 1.0, %v109
    %v111 = vmul.f32 %v108, %v110
    %v112 = vadd.f32 %v108, %v111
    %vm113 = vweird.f32 %v107
    %vm114 = vweird.f32 %v108
    %vm115 = vmor %vm113, %vm114
    %v116 = vsel %vm115, %v108, %v112
    %v117 = vand.u32 2147483647, %v107
    %vm118 = vcmp.eq.f32.partialorder %v117, 8.507059e+37
    %v119 = vand.u32 %v107, 2147483648
    %v120 = vor.u32 1.1754944e-38, %v119
    %v121 = vsel %vm118, %v120, %v116
    %v122 = vmul.f32 1.0, %v121
    %v123 = vtanh.pop %v103
    %v124 = vmul.f32 %v122, 0.0
    %126 = vrot.lane.b32.xlu0 %v123, 96
    %v127 = vpop.permute.xlu0 %126
    %v129 = vmul.f32 %v122, %v127
    %131 = vrot.lane.b32.xlu0 %v129, 16
    %v132 = vpop.permute.xlu0 %131
    %v134 = vadd.f32 %v124, %v132
    %v135 = vtanh.pop %v134
    %137 = vrot.lane.b32.xlu0 %v135, 32
    %v138 = vpop.permute.xlu0 %137
    %v140 = vmul.f32 %v122, %v138
    %142 = vrot.lane.b32.xlu0 %v140, 80
    %v143 = vpop.permute.xlu0 %142
    %145 = vrot.lane.b32.xlu0 %v100, 64
    %v146 = vpop.permute.xlu0 %145
    %vm148 = vcmask 130048
    %v149 = vsel %vm148, %v143, 0
    %151 = vmatpush.msra.mxu0 0.0
    %152 = vmatpush.msra.mxu0 0.0
    %153 = vmatpush.msra.mxu0 0.0
    %154 = vmatpush.msra.mxu0 0.0
    %155 = vmatpush.msra.mxu0 0.0
    %156 = vmatpush.msra.mxu0 0.0
    %157 = vmatpush.msra.mxu0 0.0
    %158 = vmatpush.msra.mxu0 0.0
    %159 = vmatpush.msra.mxu0 0.0
    %160 = vmatpush.msra.mxu0 0.0
    %161 = vmatpush.msra.mxu0 0.0
    %162 = vmatpush.msra.mxu0 0.0
    %163 = vmatpush.msra.mxu0 0.0
    %164 = vmatpush.msra.mxu0 0.0
    %165 = vmatpush.msra.mxu0 %v45
    %166 = vmatpush.msra.mxu0 %v44
    %167 = vmatmul.f32.gmra.mxu0 %v149
    %v168 = vpop.f32.mrf.mxu0
    %v169 = vadd.f32 %v146, %v168
    %170 = vdwg.mxu0
    %v171 = vadd.f32 %v169, %v46
    %v172 = vxor.u32 %v171, 2147483648
    %v173 = vmul.f32 %v172, 1.442695
    %v174 = vpow.pop %v173
    %v175 = vadd.f32 %v174, 1.0
    %v176 = vrcp.pop %v175
    %v177 = vmul.f32 %v175, %v176
    %v178 = vsub.f32 1.0, %v177
    %v179 = vmul.f32 %v176, %v178
    %v180 = vadd.f32 %v176, %v179
    %vm181 = vweird.f32 %v175
    %vm182 = vweird.f32 %v176
    %vm183 = vmor %vm181, %vm182
    %v184 = vsel %vm183, %v176, %v180
    %v185 = vand.u32 2147483647, %v175
    %vm186 = vcmp.eq.f32.partialorder %v185, 8.507059e+37
    %v187 = vand.u32 %v175, 2147483648
    %v188 = vor.u32 1.1754944e-38, %v187
    %v189 = vsel %vm186, %v188, %v184
    %v190 = vmul.f32 1.0, %v189
    %v191 = vtanh.pop %v171
    %v192 = vmul.f32 %v190, 0.0
    %194 = vrot.lane.b32.xlu0 %v191, 96
    %v195 = vpop.permute.xlu0 %194
    %v197 = vmul.f32 %v190, %v195
    %199 = vrot.lane.b32.xlu0 %v197, 16
    %v200 = vpop.permute.xlu0 %199
    %v202 = vadd.f32 %v192, %v200
    %v203 = vtanh.pop %v202
    %205 = vrot.lane.b32.xlu0 %v203, 32
    %v206 = vpop.permute.xlu0 %205
    %v208 = vmul.f32 %v190, %v206
    %211 = vrot.lane.b32.xlu0 %v208, 96
    %v212 = vpop.permute.xlu0 %211
    %v214 = vsel %vm148, %v143, %v212
    %v216 = vsel %vm53, %v214, 0
    %218 = vmatpush.msra.mxu0 0.0
    %219 = vmatpush.msra.mxu0 0.0
    %220 = vmatpush.msra.mxu0 0.0
    %221 = vmatpush.msra.mxu0 0.0
    %222 = vmatpush.msra.mxu0 0.0
    %223 = vmatpush.msra.mxu0 0.0
    %224 = vmatpush.msra.mxu0 0.0
    %225 = vmatpush.msra.mxu0 0.0
    %226 = vmatpush.msra.mxu0 0.0
    %227 = vmatpush.msra.mxu0 0.0
    %228 = vmatpush.msra.mxu0 0.0
    %229 = vmatpush.msra.mxu0 0.0
    %230 = vmatpush.msra.mxu0 %v42
    %231 = vmatpush.msra.mxu0 %v41
    %232 = vmatpush.msra.mxu0 %v40
    %233 = vmatpush.msra.mxu0 %v39
    %234 = vmatmul.f32.gmra.mxu0 %v216
    %v235 = vpop.f32.mrf.mxu0
    %v236 = vadd.f32 0.0, %v235
    %237 = vdwg.mxu0
    %v238 = vld [vmem:[#allocation2 + $0x1] sm:$0x1]
    %v239 = vadd.f32 %v238, %v236
    %v240 = vxor.u32 %v239, 2147483648
    %v241 = vmul.f32 %v240, 1.442695
    %v242 = vpow.pop %v241
    %v243 = vadd.f32 %v242, 1.0
    %v244 = vrcp.pop %v243
    %v245 = vmul.f32 %v243, %v244
    %v246 = vsub.f32 1.0, %v245
    %v247 = vmul.f32 %v244, %v246
    %v248 = vadd.f32 %v244, %v247
    %vm249 = vweird.f32 %v243
    %vm250 = vweird.f32 %v244
    %vm251 = vmor %vm249, %vm250
    %v252 = vsel %vm251, %v244, %v248
    %v253 = vand.u32 2147483647, %v243
    %vm254 = vcmp.eq.f32.partialorder %v253, 8.507059e+37
    %v255 = vand.u32 %v243, 2147483648
    %v256 = vor.u32 1.1754944e-38, %v255
    %v257 = vsel %vm254, %v256, %v252
    %v258 = vmul.f32 1.0, %v257
    %v259 = vtanh.pop %v239
    %v260 = vmul.f32 %v258, %v134
    %262 = vrot.lane.b32.xlu0 %v259, 96
    %v263 = vpop.permute.xlu0 %262
    %v265 = vmul.f32 %v258, %v263
    %267 = vrot.lane.b32.xlu0 %v265, 16
    %v268 = vpop.permute.xlu0 %267
    %v270 = vadd.f32 %v260, %v268
    %v271 = vtanh.pop %v270
    %273 = vrot.lane.b32.xlu0 %v271, 32
    %v274 = vpop.permute.xlu0 %273
    %v276 = vmul.f32 %v258, %v274
    %278 = vrot.lane.b32.xlu0 %v276, 80
    %v279 = vpop.permute.xlu0 %278
    %281 = vrot.lane.b32.xlu0 %v236, 64
    %v282 = vpop.permute.xlu0 %281
    %v284 = vsel %vm148, %v279, 0
    %286 = vmatpush.msra.mxu0 0.0
    %287 = vmatpush.msra.mxu0 0.0
    %288 = vmatpush.msra.mxu0 0.0
    %289 = vmatpush.msra.mxu0 0.0
    %290 = vmatpush.msra.mxu0 0.0
    %291 = vmatpush.msra.mxu0 0.0
    %292 = vmatpush.msra.mxu0 0.0
    %293 = vmatpush.msra.mxu0 0.0
    %294 = vmatpush.msra.mxu0 0.0
    %295 = vmatpush.msra.mxu0 0.0
    %296 = vmatpush.msra.mxu0 0.0
    %297 = vmatpush.msra.mxu0 0.0
    %298 = vmatpush.msra.mxu0 0.0
    %299 = vmatpush.msra.mxu0 0.0
    %300 = vmatpush.msra.mxu0 %v45
    %301 = vmatpush.msra.mxu0 %v44
    %302 = vmatmul.f32.gmra.mxu0 %v284
    %v303 = vpop.f32.mrf.mxu0
    %v304 = vadd.f32 %v282, %v303
    %305 = vdwg.mxu0
    %v306 = vadd.f32 %v304, %v46
    %v307 = vxor.u32 %v306, 2147483648
    %v308 = vmul.f32 %v307, 1.442695
    %v309 = vpow.pop %v308
    %v310 = vadd.f32 %v309, 1.0
    %v311 = vrcp.pop %v310
    %v312 = vmul.f32 %v310, %v311
    %v313 = vsub.f32 1.0, %v312
    %v314 = vmul.f32 %v311, %v313
    %v315 = vadd.f32 %v311, %v314
    %vm316 = vweird.f32 %v310
    %vm317 = vweird.f32 %v311
    %vm318 = vmor %vm316, %vm317
    %v319 = vsel %vm318, %v311, %v315
    %v320 = vand.u32 2147483647, %v310
    %vm321 = vcmp.eq.f32.partialorder %v320, 8.507059e+37
    %v322 = vand.u32 %v310, 2147483648
    %v323 = vor.u32 1.1754944e-38, %v322
    %v324 = vsel %vm321, %v323, %v319
    %v325 = vmul.f32 1.0, %v324
    %v326 = vtanh.pop %v306
    %v327 = vmul.f32 %v325, %v202
    %329 = vrot.lane.b32.xlu0 %v326, 96
    %v330 = vpop.permute.xlu0 %329
    %v332 = vmul.f32 %v325, %v330
    %334 = vrot.lane.b32.xlu0 %v332, 16
    %v335 = vpop.permute.xlu0 %334
    %v337 = vadd.f32 %v327, %v335
    %v338 = vtanh.pop %v337
    %340 = vrot.lane.b32.xlu0 %v338, 32
    %v341 = vpop.permute.xlu0 %340
    %v343 = vmul.f32 %v325, %v341
    %346 = vrot.lane.b32.xlu0 %v343, 96
    %v347 = vpop.permute.xlu0 %346
    %v349 = vsel %vm148, %v279, %v347
    %v351 = vsel %vm53, %v349, 0
    %353 = vmatpush.msra.mxu0 0.0
    %354 = vmatpush.msra.mxu0 0.0
    %355 = vmatpush.msra.mxu0 0.0
    %356 = vmatpush.msra.mxu0 0.0
    %357 = vmatpush.msra.mxu0 0.0
    %358 = vmatpush.msra.mxu0 0.0
    %359 = vmatpush.msra.mxu0 0.0
    %360 = vmatpush.msra.mxu0 0.0
    %361 = vmatpush.msra.mxu0 0.0
    %362 = vmatpush.msra.mxu0 0.0
    %363 = vmatpush.msra.mxu0 0.0
    %364 = vmatpush.msra.mxu0 0.0
    %365 = vmatpush.msra.mxu0 %v42
    %366 = vmatpush.msra.mxu0 %v41
    %367 = vmatpush.msra.mxu0 %v40
    %368 = vmatpush.msra.mxu0 %v39
    %369 = vmatmul.f32.gmra.mxu0 %v351
    %v370 = vpop.f32.mrf.mxu0
    %v371 = vadd.f32 0.0, %v370
    %372 = vdwg.mxu0
    %v373 = vld [vmem:[#allocation2 + $0x2] sm:$0x1]
    %v374 = vadd.f32 %v373, %v371
    %v375 = vxor.u32 %v374, 2147483648
    %v376 = vmul.f32 %v375, 1.442695
    %v377 = vpow.pop %v376
    %v378 = vadd.f32 %v377, 1.0
    %v379 = vrcp.pop %v378
    %v380 = vmul.f32 %v378, %v379
    %v381 = vsub.f32 1.0, %v380
    %v382 = vmul.f32 %v379, %v381
    %v383 = vadd.f32 %v379, %v382
    %vm384 = vweird.f32 %v378
    %vm385 = vweird.f32 %v379
    %vm386 = vmor %vm384, %vm385
    %v387 = vsel %vm386, %v379, %v383
    %v388 = vand.u32 2147483647, %v378
    %vm389 = vcmp.eq.f32.partialorder %v388, 8.507059e+37
    %v390 = vand.u32 %v378, 2147483648
    %v391 = vor.u32 1.1754944e-38, %v390
    %v392 = vsel %vm389, %v391, %v387
    %v393 = vmul.f32 1.0, %v392
    %v394 = vtanh.pop %v374
    %v395 = vmul.f32 %v393, %v270
    %397 = vrot.lane.b32.xlu0 %v394, 96
    %v398 = vpop.permute.xlu0 %397
    %v400 = vmul.f32 %v393, %v398
    %402 = vrot.lane.b32.xlu0 %v400, 16
    %v403 = vpop.permute.xlu0 %402
    %v405 = vadd.f32 %v395, %v403
    %v406 = vtanh.pop %v405
    %408 = vrot.lane.b32.xlu0 %v406, 32
    %v409 = vpop.permute.xlu0 %408
    %v411 = vmul.f32 %v393, %v409
    %413 = vrot.lane.b32.xlu0 %v411, 80
    %v414 = vpop.permute.xlu0 %413
    %416 = vrot.lane.b32.xlu0 %v371, 64
    %v417 = vpop.permute.xlu0 %416
    %v419 = vsel %vm148, %v414, 0
    %421 = vmatpush.msra.mxu0 0.0
    %422 = vmatpush.msra.mxu0 0.0
    %423 = vmatpush.msra.mxu0 0.0
    %424 = vmatpush.msra.mxu0 0.0
    %425 = vmatpush.msra.mxu0 0.0
    %426 = vmatpush.msra.mxu0 0.0
    %427 = vmatpush.msra.mxu0 0.0
    %428 = vmatpush.msra.mxu0 0.0
    %429 = vmatpush.msra.mxu0 0.0
    %430 = vmatpush.msra.mxu0 0.0
    %431 = vmatpush.msra.mxu0 0.0
    %432 = vmatpush.msra.mxu0 0.0
    %433 = vmatpush.msra.mxu0 0.0
    %434 = vmatpush.msra.mxu0 0.0
    %435 = vmatpush.msra.mxu0 %v45
    %436 = vmatpush.msra.mxu0 %v44
    %437 = vmatmul.f32.gmra.mxu0 %v419
    %v438 = vpop.f32.mrf.mxu0
    %v439 = vadd.f32 %v417, %v438
    %440 = vdwg.mxu0
    %v441 = vadd.f32 %v439, %v46
    %v442 = vxor.u32 %v441, 2147483648
    %v443 = vmul.f32 %v442, 1.442695
    %v444 = vpow.pop %v443
    %v445 = vadd.f32 %v444, 1.0
    %v446 = vrcp.pop %v445
    %v447 = vmul.f32 %v445, %v446
    %v448 = vsub.f32 1.0, %v447
    %v449 = vmul.f32 %v446, %v448
    %v450 = vadd.f32 %v446, %v449
    %vm451 = vweird.f32 %v445
    %vm452 = vweird.f32 %v446
    %vm453 = vmor %vm451, %vm452
    %v454 = vsel %vm453, %v446, %v450
    %v455 = vand.u32 2147483647, %v445
    %vm456 = vcmp.eq.f32.partialorder %v455, 8.507059e+37
    %v457 = vand.u32 %v445, 2147483648
    %v458 = vor.u32 1.1754944e-38, %v457
    %v459 = vsel %vm456, %v458, %v454
    %v460 = vmul.f32 1.0, %v459
    %v461 = vtanh.pop %v441
    %v462 = vmul.f32 %v460, %v337
    %464 = vrot.lane.b32.xlu0 %v461, 96
    %v465 = vpop.permute.xlu0 %464
    %v467 = vmul.f32 %v460, %v465
    %469 = vrot.lane.b32.xlu0 %v467, 16
    %v470 = vpop.permute.xlu0 %469
    %v472 = vadd.f32 %v462, %v470
    %v473 = vtanh.pop %v472
    %475 = vrot.lane.b32.xlu0 %v473, 32
    %v476 = vpop.permute.xlu0 %475
    %v478 = vmul.f32 %v460, %v476
    %481 = vrot.lane.b32.xlu0 %v478, 96
    %v482 = vpop.permute.xlu0 %481
    %v484 = vsel %vm148, %v414, %v482
    %v486 = vsel %vm53, %v484, 0
    %488 = vmatpush.msra.mxu0 0.0
    %489 = vmatpush.msra.mxu0 0.0
    %490 = vmatpush.msra.mxu0 0.0
    %491 = vmatpush.msra.mxu0 0.0
    %492 = vmatpush.msra.mxu0 0.0
    %493 = vmatpush.msra.mxu0 0.0
    %494 = vmatpush.msra.mxu0 0.0
    %495 = vmatpush.msra.mxu0 0.0
    %496 = vmatpush.msra.mxu0 0.0
    %497 = vmatpush.msra.mxu0 0.0
    %498 = vmatpush.msra.mxu0 0.0
    %499 = vmatpush.msra.mxu0 0.0
    %500 = vmatpush.msra.mxu0 %v42
    %501 = vmatpush.msra.mxu0 %v41
    %502 = vmatpush.msra.mxu0 %v40
    %503 = vmatpush.msra.mxu0 %v39
    %504 = vmatmul.f32.gmra.mxu0 %v486
    %v505 = vpop.f32.mrf.mxu0
    %v506 = vadd.f32 0.0, %v505
    %507 = vdwg.mxu0
    %v508 = vld [vmem:[#allocation2 + $0x3] sm:$0x1]
    %v509 = vadd.f32 %v508, %v506
    %v510 = vxor.u32 %v509, 2147483648
    %v511 = vmul.f32 %v510, 1.442695
    %v512 = vpow.pop %v511
    %v513 = vadd.f32 %v512, 1.0
    %v514 = vrcp.pop %v513
    %v515 = vmul.f32 %v513, %v514
    %v516 = vsub.f32 1.0, %v515
    %v517 = vmul.f32 %v514, %v516
    %v518 = vadd.f32 %v514, %v517
    %vm519 = vweird.f32 %v513
    %vm520 = vweird.f32 %v514
    %vm521 = vmor %vm519, %vm520
    %v522 = vsel %vm521, %v514, %v518
    %v523 = vand.u32 2147483647, %v513
    %vm524 = vcmp.eq.f32.partialorder %v523, 8.507059e+37
    %v525 = vand.u32 %v513, 2147483648
    %v526 = vor.u32 1.1754944e-38, %v525
    %v527 = vsel %vm524, %v526, %v522
    %v528 = vmul.f32 1.0, %v527
    %v529 = vtanh.pop %v509
    %v530 = vmul.f32 %v528, %v405
    %532 = vrot.lane.b32.xlu0 %v529, 96
    %v533 = vpop.permute.xlu0 %532
    %v535 = vmul.f32 %v528, %v533
    %537 = vrot.lane.b32.xlu0 %v535, 16
    %v538 = vpop.permute.xlu0 %537
    %v540 = vadd.f32 %v530, %v538
    %v541 = vtanh.pop %v540
    %543 = vrot.lane.b32.xlu0 %v541, 32
    %v544 = vpop.permute.xlu0 %543
    %v546 = vmul.f32 %v528, %v544
    %548 = vrot.lane.b32.xlu0 %v546, 80
    %v549 = vpop.permute.xlu0 %548
    %551 = vrot.lane.b32.xlu0 %v506, 64
    %v552 = vpop.permute.xlu0 %551
    %v554 = vsel %vm148, %v549, 0
    %556 = vmatpush.msra.mxu0 0.0
    %557 = vmatpush.msra.mxu0 0.0
    %558 = vmatpush.msra.mxu0 0.0
    %559 = vmatpush.msra.mxu0 0.0
    %560 = vmatpush.msra.mxu0 0.0
    %561 = vmatpush.msra.mxu0 0.0
    %562 = vmatpush.msra.mxu0 0.0
    %563 = vmatpush.msra.mxu0 0.0
    %564 = vmatpush.msra.mxu0 0.0
    %565 = vmatpush.msra.mxu0 0.0
    %566 = vmatpush.msra.mxu0 0.0
    %567 = vmatpush.msra.mxu0 0.0
    %568 = vmatpush.msra.mxu0 0.0
    %569 = vmatpush.msra.mxu0 0.0
    %570 = vmatpush.msra.mxu0 %v45
    %571 = vmatpush.msra.mxu0 %v44
    %572 = vmatmul.f32.gmra.mxu0 %v554
    %v573 = vpop.f32.mrf.mxu0
    %v574 = vadd.f32 %v552, %v573
    %575 = vdwg.mxu0
    %v576 = vadd.f32 %v574, %v46
    %v577 = vxor.u32 %v576, 2147483648
    %v578 = vmul.f32 %v577, 1.442695
    %v579 = vpow.pop %v578
    %v580 = vadd.f32 %v579, 1.0
    %v581 = vrcp.pop %v580
    %v582 = vmul.f32 %v580, %v581
    %v583 = vsub.f32 1.0, %v582
    %v584 = vmul.f32 %v581, %v583
    %v585 = vadd.f32 %v581, %v584
    %vm586 = vweird.f32 %v580
    %vm587 = vweird.f32 %v581
    %vm588 = vmor %vm586, %vm587
    %v589 = vsel %vm588, %v581, %v585
    %v590 = vand.u32 2147483647, %v580
    %vm591 = vcmp.eq.f32.partialorder %v590, 8.507059e+37
    %v592 = vand.u32 %v580, 2147483648
    %v593 = vor.u32 1.1754944e-38, %v592
    %v594 = vsel %vm591, %v593, %v589
    %v595 = vmul.f32 1.0, %v594
    %v596 = vtanh.pop %v576
    %v597 = vmul.f32 %v595, %v472
    %599 = vrot.lane.b32.xlu0 %v596, 96
    %v600 = vpop.permute.xlu0 %599
    %v602 = vmul.f32 %v595, %v600
    %604 = vrot.lane.b32.xlu0 %v602, 16
    %v605 = vpop.permute.xlu0 %604
    %v607 = vadd.f32 %v597, %v605
    %v608 = vtanh.pop %v607
    %610 = vrot.lane.b32.xlu0 %v608, 32
    %v611 = vpop.permute.xlu0 %610
    %v613 = vmul.f32 %v595, %v611
    %616 = vrot.lane.b32.xlu0 %v613, 96
    %v617 = vpop.permute.xlu0 %616
    %v619 = vsel %vm148, %v549, %v617
    %v621 = vsel %vm53, %v619, 0
    %623 = vmatpush.msra.mxu0 0.0
    %624 = vmatpush.msra.mxu0 0.0
    %625 = vmatpush.msra.mxu0 0.0
    %626 = vmatpush.msra.mxu0 0.0
    %627 = vmatpush.msra.mxu0 0.0
    %628 = vmatpush.msra.mxu0 0.0
    %629 = vmatpush.msra.mxu0 0.0
    %630 = vmatpush.msra.mxu0 0.0
    %631 = vmatpush.msra.mxu0 0.0
    %632 = vmatpush.msra.mxu0 0.0
    %633 = vmatpush.msra.mxu0 0.0
    %634 = vmatpush.msra.mxu0 0.0
    %635 = vmatpush.msra.mxu0 %v42
    %636 = vmatpush.msra.mxu0 %v41
    %637 = vmatpush.msra.mxu0 %v40
    %638 = vmatpush.msra.mxu0 %v39
    %639 = vmatmul.f32.gmra.mxu0 %v621
    %v640 = vpop.f32.mrf.mxu0
    %v641 = vadd.f32 0.0, %v640
    %642 = vdwg.mxu0
    %v643 = vld [vmem:[#allocation2 + $0x4] sm:$0x1]
    %v644 = vadd.f32 %v643, %v641
    %v645 = vxor.u32 %v644, 2147483648
    %v646 = vmul.f32 %v645, 1.442695
    %v647 = vpow.pop %v646
    %v648 = vadd.f32 %v647, 1.0
    %v649 = vrcp.pop %v648
    %v650 = vmul.f32 %v648, %v649
    %v651 = vsub.f32 1.0, %v650
    %v652 = vmul.f32 %v649, %v651
    %v653 = vadd.f32 %v649, %v652
    %vm654 = vweird.f32 %v648
    %vm655 = vweird.f32 %v649
    %vm656 = vmor %vm654, %vm655
    %v657 = vsel %vm656, %v649, %v653
    %v658 = vand.u32 2147483647, %v648
    %vm659 = vcmp.eq.f32.partialorder %v658, 8.507059e+37
    %v660 = vand.u32 %v648, 2147483648
    %v661 = vor.u32 1.1754944e-38, %v660
    %v662 = vsel %vm659, %v661, %v657
    %v663 = vmul.f32 1.0, %v662
    %v664 = vtanh.pop %v644
    %v665 = vmul.f32 %v663, %v540
    %667 = vrot.lane.b32.xlu0 %v664, 96
    %v668 = vpop.permute.xlu0 %667
    %v670 = vmul.f32 %v663, %v668
    %672 = vrot.lane.b32.xlu0 %v670, 16
    %v673 = vpop.permute.xlu0 %672
    %v675 = vadd.f32 %v665, %v673
    %v676 = vtanh.pop %v675
    %678 = vrot.lane.b32.xlu0 %v676, 32
    %v679 = vpop.permute.xlu0 %678
    %v681 = vmul.f32 %v663, %v679
    %683 = vrot.lane.b32.xlu0 %v681, 80
    %v684 = vpop.permute.xlu0 %683
    %686 = vrot.lane.b32.xlu0 %v641, 64
    %v687 = vpop.permute.xlu0 %686
    %v689 = vsel %vm148, %v684, 0
    %691 = vmatpush.msra.mxu0 0.0
    %692 = vmatpush.msra.mxu0 0.0
    %693 = vmatpush.msra.mxu0 0.0
    %694 = vmatpush.msra.mxu0 0.0
    %695 = vmatpush.msra.mxu0 0.0
    %696 = vmatpush.msra.mxu0 0.0
    %697 = vmatpush.msra.mxu0 0.0
    %698 = vmatpush.msra.mxu0 0.0
    %699 = vmatpush.msra.mxu0 0.0
    %700 = vmatpush.msra.mxu0 0.0
    %701 = vmatpush.msra.mxu0 0.0
    %702 = vmatpush.msra.mxu0 0.0
    %703 = vmatpush.msra.mxu0 0.0
    %704 = vmatpush.msra.mxu0 0.0
    %705 = vmatpush.msra.mxu0 %v45
    %706 = vmatpush.msra.mxu0 %v44
    %707 = vmatmul.f32.gmra.mxu0 %v689
    %v708 = vpop.f32.mrf.mxu0
    %v709 = vadd.f32 %v687, %v708
    %710 = vdwg.mxu0
    %v711 = vadd.f32 %v709, %v46
    %v712 = vxor.u32 %v711, 2147483648
    %v713 = vmul.f32 %v712, 1.442695
    %v714 = vpow.pop %v713
    %v715 = vadd.f32 %v714, 1.0
    %v716 = vrcp.pop %v715
    %v717 = vmul.f32 %v715, %v716
    %v718 = vsub.f32 1.0, %v717
    %v719 = vmul.f32 %v716, %v718
    %v720 = vadd.f32 %v716, %v719
    %vm721 = vweird.f32 %v715
    %vm722 = vweird.f32 %v716
    %vm723 = vmor %vm721, %vm722
    %v724 = vsel %vm723, %v716, %v720
    %v725 = vand.u32 2147483647, %v715
    %vm726 = vcmp.eq.f32.partialorder %v725, 8.507059e+37
    %v727 = vand.u32 %v715, 2147483648
    %v728 = vor.u32 1.1754944e-38, %v727
    %v729 = vsel %vm726, %v728, %v724
    %v730 = vmul.f32 1.0, %v729
    %v731 = vtanh.pop %v711
    %v732 = vmul.f32 %v730, %v607
    %734 = vrot.lane.b32.xlu0 %v731, 96
    %v735 = vpop.permute.xlu0 %734
    %v737 = vmul.f32 %v730, %v735
    %739 = vrot.lane.b32.xlu0 %v737, 16
    %v740 = vpop.permute.xlu0 %739
    %v742 = vadd.f32 %v732, %v740
    %v743 = vtanh.pop %v742
    %745 = vrot.lane.b32.xlu0 %v743, 32
    %v746 = vpop.permute.xlu0 %745
    %v748 = vmul.f32 %v730, %v746
    %751 = vrot.lane.b32.xlu0 %v748, 96
    %v752 = vpop.permute.xlu0 %751
    %v754 = vsel %vm148, %v684, %v752
    %v756 = vsel %vm53, %v754, 0
    %758 = vmatpush.msra.mxu0 0.0
    %759 = vmatpush.msra.mxu0 0.0
    %760 = vmatpush.msra.mxu0 0.0
    %761 = vmatpush.msra.mxu0 0.0
    %762 = vmatpush.msra.mxu0 0.0
    %763 = vmatpush.msra.mxu0 0.0
    %764 = vmatpush.msra.mxu0 0.0
    %765 = vmatpush.msra.mxu0 0.0
    %766 = vmatpush.msra.mxu0 0.0
    %767 = vmatpush.msra.mxu0 0.0
    %768 = vmatpush.msra.mxu0 0.0
    %769 = vmatpush.msra.mxu0 0.0
    %770 = vmatpush.msra.mxu0 %v42
    %771 = vmatpush.msra.mxu0 %v41
    %772 = vmatpush.msra.mxu0 %v40
    %773 = vmatpush.msra.mxu0 %v39
    %774 = vmatmul.f32.gmra.mxu0 %v756
    %v775 = vpop.f32.mrf.mxu0
    %v776 = vadd.f32 0.0, %v775
    %777 = vdwg.mxu0
    %v778 = vld [vmem:[#allocation2 + $0x5] sm:$0x1]
    %v779 = vadd.f32 %v778, %v776
    %v780 = vxor.u32 %v779, 2147483648
    %v781 = vmul.f32 %v780, 1.442695
    %v782 = vpow.pop %v781
    %v783 = vadd.f32 %v782, 1.0
    %v784 = vrcp.pop %v783
    %v785 = vmul.f32 %v783, %v784
    %v786 = vsub.f32 1.0, %v785
    %v787 = vmul.f32 %v784, %v786
    %v788 = vadd.f32 %v784, %v787
    %vm789 = vweird.f32 %v783
    %vm790 = vweird.f32 %v784
    %vm791 = vmor %vm789, %vm790
    %v792 = vsel %vm791, %v784, %v788
    %v793 = vand.u32 2147483647, %v783
    %vm794 = vcmp.eq.f32.partialorder %v793, 8.507059e+37
    %v795 = vand.u32 %v783, 2147483648
    %v796 = vor.u32 1.1754944e-38, %v795
    %v797 = vsel %vm794, %v796, %v792
    %v798 = vmul.f32 1.0, %v797
    %v799 = vtanh.pop %v779
    %v800 = vmul.f32 %v798, %v675
    %802 = vrot.lane.b32.xlu0 %v799, 96
    %v803 = vpop.permute.xlu0 %802
    %v805 = vmul.f32 %v798, %v803
    %807 = vrot.lane.b32.xlu0 %v805, 16
    %v808 = vpop.permute.xlu0 %807
    %v810 = vadd.f32 %v800, %v808
    %v811 = vtanh.pop %v810
    %813 = vrot.lane.b32.xlu0 %v811, 32
    %v814 = vpop.permute.xlu0 %813
    %v816 = vmul.f32 %v798, %v814
    %818 = vrot.lane.b32.xlu0 %v816, 80
    %v819 = vpop.permute.xlu0 %818
    %821 = vrot.lane.b32.xlu0 %v776, 64
    %v822 = vpop.permute.xlu0 %821
    %v824 = vsel %vm148, %v819, 0
    %826 = vmatpush.msra.mxu0 0.0
    %827 = vmatpush.msra.mxu0 0.0
    %828 = vmatpush.msra.mxu0 0.0
    %829 = vmatpush.msra.mxu0 0.0
    %830 = vmatpush.msra.mxu0 0.0
    %831 = vmatpush.msra.mxu0 0.0
    %832 = vmatpush.msra.mxu0 0.0
    %833 = vmatpush.msra.mxu0 0.0
    %834 = vmatpush.msra.mxu0 0.0
    %835 = vmatpush.msra.mxu0 0.0
    %836 = vmatpush.msra.mxu0 0.0
    %837 = vmatpush.msra.mxu0 0.0
    %838 = vmatpush.msra.mxu0 0.0
    %839 = vmatpush.msra.mxu0 0.0
    %840 = vmatpush.msra.mxu0 %v45
    %841 = vmatpush.msra.mxu0 %v44
    %842 = vmatmul.f32.gmra.mxu0 %v824
    %v843 = vpop.f32.mrf.mxu0
    %v844 = vadd.f32 %v822, %v843
    %845 = vdwg.mxu0
    %v846 = vadd.f32 %v844, %v46
    %v847 = vxor.u32 %v846, 2147483648
    %v848 = vmul.f32 %v847, 1.442695
    %v849 = vpow.pop %v848
    %v850 = vadd.f32 %v849, 1.0
    %v851 = vrcp.pop %v850
    %v852 = vmul.f32 %v850, %v851
    %v853 = vsub.f32 1.0, %v852
    %v854 = vmul.f32 %v851, %v853
    %v855 = vadd.f32 %v851, %v854
    %vm856 = vweird.f32 %v850
    %vm857 = vweird.f32 %v851
    %vm858 = vmor %vm856, %vm857
    %v859 = vsel %vm858, %v851, %v855
    %v860 = vand.u32 2147483647, %v850
    %vm861 = vcmp.eq.f32.partialorder %v860, 8.507059e+37
    %v862 = vand.u32 %v850, 2147483648
    %v863 = vor.u32 1.1754944e-38, %v862
    %v864 = vsel %vm861, %v863, %v859
    %v865 = vmul.f32 1.0, %v864
    %v866 = vtanh.pop %v846
    %v867 = vmul.f32 %v865, %v742
    %869 = vrot.lane.b32.xlu0 %v866, 96
    %v870 = vpop.permute.xlu0 %869
    %v872 = vmul.f32 %v865, %v870
    %874 = vrot.lane.b32.xlu0 %v872, 16
    %v875 = vpop.permute.xlu0 %874
    %v877 = vadd.f32 %v867, %v875
    %v878 = vtanh.pop %v877
    %880 = vrot.lane.b32.xlu0 %v878, 32
    %v881 = vpop.permute.xlu0 %880
    %v883 = vmul.f32 %v865, %v881
    %886 = vrot.lane.b32.xlu0 %v883, 96
    %v887 = vpop.permute.xlu0 %886
    %v889 = vsel %vm148, %v819, %v887
    %v891 = vsel %vm53, %v889, 0
    %893 = vmatpush.msra.mxu0 0.0
    %894 = vmatpush.msra.mxu0 0.0
    %895 = vmatpush.msra.mxu0 0.0
    %896 = vmatpush.msra.mxu0 0.0
    %897 = vmatpush.msra.mxu0 0.0
    %898 = vmatpush.msra.mxu0 0.0
    %899 = vmatpush.msra.mxu0 0.0
    %900 = vmatpush.msra.mxu0 0.0
    %901 = vmatpush.msra.mxu0 0.0
    %902 = vmatpush.msra.mxu0 0.0
    %903 = vmatpush.msra.mxu0 0.0
    %904 = vmatpush.msra.mxu0 0.0
    %905 = vmatpush.msra.mxu0 %v42
    %906 = vmatpush.msra.mxu0 %v41
    %907 = vmatpush.msra.mxu0 %v40
    %908 = vmatpush.msra.mxu0 %v39
    %909 = vmatmul.f32.gmra.mxu0 %v891
    %v910 = vpop.f32.mrf.mxu0
    %v911 = vadd.f32 0.0, %v910
    %912 = vdwg.mxu0
    %v913 = vld [vmem:[#allocation2 + $0x6] sm:$0x1]
    %v914 = vadd.f32 %v913, %v911
    %v915 = vxor.u32 %v914, 2147483648
    %v916 = vmul.f32 %v915, 1.442695
    %v917 = vpow.pop %v916
    %v918 = vadd.f32 %v917, 1.0
    %v919 = vrcp.pop %v918
    %v920 = vmul.f32 %v918, %v919
    %v921 = vsub.f32 1.0, %v920
    %v922 = vmul.f32 %v919, %v921
    %v923 = vadd.f32 %v919, %v922
    %vm924 = vweird.f32 %v918
    %vm925 = vweird.f32 %v919
    %vm926 = vmor %vm924, %vm925
    %v927 = vsel %vm926, %v919, %v923
    %v928 = vand.u32 2147483647, %v918
    %vm929 = vcmp.eq.f32.partialorder %v928, 8.507059e+37
    %v930 = vand.u32 %v918, 2147483648
    %v931 = vor.u32 1.1754944e-38, %v930
    %v932 = vsel %vm929, %v931, %v927
    %v933 = vmul.f32 1.0, %v932
    %v934 = vtanh.pop %v914
    %v935 = vmul.f32 %v933, %v810
    %937 = vrot.lane.b32.xlu0 %v934, 96
    %v938 = vpop.permute.xlu0 %937
    %v940 = vmul.f32 %v933, %v938
    %942 = vrot.lane.b32.xlu0 %v940, 16
    %v943 = vpop.permute.xlu0 %942
    %v945 = vadd.f32 %v935, %v943
    %v946 = vtanh.pop %v945
    %948 = vrot.lane.b32.xlu0 %v946, 32
    %v949 = vpop.permute.xlu0 %948
    %v951 = vmul.f32 %v933, %v949
    %953 = vrot.lane.b32.xlu0 %v951, 80
    %v954 = vpop.permute.xlu0 %953
    %956 = vrot.lane.b32.xlu0 %v911, 64
    %v957 = vpop.permute.xlu0 %956
    %v959 = vsel %vm148, %v954, 0
    %961 = vmatpush.msra.mxu0 0.0
    %962 = vmatpush.msra.mxu0 0.0
    %963 = vmatpush.msra.mxu0 0.0
    %964 = vmatpush.msra.mxu0 0.0
    %965 = vmatpush.msra.mxu0 0.0
    %966 = vmatpush.msra.mxu0 0.0
    %967 = vmatpush.msra.mxu0 0.0
    %968 = vmatpush.msra.mxu0 0.0
    %969 = vmatpush.msra.mxu0 0.0
    %970 = vmatpush.msra.mxu0 0.0
    %971 = vmatpush.msra.mxu0 0.0
    %972 = vmatpush.msra.mxu0 0.0
    %973 = vmatpush.msra.mxu0 0.0
    %974 = vmatpush.msra.mxu0 0.0
    %975 = vmatpush.msra.mxu0 %v45
    %976 = vmatpush.msra.mxu0 %v44
    %977 = vmatmul.f32.gmra.mxu0 %v959
    %v978 = vpop.f32.mrf.mxu0
    %v979 = vadd.f32 %v957, %v978
    %980 = vdwg.mxu0
    %v981 = vadd.f32 %v979, %v46
    %v982 = vxor.u32 %v981, 2147483648
    %v983 = vmul.f32 %v982, 1.442695
    %v984 = vpow.pop %v983
    %v985 = vadd.f32 %v984, 1.0
    %v986 = vrcp.pop %v985
    %v987 = vmul.f32 %v985, %v986
    %v988 = vsub.f32 1.0, %v987
    %v989 = vmul.f32 %v986, %v988
    %v990 = vadd.f32 %v986, %v989
    %vm991 = vweird.f32 %v985
    %vm992 = vweird.f32 %v986
    %vm993 = vmor %vm991, %vm992
    %v994 = vsel %vm993, %v986, %v990
    %v995 = vand.u32 2147483647, %v985
    %vm996 = vcmp.eq.f32.partialorder %v995, 8.507059e+37
    %v997 = vand.u32 %v985, 2147483648
    %v998 = vor.u32 1.1754944e-38, %v997
    %v999 = vsel %vm996, %v998, %v994
    %v1000 = vmul.f32 1.0, %v999
    %v1001 = vtanh.pop %v981
    %v1002 = vmul.f32 %v1000, %v877
    %1004 = vrot.lane.b32.xlu0 %v1001, 96
    %v1005 = vpop.permute.xlu0 %1004
    %v1007 = vmul.f32 %v1000, %v1005
    %1009 = vrot.lane.b32.xlu0 %v1007, 16
    %v1010 = vpop.permute.xlu0 %1009
    %v1012 = vadd.f32 %v1002, %v1010
    %v1013 = vtanh.pop %v1012
    %1015 = vrot.lane.b32.xlu0 %v1013, 32
    %v1016 = vpop.permute.xlu0 %1015
    %v1018 = vmul.f32 %v1000, %v1016
    %1021 = vrot.lane.b32.xlu0 %v1018, 96
    %v1022 = vpop.permute.xlu0 %1021
    %v1024 = vsel %vm148, %v954, %v1022
    %v1026 = vsel %vm53, %v1024, 0
    %1028 = vmatpush.msra.mxu0 0.0
    %1029 = vmatpush.msra.mxu0 0.0
    %1030 = vmatpush.msra.mxu0 0.0
    %1031 = vmatpush.msra.mxu0 0.0
    %1032 = vmatpush.msra.mxu0 0.0
    %1033 = vmatpush.msra.mxu0 0.0
    %1034 = vmatpush.msra.mxu0 0.0
    %1035 = vmatpush.msra.mxu0 0.0
    %1036 = vmatpush.msra.mxu0 0.0
    %1037 = vmatpush.msra.mxu0 0.0
    %1038 = vmatpush.msra.mxu0 0.0
    %1039 = vmatpush.msra.mxu0 0.0
    %1040 = vmatpush.msra.mxu0 %v42
    %1041 = vmatpush.msra.mxu0 %v41
    %1042 = vmatpush.msra.mxu0 %v40
    %1043 = vmatpush.msra.mxu0 %v39
    %1044 = vmatmul.f32.gmra.mxu0 %v1026
    %v1045 = vpop.f32.mrf.mxu0
    %v1046 = vadd.f32 0.0, %v1045
    %1047 = vdwg.mxu0
    %v1048 = vld [vmem:[#allocation2 + $0x7] sm:$0x1]
    %v1049 = vadd.f32 %v1048, %v1046
    %v1050 = vxor.u32 %v1049, 2147483648
    %v1051 = vmul.f32 %v1050, 1.442695
    %v1052 = vpow.pop %v1051
    %v1053 = vadd.f32 %v1052, 1.0
    %v1054 = vrcp.pop %v1053
    %v1055 = vmul.f32 %v1053, %v1054
    %v1056 = vsub.f32 1.0, %v1055
    %v1057 = vmul.f32 %v1054, %v1056
    %v1058 = vadd.f32 %v1054, %v1057
    %vm1059 = vweird.f32 %v1053
    %vm1060 = vweird.f32 %v1054
    %vm1061 = vmor %vm1059, %vm1060
    %v1062 = vsel %vm1061, %v1054, %v1058
    %v1063 = vand.u32 2147483647, %v1053
    %vm1064 = vcmp.eq.f32.partialorder %v1063, 8.507059e+37
    %v1065 = vand.u32 %v1053, 2147483648
    %v1066 = vor.u32 1.1754944e-38, %v1065
    %v1067 = vsel %vm1064, %v1066, %v1062
    %v1068 = vmul.f32 1.0, %v1067
    %v1069 = vtanh.pop %v1049
    %v1070 = vmul.f32 %v1068, %v945
    %1072 = vrot.lane.b32.xlu0 %v1069, 96
    %v1073 = vpop.permute.xlu0 %1072
    %v1075 = vmul.f32 %v1068, %v1073
    %1077 = vrot.lane.b32.xlu0 %v1075, 16
    %v1078 = vpop.permute.xlu0 %1077
    %v1080 = vadd.f32 %v1070, %v1078
    %v1081 = vtanh.pop %v1080
    %1083 = vrot.lane.b32.xlu0 %v1081, 32
    %v1084 = vpop.permute.xlu0 %1083
    %v1086 = vmul.f32 %v1068, %v1084
    %1088 = vrot.lane.b32.xlu0 %v1086, 80
    %v1089 = vpop.permute.xlu0 %1088
    %1091 = vrot.lane.b32.xlu0 %v1046, 64
    %v1092 = vpop.permute.xlu0 %1091
    %v1094 = vsel %vm148, %v1089, 0
    %1096 = vmatpush.msra.mxu0 0.0
    %1097 = vmatpush.msra.mxu0 0.0
    %1098 = vmatpush.msra.mxu0 0.0
    %1099 = vmatpush.msra.mxu0 0.0
    %1100 = vmatpush.msra.mxu0 0.0
    %1101 = vmatpush.msra.mxu0 0.0
    %1102 = vmatpush.msra.mxu0 0.0
    %1103 = vmatpush.msra.mxu0 0.0
    %1104 = vmatpush.msra.mxu0 0.0
    %1105 = vmatpush.msra.mxu0 0.0
    %1106 = vmatpush.msra.mxu0 0.0
    %1107 = vmatpush.msra.mxu0 0.0
    %1108 = vmatpush.msra.mxu0 0.0
    %1109 = vmatpush.msra.mxu0 0.0
    %1110 = vmatpush.msra.mxu0 %v45
    %1111 = vmatpush.msra.mxu0 %v44
    %1112 = vmatmul.f32.gmra.mxu0 %v1094
    %v1113 = vpop.f32.mrf.mxu0
    %v1114 = vadd.f32 %v1092, %v1113
    %1115 = vdwg.mxu0
    %v1116 = vadd.f32 %v1114, %v46
    %v1117 = vxor.u32 %v1116, 2147483648
    %v1118 = vmul.f32 %v1117, 1.442695
    %v1119 = vpow.pop %v1118
    %v1120 = vadd.f32 %v1119, 1.0
    %v1121 = vrcp.pop %v1120
    %v1122 = vmul.f32 %v1120, %v1121
    %v1123 = vsub.f32 1.0, %v1122
    %v1124 = vmul.f32 %v1121, %v1123
    %v1125 = vadd.f32 %v1121, %v1124
    %vm1126 = vweird.f32 %v1120
    %vm1127 = vweird.f32 %v1121
    %vm1128 = vmor %vm1126, %vm1127
    %v1129 = vsel %vm1128, %v1121, %v1125
    %v1130 = vand.u32 2147483647, %v1120
    %vm1131 = vcmp.eq.f32.partialorder %v1130, 8.507059e+37
    %v1132 = vand.u32 %v1120, 2147483648
    %v1133 = vor.u32 1.1754944e-38, %v1132
    %v1134 = vsel %vm1131, %v1133, %v1129
    %v1135 = vmul.f32 1.0, %v1134
    %v1136 = vtanh.pop %v1116
    %v1137 = vmul.f32 %v1135, %v1012
    %1139 = vrot.lane.b32.xlu0 %v1136, 96
    %v1140 = vpop.permute.xlu0 %1139
    %v1142 = vmul.f32 %v1135, %v1140
    %1144 = vrot.lane.b32.xlu0 %v1142, 16
    %v1145 = vpop.permute.xlu0 %1144
    %v1147 = vadd.f32 %v1137, %v1145
    %v1148 = vtanh.pop %v1147
    %1150 = vrot.lane.b32.xlu0 %v1148, 32
    %v1151 = vpop.permute.xlu0 %1150
    %v1153 = vmul.f32 %v1135, %v1151
    %1156 = vrot.lane.b32.xlu0 %v1153, 96
    %v1157 = vpop.permute.xlu0 %1156
    %v1159 = vsel %vm148, %v1089, %v1157
    %v1161 = vperm.slane %v47, 0
    %1162 = vrot.lane.b32.xlu0 %v1161, 16
    %v1163 = vpop.permute.xlu0 %1162
    %v1165 = vmul.f32 %v1159, %v1163
    %1167 = vrot.lane.b32.xlu0 %v1165, 112
    %v1168 = vpop.permute.xlu0 %1167
    %vm1170 = vcmask 122880
    %v1171 = vsel %vm1170, %v1168, 0.0
    %1172 = vadd.xlane.f32.xlu0 %v1171
    %v1173 = vpop.xlane.xlu0 %1172
    %v1174 = vadd.f32 %v1173, %v48
    %v1175 = vld [vmem:[%s1] sm:$0xff]
    %v1177 = vsel %vm53, %v1175, 0
    %1179 = vmatpush.msra.mxu0 0.0
    %1180 = vmatpush.msra.mxu0 0.0
    %1181 = vmatpush.msra.mxu0 0.0
    %1182 = vmatpush.msra.mxu0 0.0
    %1183 = vmatpush.msra.mxu0 0.0
    %1184 = vmatpush.msra.mxu0 0.0
    %1185 = vmatpush.msra.mxu0 0.0
    %1186 = vmatpush.msra.mxu0 0.0
    %1187 = vmatpush.msra.mxu0 0.0
    %1188 = vmatpush.msra.mxu0 0.0
    %1189 = vmatpush.msra.mxu0 0.0
    %1190 = vmatpush.msra.mxu0 0.0
    %1191 = vmatpush.msra.mxu0 %v38
    %1192 = vmatpush.msra.mxu0 %v37
    %1193 = vmatpush.msra.mxu0 %v36
    %1194 = vmatpush.msra.mxu0 %v35
    %1195 = vmatmul.f32.gmra.mxu0 %v1177
    %v1196 = vpop.f32.mrf.mxu0
    %v1197 = vadd.f32 %v51, %v1196
    %1198 = vdwg.mxu0
    %1199 = vst.msk [vmem:[#allocation2] sm:$0xff] %vm77, %v1197
    %v1201 = vsel %vm53, %v1159, 0
    %1203 = vmatpush.msra.mxu0 0.0
    %1204 = vmatpush.msra.mxu0 0.0
    %1205 = vmatpush.msra.mxu0 0.0
    %1206 = vmatpush.msra.mxu0 0.0
    %1207 = vmatpush.msra.mxu0 0.0
    %1208 = vmatpush.msra.mxu0 0.0
    %1209 = vmatpush.msra.mxu0 0.0
    %1210 = vmatpush.msra.mxu0 0.0
    %1211 = vmatpush.msra.mxu0 0.0
    %1212 = vmatpush.msra.mxu0 0.0
    %1213 = vmatpush.msra.mxu0 0.0
    %1214 = vmatpush.msra.mxu0 0.0
    %1215 = vmatpush.msra.mxu0 %v42
    %1216 = vmatpush.msra.mxu0 %v41
    %1217 = vmatpush.msra.mxu0 %v40
    %1218 = vmatpush.msra.mxu0 %v39
    %1219 = vmatmul.f32.gmra.mxu0 %v1201
    %v1220 = vpop.f32.mrf.mxu0
    %v1221 = vadd.f32 0.0, %v1220
    %1222 = vdwg.mxu0
    %v1223 = vld [vmem:[#allocation2] sm:$0x1]
    %v1224 = vadd.f32 %v1223, %v1221
    %v1225 = vxor.u32 %v1224, 2147483648
    %v1226 = vmul.f32 %v1225, 1.442695
    %v1227 = vpow.pop %v1226
    %v1228 = vadd.f32 %v1227, 1.0
    %v1229 = vrcp.pop %v1228
    %v1230 = vmul.f32 %v1228, %v1229
    %v1231 = vsub.f32 1.0, %v1230
    %v1232 = vmul.f32 %v1229, %v1231
    %v1233 = vadd.f32 %v1229, %v1232
    %vm1234 = vweird.f32 %v1228
    %vm1235 = vweird.f32 %v1229
    %vm1236 = vmor %vm1234, %vm1235
    %v1237 = vsel %vm1236, %v1229, %v1233
    %v1238 = vand.u32 2147483647, %v1228
    %vm1239 = vcmp.eq.f32.partialorder %v1238, 8.507059e+37
    %v1240 = vand.u32 %v1228, 2147483648
    %v1241 = vor.u32 1.1754944e-38, %v1240
    %v1242 = vsel %vm1239, %v1241, %v1237
    %v1243 = vmul.f32 1.0, %v1242
    %v1244 = vtanh.pop %v1224
    %v1245 = vmul.f32 %v1243, %v1080
    %1247 = vrot.lane.b32.xlu0 %v1244, 96
    %v1248 = vpop.permute.xlu0 %1247
    %v1250 = vmul.f32 %v1243, %v1248
    %1252 = vrot.lane.b32.xlu0 %v1250, 16
    %v1253 = vpop.permute.xlu0 %1252
    %v1255 = vadd.f32 %v1245, %v1253
    %v1256 = vtanh.pop %v1255
    %1258 = vrot.lane.b32.xlu0 %v1256, 32
    %v1259 = vpop.permute.xlu0 %1258
    %v1261 = vmul.f32 %v1243, %v1259
    %1263 = vrot.lane.b32.xlu0 %v1261, 80
    %v1264 = vpop.permute.xlu0 %1263
    %1266 = vrot.lane.b32.xlu0 %v1221, 64
    %v1267 = vpop.permute.xlu0 %1266
    %v1269 = vsel %vm148, %v1264, 0
    %1271 = vmatpush.msra.mxu0 0.0
    %1272 = vmatpush.msra.mxu0 0.0
    %1273 = vmatpush.msra.mxu0 0.0
    %1274 = vmatpush.msra.mxu0 0.0
    %1275 = vmatpush.msra.mxu0 0.0
    %1276 = vmatpush.msra.mxu0 0.0
    %1277 = vmatpush.msra.mxu0 0.0
    %1278 = vmatpush.msra.mxu0 0.0
    %1279 = vmatpush.msra.mxu0 0.0
    %1280 = vmatpush.msra.mxu0 0.0
    %1281 = vmatpush.msra.mxu0 0.0
    %1282 = vmatpush.msra.mxu0 0.0
    %1283 = vmatpush.msra.mxu0 0.0
    %1284 = vmatpush.msra.mxu0 0.0
    %1285 = vmatpush.msra.mxu0 %v45
    %1286 = vmatpush.msra.mxu0 %v44
    %1287 = vmatmul.f32.gmra.mxu0 %v1269
    %v1288 = vpop.f32.mrf.mxu0
    %v1289 = vadd.f32 %v1267, %v1288
    %1290 = vdwg.mxu0
    %v1291 = vadd.f32 %v1289, %v46
    %v1292 = vxor.u32 %v1291, 2147483648
    %v1293 = vmul.f32 %v1292, 1.442695
    %v1294 = vpow.pop %v1293
    %v1295 = vadd.f32 %v1294, 1.0
    %v1296 = vrcp.pop %v1295
    %v1297 = vmul.f32 %v1295, %v1296
    %v1298 = vsub.f32 1.0, %v1297
    %v1299 = vmul.f32 %v1296, %v1298
    %v1300 = vadd.f32 %v1296, %v1299
    %vm1301 = vweird.f32 %v1295
    %vm1302 = vweird.f32 %v1296
    %vm1303 = vmor %vm1301, %vm1302
    %v1304 = vsel %vm1303, %v1296, %v1300
    %v1305 = vand.u32 2147483647, %v1295
    %vm1306 = vcmp.eq.f32.partialorder %v1305, 8.507059e+37
    %v1307 = vand.u32 %v1295, 2147483648
    %v1308 = vor.u32 1.1754944e-38, %v1307
    %v1309 = vsel %vm1306, %v1308, %v1304
    %v1310 = vmul.f32 1.0, %v1309
    %v1311 = vtanh.pop %v1291
    %v1312 = vmul.f32 %v1310, %v1147
    %1314 = vrot.lane.b32.xlu0 %v1311, 96
    %v1315 = vpop.permute.xlu0 %1314
    %v1317 = vmul.f32 %v1310, %v1315
    %1319 = vrot.lane.b32.xlu0 %v1317, 16
    %v1320 = vpop.permute.xlu0 %1319
    %v1322 = vadd.f32 %v1312, %v1320
    %v1323 = vtanh.pop %v1322
    %1325 = vrot.lane.b32.xlu0 %v1323, 32
    %v1326 = vpop.permute.xlu0 %1325
    %v1328 = vmul.f32 %v1310, %v1326
    %1331 = vrot.lane.b32.xlu0 %v1328, 96
    %v1332 = vpop.permute.xlu0 %1331
    %v1334 = vsel %vm148, %v1264, %v1332
    %v1336 = vsel %vm53, %v1334, 0
    %1338 = vmatpush.msra.mxu0 0.0
    %1339 = vmatpush.msra.mxu0 0.0
    %1340 = vmatpush.msra.mxu0 0.0
    %1341 = vmatpush.msra.mxu0 0.0
    %1342 = vmatpush.msra.mxu0 0.0
    %1343 = vmatpush.msra.mxu0 0.0
    %1344 = vmatpush.msra.mxu0 0.0
    %1345 = vmatpush.msra.mxu0 0.0
    %1346 = vmatpush.msra.mxu0 0.0
    %1347 = vmatpush.msra.mxu0 0.0
    %1348 = vmatpush.msra.mxu0 0.0
    %1349 = vmatpush.msra.mxu0 0.0
    %1350 = vmatpush.msra.mxu0 %v42
    %1351 = vmatpush.msra.mxu0 %v41
    %1352 = vmatpush.msra.mxu0 %v40
    %1353 = vmatpush.msra.mxu0 %v39
    %1354 = vmatmul.f32.gmra.mxu0 %v1336
    %v1355 = vpop.f32.mrf.mxu0
    %v1356 = vadd.f32 0.0, %v1355
    %1357 = vdwg.mxu0
    %v1358 = vld [vmem:[#allocation2 + $0x1] sm:$0x1]
    %v1359 = vadd.f32 %v1358, %v1356
    %v1360 = vxor.u32 %v1359, 2147483648
    %v1361 = vmul.f32 %v1360, 1.442695
    %v1362 = vpow.pop %v1361
    %v1363 = vadd.f32 %v1362, 1.0
    %v1364 = vrcp.pop %v1363
    %v1365 = vmul.f32 %v1363, %v1364
    %v1366 = vsub.f32 1.0, %v1365
    %v1367 = vmul.f32 %v1364, %v1366
    %v1368 = vadd.f32 %v1364, %v1367
    %vm1369 = vweird.f32 %v1363
    %vm1370 = vweird.f32 %v1364
    %vm1371 = vmor %vm1369, %vm1370
    %v1372 = vsel %vm1371, %v1364, %v1368
    %v1373 = vand.u32 2147483647, %v1363
    %vm1374 = vcmp.eq.f32.partialorder %v1373, 8.507059e+37
    %v1375 = vand.u32 %v1363, 2147483648
    %v1376 = vor.u32 1.1754944e-38, %v1375
    %v1377 = vsel %vm1374, %v1376, %v1372
    %v1378 = vmul.f32 1.0, %v1377
    %v1379 = vtanh.pop %v1359
    %v1380 = vmul.f32 %v1378, %v1255
    %1382 = vrot.lane.b32.xlu0 %v1379, 96
    %v1383 = vpop.permute.xlu0 %1382
    %v1385 = vmul.f32 %v1378, %v1383
    %1387 = vrot.lane.b32.xlu0 %v1385, 16
    %v1388 = vpop.permute.xlu0 %1387
    %v1390 = vadd.f32 %v1380, %v1388
    %v1391 = vtanh.pop %v1390
    %1393 = vrot.lane.b32.xlu0 %v1391, 32
    %v1394 = vpop.permute.xlu0 %1393
    %v1396 = vmul.f32 %v1378, %v1394
    %1398 = vrot.lane.b32.xlu0 %v1396, 80
    %v1399 = vpop.permute.xlu0 %1398
    %1401 = vrot.lane.b32.xlu0 %v1356, 64
    %v1402 = vpop.permute.xlu0 %1401
    %v1404 = vsel %vm148, %v1399, 0
    %1406 = vmatpush.msra.mxu0 0.0
    %1407 = vmatpush.msra.mxu0 0.0
    %1408 = vmatpush.msra.mxu0 0.0
    %1409 = vmatpush.msra.mxu0 0.0
    %1410 = vmatpush.msra.mxu0 0.0
    %1411 = vmatpush.msra.mxu0 0.0
    %1412 = vmatpush.msra.mxu0 0.0
    %1413 = vmatpush.msra.mxu0 0.0
    %1414 = vmatpush.msra.mxu0 0.0
    %1415 = vmatpush.msra.mxu0 0.0
    %1416 = vmatpush.msra.mxu0 0.0
    %1417 = vmatpush.msra.mxu0 0.0
    %1418 = vmatpush.msra.mxu0 0.0
    %1419 = vmatpush.msra.mxu0 0.0
    %1420 = vmatpush.msra.mxu0 %v45
    %1421 = vmatpush.msra.mxu0 %v44
    %1422 = vmatmul.f32.gmra.mxu0 %v1404
    %v1423 = vpop.f32.mrf.mxu0
    %v1424 = vadd.f32 %v1402, %v1423
    %1425 = vdwg.mxu0
    %v1426 = vadd.f32 %v1424, %v46
    %v1427 = vxor.u32 %v1426, 2147483648
    %v1428 = vmul.f32 %v1427, 1.442695
    %v1429 = vpow.pop %v1428
    %v1430 = vadd.f32 %v1429, 1.0
    %v1431 = vrcp.pop %v1430
    %v1432 = vmul.f32 %v1430, %v1431
    %v1433 = vsub.f32 1.0, %v1432
    %v1434 = vmul.f32 %v1431, %v1433
    %v1435 = vadd.f32 %v1431, %v1434
    %vm1436 = vweird.f32 %v1430
    %vm1437 = vweird.f32 %v1431
    %vm1438 = vmor %vm1436, %vm1437
    %v1439 = vsel %vm1438, %v1431, %v1435
    %v1440 = vand.u32 2147483647, %v1430
    %vm1441 = vcmp.eq.f32.partialorder %v1440, 8.507059e+37
    %v1442 = vand.u32 %v1430, 2147483648
    %v1443 = vor.u32 1.1754944e-38, %v1442
    %v1444 = vsel %vm1441, %v1443, %v1439
    %v1445 = vmul.f32 1.0, %v1444
    %v1446 = vtanh.pop %v1426
    %v1447 = vmul.f32 %v1445, %v1322
    %1449 = vrot.lane.b32.xlu0 %v1446, 96
    %v1450 = vpop.permute.xlu0 %1449
    %v1452 = vmul.f32 %v1445, %v1450
    %1454 = vrot.lane.b32.xlu0 %v1452, 16
    %v1455 = vpop.permute.xlu0 %1454
    %v1457 = vadd.f32 %v1447, %v1455
    %v1458 = vtanh.pop %v1457
    %1460 = vrot.lane.b32.xlu0 %v1458, 32
    %v1461 = vpop.permute.xlu0 %1460
    %v1463 = vmul.f32 %v1445, %v1461
    %1466 = vrot.lane.b32.xlu0 %v1463, 96
    %v1467 = vpop.permute.xlu0 %1466
    %v1469 = vsel %vm148, %v1399, %v1467
    %v1471 = vsel %vm53, %v1469, 0
    %1473 = vmatpush.msra.mxu0 0.0
    %1474 = vmatpush.msra.mxu0 0.0
    %1475 = vmatpush.msra.mxu0 0.0
    %1476 = vmatpush.msra.mxu0 0.0
    %1477 = vmatpush.msra.mxu0 0.0
    %1478 = vmatpush.msra.mxu0 0.0
    %1479 = vmatpush.msra.mxu0 0.0
    %1480 = vmatpush.msra.mxu0 0.0
    %1481 = vmatpush.msra.mxu0 0.0
    %1482 = vmatpush.msra.mxu0 0.0
    %1483 = vmatpush.msra.mxu0 0.0
    %1484 = vmatpush.msra.mxu0 0.0
    %1485 = vmatpush.msra.mxu0 %v42
    %1486 = vmatpush.msra.mxu0 %v41
    %1487 = vmatpush.msra.mxu0 %v40
    %1488 = vmatpush.msra.mxu0 %v39
    %1489 = vmatmul.f32.gmra.mxu0 %v1471
    %v1490 = vpop.f32.mrf.mxu0
    %v1491 = vadd.f32 0.0, %v1490
    %1492 = vdwg.mxu0
    %v1493 = vld [vmem:[#allocation2 + $0x2] sm:$0x1]
    %v1494 = vadd.f32 %v1493, %v1491
    %v1495 = vxor.u32 %v1494, 2147483648
    %v1496 = vmul.f32 %v1495, 1.442695
    %v1497 = vpow.pop %v1496
    %v1498 = vadd.f32 %v1497, 1.0
    %v1499 = vrcp.pop %v1498
    %v1500 = vmul.f32 %v1498, %v1499
    %v1501 = vsub.f32 1.0, %v1500
    %v1502 = vmul.f32 %v1499, %v1501
    %v1503 = vadd.f32 %v1499, %v1502
    %vm1504 = vweird.f32 %v1498
    %vm1505 = vweird.f32 %v1499
    %vm1506 = vmor %vm1504, %vm1505
    %v1507 = vsel %vm1506, %v1499, %v1503
    %v1508 = vand.u32 2147483647, %v1498
    %vm1509 = vcmp.eq.f32.partialorder %v1508, 8.507059e+37
    %v1510 = vand.u32 %v1498, 2147483648
    %v1511 = vor.u32 1.1754944e-38, %v1510
    %v1512 = vsel %vm1509, %v1511, %v1507
    %v1513 = vmul.f32 1.0, %v1512
    %v1514 = vtanh.pop %v1494
    %v1515 = vmul.f32 %v1513, %v1390
    %1517 = vrot.lane.b32.xlu0 %v1514, 96
    %v1518 = vpop.permute.xlu0 %1517
    %v1520 = vmul.f32 %v1513, %v1518
    %1522 = vrot.lane.b32.xlu0 %v1520, 16
    %v1523 = vpop.permute.xlu0 %1522
    %v1525 = vadd.f32 %v1515, %v1523
    %v1526 = vtanh.pop %v1525
    %1528 = vrot.lane.b32.xlu0 %v1526, 32
    %v1529 = vpop.permute.xlu0 %1528
    %v1531 = vmul.f32 %v1513, %v1529
    %1533 = vrot.lane.b32.xlu0 %v1531, 80
    %v1534 = vpop.permute.xlu0 %1533
    %1536 = vrot.lane.b32.xlu0 %v1491, 64
    %v1537 = vpop.permute.xlu0 %1536
    %v1539 = vsel %vm148, %v1534, 0
    %1541 = vmatpush.msra.mxu0 0.0
    %1542 = vmatpush.msra.mxu0 0.0
    %1543 = vmatpush.msra.mxu0 0.0
    %1544 = vmatpush.msra.mxu0 0.0
    %1545 = vmatpush.msra.mxu0 0.0
    %1546 = vmatpush.msra.mxu0 0.0
    %1547 = vmatpush.msra.mxu0 0.0
    %1548 = vmatpush.msra.mxu0 0.0
    %1549 = vmatpush.msra.mxu0 0.0
    %1550 = vmatpush.msra.mxu0 0.0
    %1551 = vmatpush.msra.mxu0 0.0
    %1552 = vmatpush.msra.mxu0 0.0
    %1553 = vmatpush.msra.mxu0 0.0
    %1554 = vmatpush.msra.mxu0 0.0
    %1555 = vmatpush.msra.mxu0 %v45
    %1556 = vmatpush.msra.mxu0 %v44
    %1557 = vmatmul.f32.gmra.mxu0 %v1539
    %v1558 = vpop.f32.mrf.mxu0
    %v1559 = vadd.f32 %v1537, %v1558
    %1560 = vdwg.mxu0
    %v1561 = vadd.f32 %v1559, %v46
    %v1562 = vxor.u32 %v1561, 2147483648
    %v1563 = vmul.f32 %v1562, 1.442695
    %v1564 = vpow.pop %v1563
    %v1565 = vadd.f32 %v1564, 1.0
    %v1566 = vrcp.pop %v1565
    %v1567 = vmul.f32 %v1565, %v1566
    %v1568 = vsub.f32 1.0, %v1567
    %v1569 = vmul.f32 %v1566, %v1568
    %v1570 = vadd.f32 %v1566, %v1569
    %vm1571 = vweird.f32 %v1565
    %vm1572 = vweird.f32 %v1566
    %vm1573 = vmor %vm1571, %vm1572
    %v1574 = vsel %vm1573, %v1566, %v1570
    %v1575 = vand.u32 2147483647, %v1565
    %vm1576 = vcmp.eq.f32.partialorder %v1575, 8.507059e+37
    %v1577 = vand.u32 %v1565, 2147483648
    %v1578 = vor.u32 1.1754944e-38, %v1577
    %v1579 = vsel %vm1576, %v1578, %v1574
    %v1580 = vmul.f32 1.0, %v1579
    %v1581 = vtanh.pop %v1561
    %v1582 = vmul.f32 %v1580, %v1457
    %1584 = vrot.lane.b32.xlu0 %v1581, 96
    %v1585 = vpop.permute.xlu0 %1584
    %v1587 = vmul.f32 %v1580, %v1585
    %1589 = vrot.lane.b32.xlu0 %v1587, 16
    %v1590 = vpop.permute.xlu0 %1589
    %v1592 = vadd.f32 %v1582, %v1590
    %v1593 = vtanh.pop %v1592
    %1595 = vrot.lane.b32.xlu0 %v1593, 32
    %v1596 = vpop.permute.xlu0 %1595
    %v1598 = vmul.f32 %v1580, %v1596
    %1601 = vrot.lane.b32.xlu0 %v1598, 96
    %v1602 = vpop.permute.xlu0 %1601
    %v1604 = vsel %vm148, %v1534, %v1602
    %v1606 = vsel %vm53, %v1604, 0
    %1608 = vmatpush.msra.mxu0 0.0
    %1609 = vmatpush.msra.mxu0 0.0
    %1610 = vmatpush.msra.mxu0 0.0
    %1611 = vmatpush.msra.mxu0 0.0
    %1612 = vmatpush.msra.mxu0 0.0
    %1613 = vmatpush.msra.mxu0 0.0
    %1614 = vmatpush.msra.mxu0 0.0
    %1615 = vmatpush.msra.mxu0 0.0
    %1616 = vmatpush.msra.mxu0 0.0
    %1617 = vmatpush.msra.mxu0 0.0
    %1618 = vmatpush.msra.mxu0 0.0
    %1619 = vmatpush.msra.mxu0 0.0
    %1620 = vmatpush.msra.mxu0 %v42
    %1621 = vmatpush.msra.mxu0 %v41
    %1622 = vmatpush.msra.mxu0 %v40
    %1623 = vmatpush.msra.mxu0 %v39
    %1624 = vmatmul.f32.gmra.mxu0 %v1606
    %v1625 = vpop.f32.mrf.mxu0
    %v1626 = vadd.f32 0.0, %v1625
    %1627 = vdwg.mxu0
    %v1628 = vld [vmem:[#allocation2 + $0x3] sm:$0x1]
    %v1629 = vadd.f32 %v1628, %v1626
    %v1630 = vxor.u32 %v1629, 2147483648
    %v1631 = vmul.f32 %v1630, 1.442695
    %v1632 = vpow.pop %v1631
    %v1633 = vadd.f32 %v1632, 1.0
    %v1634 = vrcp.pop %v1633
    %v1635 = vmul.f32 %v1633, %v1634
    %v1636 = vsub.f32 1.0, %v1635
    %v1637 = vmul.f32 %v1634, %v1636
    %v1638 = vadd.f32 %v1634, %v1637
    %vm1639 = vweird.f32 %v1633
    %vm1640 = vweird.f32 %v1634
    %vm1641 = vmor %vm1639, %vm1640
    %v1642 = vsel %vm1641, %v1634, %v1638
    %v1643 = vand.u32 2147483647, %v1633
    %vm1644 = vcmp.eq.f32.partialorder %v1643, 8.507059e+37
    %v1645 = vand.u32 %v1633, 2147483648
    %v1646 = vor.u32 1.1754944e-38, %v1645
    %v1647 = vsel %vm1644, %v1646, %v1642
    %v1648 = vmul.f32 1.0, %v1647
    %v1649 = vtanh.pop %v1629
    %v1650 = vmul.f32 %v1648, %v1525
    %1652 = vrot.lane.b32.xlu0 %v1649, 96
    %v1653 = vpop.permute.xlu0 %1652
    %v1655 = vmul.f32 %v1648, %v1653
    %1657 = vrot.lane.b32.xlu0 %v1655, 16
    %v1658 = vpop.permute.xlu0 %1657
    %v1660 = vadd.f32 %v1650, %v1658
    %v1661 = vtanh.pop %v1660
    %1663 = vrot.lane.b32.xlu0 %v1661, 32
    %v1664 = vpop.permute.xlu0 %1663
    %v1666 = vmul.f32 %v1648, %v1664
    %1668 = vrot.lane.b32.xlu0 %v1666, 80
    %v1669 = vpop.permute.xlu0 %1668
    %1671 = vrot.lane.b32.xlu0 %v1626, 64
    %v1672 = vpop.permute.xlu0 %1671
    %v1674 = vsel %vm148, %v1669, 0
    %1676 = vmatpush.msra.mxu0 0.0
    %1677 = vmatpush.msra.mxu0 0.0
    %1678 = vmatpush.msra.mxu0 0.0
    %1679 = vmatpush.msra.mxu0 0.0
    %1680 = vmatpush.msra.mxu0 0.0
    %1681 = vmatpush.msra.mxu0 0.0
    %1682 = vmatpush.msra.mxu0 0.0
    %1683 = vmatpush.msra.mxu0 0.0
    %1684 = vmatpush.msra.mxu0 0.0
    %1685 = vmatpush.msra.mxu0 0.0
    %1686 = vmatpush.msra.mxu0 0.0
    %1687 = vmatpush.msra.mxu0 0.0
    %1688 = vmatpush.msra.mxu0 0.0
    %1689 = vmatpush.msra.mxu0 0.0
    %1690 = vmatpush.msra.mxu0 %v45
    %1691 = vmatpush.msra.mxu0 %v44
    %1692 = vmatmul.f32.gmra.mxu0 %v1674
    %v1693 = vpop.f32.mrf.mxu0
    %v1694 = vadd.f32 %v1672, %v1693
    %1695 = vdwg.mxu0
    %v1696 = vadd.f32 %v1694, %v46
    %v1697 = vxor.u32 %v1696, 2147483648
    %v1698 = vmul.f32 %v1697, 1.442695
    %v1699 = vpow.pop %v1698
    %v1700 = vadd.f32 %v1699, 1.0
    %v1701 = vrcp.pop %v1700
    %v1702 = vmul.f32 %v1700, %v1701
    %v1703 = vsub.f32 1.0, %v1702
    %v1704 = vmul.f32 %v1701, %v1703
    %v1705 = vadd.f32 %v1701, %v1704
    %vm1706 = vweird.f32 %v1700
    %vm1707 = vweird.f32 %v1701
    %vm1708 = vmor %vm1706, %vm1707
    %v1709 = vsel %vm1708, %v1701, %v1705
    %v1710 = vand.u32 2147483647, %v1700
    %vm1711 = vcmp.eq.f32.partialorder %v1710, 8.507059e+37
    %v1712 = vand.u32 %v1700, 2147483648
    %v1713 = vor.u32 1.1754944e-38, %v1712
    %v1714 = vsel %vm1711, %v1713, %v1709
    %v1715 = vmul.f32 1.0, %v1714
    %v1716 = vtanh.pop %v1696
    %v1717 = vmul.f32 %v1715, %v1592
    %1719 = vrot.lane.b32.xlu0 %v1716, 96
    %v1720 = vpop.permute.xlu0 %1719
    %v1722 = vmul.f32 %v1715, %v1720
    %1724 = vrot.lane.b32.xlu0 %v1722, 16
    %v1725 = vpop.permute.xlu0 %1724
    %v1727 = vadd.f32 %v1717, %v1725
    %v1728 = vtanh.pop %v1727
    %1730 = vrot.lane.b32.xlu0 %v1728, 32
    %v1731 = vpop.permute.xlu0 %1730
    %v1733 = vmul.f32 %v1715, %v1731
    %1736 = vrot.lane.b32.xlu0 %v1733, 96
    %v1737 = vpop.permute.xlu0 %1736
    %v1739 = vsel %vm148, %v1669, %v1737
    %v1741 = vsel %vm53, %v1739, 0
    %1743 = vmatpush.msra.mxu0 0.0
    %1744 = vmatpush.msra.mxu0 0.0
    %1745 = vmatpush.msra.mxu0 0.0
    %1746 = vmatpush.msra.mxu0 0.0
    %1747 = vmatpush.msra.mxu0 0.0
    %1748 = vmatpush.msra.mxu0 0.0
    %1749 = vmatpush.msra.mxu0 0.0
    %1750 = vmatpush.msra.mxu0 0.0
    %1751 = vmatpush.msra.mxu0 0.0
    %1752 = vmatpush.msra.mxu0 0.0
    %1753 = vmatpush.msra.mxu0 0.0
    %1754 = vmatpush.msra.mxu0 0.0
    %1755 = vmatpush.msra.mxu0 %v42
    %1756 = vmatpush.msra.mxu0 %v41
    %1757 = vmatpush.msra.mxu0 %v40
    %1758 = vmatpush.msra.mxu0 %v39
    %1759 = vmatmul.f32.gmra.mxu0 %v1741
    %v1760 = vpop.f32.mrf.mxu0
    %v1761 = vadd.f32 0.0, %v1760
    %1762 = vdwg.mxu0
    %v1763 = vld [vmem:[#allocation2 + $0x4] sm:$0x1]
    %v1764 = vadd.f32 %v1763, %v1761
    %v1765 = vxor.u32 %v1764, 2147483648
    %v1766 = vmul.f32 %v1765, 1.442695
    %v1767 = vpow.pop %v1766
    %v1768 = vadd.f32 %v1767, 1.0
    %v1769 = vrcp.pop %v1768
    %v1770 = vmul.f32 %v1768, %v1769
    %v1771 = vsub.f32 1.0, %v1770
    %v1772 = vmul.f32 %v1769, %v1771
    %v1773 = vadd.f32 %v1769, %v1772
    %vm1774 = vweird.f32 %v1768
    %vm1775 = vweird.f32 %v1769
    %vm1776 = vmor %vm1774, %vm1775
    %v1777 = vsel %vm1776, %v1769, %v1773
    %v1778 = vand.u32 2147483647, %v1768
    %vm1779 = vcmp.eq.f32.partialorder %v1778, 8.507059e+37
    %v1780 = vand.u32 %v1768, 2147483648
    %v1781 = vor.u32 1.1754944e-38, %v1780
    %v1782 = vsel %vm1779, %v1781, %v1777
    %v1783 = vmul.f32 1.0, %v1782
    %v1784 = vtanh.pop %v1764
    %v1785 = vmul.f32 %v1783, %v1660
    %1787 = vrot.lane.b32.xlu0 %v1784, 96
    %v1788 = vpop.permute.xlu0 %1787
    %v1790 = vmul.f32 %v1783, %v1788
    %1792 = vrot.lane.b32.xlu0 %v1790, 16
    %v1793 = vpop.permute.xlu0 %1792
    %v1795 = vadd.f32 %v1785, %v1793
    %v1796 = vtanh.pop %v1795
    %1798 = vrot.lane.b32.xlu0 %v1796, 32
    %v1799 = vpop.permute.xlu0 %1798
    %v1801 = vmul.f32 %v1783, %v1799
    %1803 = vrot.lane.b32.xlu0 %v1801, 80
    %v1804 = vpop.permute.xlu0 %1803
    %1806 = vrot.lane.b32.xlu0 %v1761, 64
    %v1807 = vpop.permute.xlu0 %1806
    %v1809 = vsel %vm148, %v1804, 0
    %1811 = vmatpush.msra.mxu0 0.0
    %1812 = vmatpush.msra.mxu0 0.0
    %1813 = vmatpush.msra.mxu0 0.0
    %1814 = vmatpush.msra.mxu0 0.0
    %1815 = vmatpush.msra.mxu0 0.0
    %1816 = vmatpush.msra.mxu0 0.0
    %1817 = vmatpush.msra.mxu0 0.0
    %1818 = vmatpush.msra.mxu0 0.0
    %1819 = vmatpush.msra.mxu0 0.0
    %1820 = vmatpush.msra.mxu0 0.0
    %1821 = vmatpush.msra.mxu0 0.0
    %1822 = vmatpush.msra.mxu0 0.0
    %1823 = vmatpush.msra.mxu0 0.0
    %1824 = vmatpush.msra.mxu0 0.0
    %1825 = vmatpush.msra.mxu0 %v45
    %1826 = vmatpush.msra.mxu0 %v44
    %1827 = vmatmul.f32.gmra.mxu0 %v1809
    %v1828 = vpop.f32.mrf.mxu0
    %v1829 = vadd.f32 %v1807, %v1828
    %1830 = vdwg.mxu0
    %v1831 = vadd.f32 %v1829, %v46
    %v1832 = vxor.u32 %v1831, 2147483648
    %v1833 = vmul.f32 %v1832, 1.442695
    %v1834 = vpow.pop %v1833
    %v1835 = vadd.f32 %v1834, 1.0
    %v1836 = vrcp.pop %v1835
    %v1837 = vmul.f32 %v1835, %v1836
    %v1838 = vsub.f32 1.0, %v1837
    %v1839 = vmul.f32 %v1836, %v1838
    %v1840 = vadd.f32 %v1836, %v1839
    %vm1841 = vweird.f32 %v1835
    %vm1842 = vweird.f32 %v1836
    %vm1843 = vmor %vm1841, %vm1842
    %v1844 = vsel %vm1843, %v1836, %v1840
    %v1845 = vand.u32 2147483647, %v1835
    %vm1846 = vcmp.eq.f32.partialorder %v1845, 8.507059e+37
    %v1847 = vand.u32 %v1835, 2147483648
    %v1848 = vor.u32 1.1754944e-38, %v1847
    %v1849 = vsel %vm1846, %v1848, %v1844
    %v1850 = vmul.f32 1.0, %v1849
    %v1851 = vtanh.pop %v1831
    %v1852 = vmul.f32 %v1850, %v1727
    %1854 = vrot.lane.b32.xlu0 %v1851, 96
    %v1855 = vpop.permute.xlu0 %1854
    %v1857 = vmul.f32 %v1850, %v1855
    %1859 = vrot.lane.b32.xlu0 %v1857, 16
    %v1860 = vpop.permute.xlu0 %1859
    %v1862 = vadd.f32 %v1852, %v1860
    %v1863 = vtanh.pop %v1862
    %1865 = vrot.lane.b32.xlu0 %v1863, 32
    %v1866 = vpop.permute.xlu0 %1865
    %v1868 = vmul.f32 %v1850, %v1866
    %1871 = vrot.lane.b32.xlu0 %v1868, 96
    %v1872 = vpop.permute.xlu0 %1871
    %v1874 = vsel %vm148, %v1804, %v1872
    %v1876 = vsel %vm53, %v1874, 0
    %1878 = vmatpush.msra.mxu0 0.0
    %1879 = vmatpush.msra.mxu0 0.0
    %1880 = vmatpush.msra.mxu0 0.0
    %1881 = vmatpush.msra.mxu0 0.0
    %1882 = vmatpush.msra.mxu0 0.0
    %1883 = vmatpush.msra.mxu0 0.0
    %1884 = vmatpush.msra.mxu0 0.0
    %1885 = vmatpush.msra.mxu0 0.0
    %1886 = vmatpush.msra.mxu0 0.0
    %1887 = vmatpush.msra.mxu0 0.0
    %1888 = vmatpush.msra.mxu0 0.0
    %1889 = vmatpush.msra.mxu0 0.0
    %1890 = vmatpush.msra.mxu0 %v42
    %1891 = vmatpush.msra.mxu0 %v41
    %1892 = vmatpush.msra.mxu0 %v40
    %1893 = vmatpush.msra.mxu0 %v39
    %1894 = vmatmul.f32.gmra.mxu0 %v1876
    %v1895 = vpop.f32.mrf.mxu0
    %v1896 = vadd.f32 0.0, %v1895
    %1897 = vdwg.mxu0
    %v1898 = vld [vmem:[#allocation2 + $0x5] sm:$0x1]
    %v1899 = vadd.f32 %v1898, %v1896
    %v1900 = vxor.u32 %v1899, 2147483648
    %v1901 = vmul.f32 %v1900, 1.442695
    %v1902 = vpow.pop %v1901
    %v1903 = vadd.f32 %v1902, 1.0
    %v1904 = vrcp.pop %v1903
    %v1905 = vmul.f32 %v1903, %v1904
    %v1906 = vsub.f32 1.0, %v1905
    %v1907 = vmul.f32 %v1904, %v1906
    %v1908 = vadd.f32 %v1904, %v1907
    %vm1909 = vweird.f32 %v1903
    %vm1910 = vweird.f32 %v1904
    %vm1911 = vmor %vm1909, %vm1910
    %v1912 = vsel %vm1911, %v1904, %v1908
    %v1913 = vand.u32 2147483647, %v1903
    %vm1914 = vcmp.eq.f32.partialorder %v1913, 8.507059e+37
    %v1915 = vand.u32 %v1903, 2147483648
    %v1916 = vor.u32 1.1754944e-38, %v1915
    %v1917 = vsel %vm1914, %v1916, %v1912
    %v1918 = vmul.f32 1.0, %v1917
    %v1919 = vtanh.pop %v1899
    %v1920 = vmul.f32 %v1918, %v1795
    %1922 = vrot.lane.b32.xlu0 %v1919, 96
    %v1923 = vpop.permute.xlu0 %1922
    %v1925 = vmul.f32 %v1918, %v1923
    %1927 = vrot.lane.b32.xlu0 %v1925, 16
    %v1928 = vpop.permute.xlu0 %1927
    %v1930 = vadd.f32 %v1920, %v1928
    %v1931 = vtanh.pop %v1930
    %1933 = vrot.lane.b32.xlu0 %v1931, 32
    %v1934 = vpop.permute.xlu0 %1933
    %v1936 = vmul.f32 %v1918, %v1934
    %1938 = vrot.lane.b32.xlu0 %v1936, 80
    %v1939 = vpop.permute.xlu0 %1938
    %1941 = vrot.lane.b32.xlu0 %v1896, 64
    %v1942 = vpop.permute.xlu0 %1941
    %v1944 = vsel %vm148, %v1939, 0
    %1946 = vmatpush.msra.mxu0 0.0
    %1947 = vmatpush.msra.mxu0 0.0
    %1948 = vmatpush.msra.mxu0 0.0
    %1949 = vmatpush.msra.mxu0 0.0
    %1950 = vmatpush.msra.mxu0 0.0
    %1951 = vmatpush.msra.mxu0 0.0
    %1952 = vmatpush.msra.mxu0 0.0
    %1953 = vmatpush.msra.mxu0 0.0
    %1954 = vmatpush.msra.mxu0 0.0
    %1955 = vmatpush.msra.mxu0 0.0
    %1956 = vmatpush.msra.mxu0 0.0
    %1957 = vmatpush.msra.mxu0 0.0
    %1958 = vmatpush.msra.mxu0 0.0
    %1959 = vmatpush.msra.mxu0 0.0
    %1960 = vmatpush.msra.mxu0 %v45
    %1961 = vmatpush.msra.mxu0 %v44
    %1962 = vmatmul.f32.gmra.mxu0 %v1944
    %v1963 = vpop.f32.mrf.mxu0
    %v1964 = vadd.f32 %v1942, %v1963
    %1965 = vdwg.mxu0
    %v1966 = vadd.f32 %v1964, %v46
    %v1967 = vxor.u32 %v1966, 2147483648
    %v1968 = vmul.f32 %v1967, 1.442695
    %v1969 = vpow.pop %v1968
    %v1970 = vadd.f32 %v1969, 1.0
    %v1971 = vrcp.pop %v1970
    %v1972 = vmul.f32 %v1970, %v1971
    %v1973 = vsub.f32 1.0, %v1972
    %v1974 = vmul.f32 %v1971, %v1973
    %v1975 = vadd.f32 %v1971, %v1974
    %vm1976 = vweird.f32 %v1970
    %vm1977 = vweird.f32 %v1971
    %vm1978 = vmor %vm1976, %vm1977
    %v1979 = vsel %vm1978, %v1971, %v1975
    %v1980 = vand.u32 2147483647, %v1970
    %vm1981 = vcmp.eq.f32.partialorder %v1980, 8.507059e+37
    %v1982 = vand.u32 %v1970, 2147483648
    %v1983 = vor.u32 1.1754944e-38, %v1982
    %v1984 = vsel %vm1981, %v1983, %v1979
    %v1985 = vmul.f32 1.0, %v1984
    %v1986 = vtanh.pop %v1966
    %v1987 = vmul.f32 %v1985, %v1862
    %1989 = vrot.lane.b32.xlu0 %v1986, 96
    %v1990 = vpop.permute.xlu0 %1989
    %v1992 = vmul.f32 %v1985, %v1990
    %1994 = vrot.lane.b32.xlu0 %v1992, 16
    %v1995 = vpop.permute.xlu0 %1994
    %v1997 = vadd.f32 %v1987, %v1995
    %v1998 = vtanh.pop %v1997
    %2000 = vrot.lane.b32.xlu0 %v1998, 32
    %v2001 = vpop.permute.xlu0 %2000
    %v2003 = vmul.f32 %v1985, %v2001
    %2006 = vrot.lane.b32.xlu0 %v2003, 96
    %v2007 = vpop.permute.xlu0 %2006
    %v2009 = vsel %vm148, %v1939, %v2007
    %v2011 = vsel %vm53, %v2009, 0
    %2013 = vmatpush.msra.mxu0 0.0
    %2014 = vmatpush.msra.mxu0 0.0
    %2015 = vmatpush.msra.mxu0 0.0
    %2016 = vmatpush.msra.mxu0 0.0
    %2017 = vmatpush.msra.mxu0 0.0
    %2018 = vmatpush.msra.mxu0 0.0
    %2019 = vmatpush.msra.mxu0 0.0
    %2020 = vmatpush.msra.mxu0 0.0
    %2021 = vmatpush.msra.mxu0 0.0
    %2022 = vmatpush.msra.mxu0 0.0
    %2023 = vmatpush.msra.mxu0 0.0
    %2024 = vmatpush.msra.mxu0 0.0
    %2025 = vmatpush.msra.mxu0 %v42
    %2026 = vmatpush.msra.mxu0 %v41
    %2027 = vmatpush.msra.mxu0 %v40
    %2028 = vmatpush.msra.mxu0 %v39
    %2029 = vmatmul.f32.gmra.mxu0 %v2011
    %v2030 = vpop.f32.mrf.mxu0
    %v2031 = vadd.f32 0.0, %v2030
    %2032 = vdwg.mxu0
    %v2033 = vld [vmem:[#allocation2 + $0x6] sm:$0x1]
    %v2034 = vadd.f32 %v2033, %v2031
    %v2035 = vxor.u32 %v2034, 2147483648
    %v2036 = vmul.f32 %v2035, 1.442695
    %v2037 = vpow.pop %v2036
    %v2038 = vadd.f32 %v2037, 1.0
    %v2039 = vrcp.pop %v2038
    %v2040 = vmul.f32 %v2038, %v2039
    %v2041 = vsub.f32 1.0, %v2040
    %v2042 = vmul.f32 %v2039, %v2041
    %v2043 = vadd.f32 %v2039, %v2042
    %vm2044 = vweird.f32 %v2038
    %vm2045 = vweird.f32 %v2039
    %vm2046 = vmor %vm2044, %vm2045
    %v2047 = vsel %vm2046, %v2039, %v2043
    %v2048 = vand.u32 2147483647, %v2038
    %vm2049 = vcmp.eq.f32.partialorder %v2048, 8.507059e+37
    %v2050 = vand.u32 %v2038, 2147483648
    %v2051 = vor.u32 1.1754944e-38, %v2050
    %v2052 = vsel %vm2049, %v2051, %v2047
    %v2053 = vmul.f32 1.0, %v2052
    %v2054 = vtanh.pop %v2034
    %v2055 = vmul.f32 %v2053, %v1930
    %2057 = vrot.lane.b32.xlu0 %v2054, 96
    %v2058 = vpop.permute.xlu0 %2057
    %v2060 = vmul.f32 %v2053, %v2058
    %2062 = vrot.lane.b32.xlu0 %v2060, 16
    %v2063 = vpop.permute.xlu0 %2062
    %v2065 = vadd.f32 %v2055, %v2063
    %v2066 = vtanh.pop %v2065
    %2068 = vrot.lane.b32.xlu0 %v2066, 32
    %v2069 = vpop.permute.xlu0 %2068
    %v2071 = vmul.f32 %v2053, %v2069
    %2073 = vrot.lane.b32.xlu0 %v2071, 80
    %v2074 = vpop.permute.xlu0 %2073
    %2076 = vrot.lane.b32.xlu0 %v2031, 64
    %v2077 = vpop.permute.xlu0 %2076
    %v2079 = vsel %vm148, %v2074, 0
    %2081 = vmatpush.msra.mxu0 0.0
    %2082 = vmatpush.msra.mxu0 0.0
    %2083 = vmatpush.msra.mxu0 0.0
    %2084 = vmatpush.msra.mxu0 0.0
    %2085 = vmatpush.msra.mxu0 0.0
    %2086 = vmatpush.msra.mxu0 0.0
    %2087 = vmatpush.msra.mxu0 0.0
    %2088 = vmatpush.msra.mxu0 0.0
    %2089 = vmatpush.msra.mxu0 0.0
    %2090 = vmatpush.msra.mxu0 0.0
    %2091 = vmatpush.msra.mxu0 0.0
    %2092 = vmatpush.msra.mxu0 0.0
    %2093 = vmatpush.msra.mxu0 0.0
    %2094 = vmatpush.msra.mxu0 0.0
    %2095 = vmatpush.msra.mxu0 %v45
    %2096 = vmatpush.msra.mxu0 %v44
    %2097 = vmatmul.f32.gmra.mxu0 %v2079
    %v2098 = vpop.f32.mrf.mxu0
    %v2099 = vadd.f32 %v2077, %v2098
    %2100 = vdwg.mxu0
    %v2101 = vadd.f32 %v2099, %v46
    %v2102 = vxor.u32 %v2101, 2147483648
    %v2103 = vmul.f32 %v2102, 1.442695
    %v2104 = vpow.pop %v2103
    %v2105 = vadd.f32 %v2104, 1.0
    %v2106 = vrcp.pop %v2105
    %v2107 = vmul.f32 %v2105, %v2106
    %v2108 = vsub.f32 1.0, %v2107
    %v2109 = vmul.f32 %v2106, %v2108
    %v2110 = vadd.f32 %v2106, %v2109
    %vm2111 = vweird.f32 %v2105
    %vm2112 = vweird.f32 %v2106
    %vm2113 = vmor %vm2111, %vm2112
    %v2114 = vsel %vm2113, %v2106, %v2110
    %v2115 = vand.u32 2147483647, %v2105
    %vm2116 = vcmp.eq.f32.partialorder %v2115, 8.507059e+37
    %v2117 = vand.u32 %v2105, 2147483648
    %v2118 = vor.u32 1.1754944e-38, %v2117
    %v2119 = vsel %vm2116, %v2118, %v2114
    %v2120 = vmul.f32 1.0, %v2119
    %v2121 = vtanh.pop %v2101
    %v2122 = vmul.f32 %v2120, %v1997
    %2124 = vrot.lane.b32.xlu0 %v2121, 96
    %v2125 = vpop.permute.xlu0 %2124
    %v2127 = vmul.f32 %v2120, %v2125
    %2129 = vrot.lane.b32.xlu0 %v2127, 16
    %v2130 = vpop.permute.xlu0 %2129
    %v2132 = vadd.f32 %v2122, %v2130
    %v2133 = vtanh.pop %v2132
    %2135 = vrot.lane.b32.xlu0 %v2133, 32
    %v2136 = vpop.permute.xlu0 %2135
    %v2138 = vmul.f32 %v2120, %v2136
    %2141 = vrot.lane.b32.xlu0 %v2138, 96
    %v2142 = vpop.permute.xlu0 %2141
    %v2144 = vsel %vm148, %v2074, %v2142
    %v2146 = vsel %vm53, %v2144, 0
    %2148 = vmatpush.msra.mxu0 0.0
    %2149 = vmatpush.msra.mxu0 0.0
    %2150 = vmatpush.msra.mxu0 0.0
    %2151 = vmatpush.msra.mxu0 0.0
    %2152 = vmatpush.msra.mxu0 0.0
    %2153 = vmatpush.msra.mxu0 0.0
    %2154 = vmatpush.msra.mxu0 0.0
    %2155 = vmatpush.msra.mxu0 0.0
    %2156 = vmatpush.msra.mxu0 0.0
    %2157 = vmatpush.msra.mxu0 0.0
    %2158 = vmatpush.msra.mxu0 0.0
    %2159 = vmatpush.msra.mxu0 0.0
    %2160 = vmatpush.msra.mxu0 %v42
    %2161 = vmatpush.msra.mxu0 %v41
    %2162 = vmatpush.msra.mxu0 %v40
    %2163 = vmatpush.msra.mxu0 %v39
    %2164 = vmatmul.f32.gmra.mxu0 %v2146
    %v2165 = vpop.f32.mrf.mxu0
    %v2166 = vadd.f32 0.0, %v2165
    %2167 = vdwg.mxu0
    %v2168 = vld [vmem:[#allocation2 + $0x7] sm:$0x1]
    %v2169 = vadd.f32 %v2168, %v2166
    %v2170 = vxor.u32 %v2169, 2147483648
    %v2171 = vmul.f32 %v2170, 1.442695
    %v2172 = vpow.pop %v2171
    %v2173 = vadd.f32 %v2172, 1.0
    %v2174 = vrcp.pop %v2173
    %v2175 = vmul.f32 %v2173, %v2174
    %v2176 = vsub.f32 1.0, %v2175
    %v2177 = vmul.f32 %v2174, %v2176
    %v2178 = vadd.f32 %v2174, %v2177
    %vm2179 = vweird.f32 %v2173
    %vm2180 = vweird.f32 %v2174
    %vm2181 = vmor %vm2179, %vm2180
    %v2182 = vsel %vm2181, %v2174, %v2178
    %v2183 = vand.u32 2147483647, %v2173
    %vm2184 = vcmp.eq.f32.partialorder %v2183, 8.507059e+37
    %v2185 = vand.u32 %v2173, 2147483648
    %v2186 = vor.u32 1.1754944e-38, %v2185
    %v2187 = vsel %vm2184, %v2186, %v2182
    %v2188 = vmul.f32 1.0, %v2187
    %v2189 = vtanh.pop %v2169
    %v2190 = vmul.f32 %v2188, %v2065
    %2192 = vrot.lane.b32.xlu0 %v2189, 96
    %v2193 = vpop.permute.xlu0 %2192
    %v2195 = vmul.f32 %v2188, %v2193
    %2197 = vrot.lane.b32.xlu0 %v2195, 16
    %v2198 = vpop.permute.xlu0 %2197
    %v2200 = vadd.f32 %v2190, %v2198
    %v2201 = vtanh.pop %v2200
    %2203 = vrot.lane.b32.xlu0 %v2201, 32
    %v2204 = vpop.permute.xlu0 %2203
    %v2206 = vmul.f32 %v2188, %v2204
    %2208 = vrot.lane.b32.xlu0 %v2206, 80
    %v2209 = vpop.permute.xlu0 %2208
    %2211 = vrot.lane.b32.xlu0 %v2166, 64
    %v2212 = vpop.permute.xlu0 %2211
    %v2214 = vsel %vm148, %v2209, 0
    %2216 = vmatpush.msra.mxu0 0.0
    %2217 = vmatpush.msra.mxu0 0.0
    %2218 = vmatpush.msra.mxu0 0.0
    %2219 = vmatpush.msra.mxu0 0.0
    %2220 = vmatpush.msra.mxu0 0.0
    %2221 = vmatpush.msra.mxu0 0.0
    %2222 = vmatpush.msra.mxu0 0.0
    %2223 = vmatpush.msra.mxu0 0.0
    %2224 = vmatpush.msra.mxu0 0.0
    %2225 = vmatpush.msra.mxu0 0.0
    %2226 = vmatpush.msra.mxu0 0.0
    %2227 = vmatpush.msra.mxu0 0.0
    %2228 = vmatpush.msra.mxu0 0.0
    %2229 = vmatpush.msra.mxu0 0.0
    %2230 = vmatpush.msra.mxu0 %v45
    %2231 = vmatpush.msra.mxu0 %v44
    %2232 = vmatmul.f32.gmra.mxu0 %v2214
    %v2233 = vpop.f32.mrf.mxu0
    %v2234 = vadd.f32 %v2212, %v2233
    %2235 = vdwg.mxu0
    %v2236 = vadd.f32 %v2234, %v46
    %v2237 = vxor.u32 %v2236, 2147483648
    %v2238 = vmul.f32 %v2237, 1.442695
    %v2239 = vpow.pop %v2238
    %v2240 = vadd.f32 %v2239, 1.0
    %v2241 = vrcp.pop %v2240
    %v2242 = vmul.f32 %v2240, %v2241
    %v2243 = vsub.f32 1.0, %v2242
    %v2244 = vmul.f32 %v2241, %v2243
    %v2245 = vadd.f32 %v2241, %v2244
    %vm2246 = vweird.f32 %v2240
    %vm2247 = vweird.f32 %v2241
    %vm2248 = vmor %vm2246, %vm2247
    %v2249 = vsel %vm2248, %v2241, %v2245
    %v2250 = vand.u32 2147483647, %v2240
    %vm2251 = vcmp.eq.f32.partialorder %v2250, 8.507059e+37
    %v2252 = vand.u32 %v2240, 2147483648
    %v2253 = vor.u32 1.1754944e-38, %v2252
    %v2254 = vsel %vm2251, %v2253, %v2249
    %v2255 = vmul.f32 1.0, %v2254
    %v2256 = vtanh.pop %v2236
    %v2257 = vmul.f32 %v2255, %v2132
    %2259 = vrot.lane.b32.xlu0 %v2256, 96
    %v2260 = vpop.permute.xlu0 %2259
    %v2262 = vmul.f32 %v2255, %v2260
    %2264 = vrot.lane.b32.xlu0 %v2262, 16
    %v2265 = vpop.permute.xlu0 %2264
    %v2267 = vadd.f32 %v2257, %v2265
    %v2268 = vtanh.pop %v2267
    %2270 = vrot.lane.b32.xlu0 %v2268, 32
    %v2271 = vpop.permute.xlu0 %2270
    %v2273 = vmul.f32 %v2255, %v2271
    %2276 = vrot.lane.b32.xlu0 %v2273, 96
    %v2277 = vpop.permute.xlu0 %2276
    %v2279 = vsel %vm148, %v2209, %v2277
    %v2280 = vmul.f32 %v2279, %v1163
    %2282 = vrot.lane.b32.xlu0 %v2280, 112
    %v2283 = vpop.permute.xlu0 %2282
    %v2285 = vsel %vm1170, %v2283, 0.0
    %2286 = vadd.xlane.f32.xlu0 %v2285
    %v2287 = vpop.xlane.xlu0 %2286
    %v2288 = vadd.f32 %v2287, %v48
    %v2289 = vsub.f32 %v1174, %v2288
    %v2290 = vand.u32 2147483647, %v2289
    %v2291 = vsub.f32 0.0, %v2290
    %v2292 = vsub.f32 %v2291, %v2291
    %v2293 = vmul.f32 %v2292, 1.442695
    %v2294 = vpow.pop %v2293
    %v2295 = vadd.f32 %v2294, 0.0
    %v2296 = vrcp.pop %v2295
    %v2297 = vmul.f32 %v2295, %v2296
    %v2298 = vsub.f32 1.0, %v2297
    %v2299 = vmul.f32 %v2296, %v2298
    %v2300 = vadd.f32 %v2296, %v2299
    %vm2301 = vweird.f32 %v2295
    %vm2302 = vweird.f32 %v2296
    %vm2303 = vmor %vm2301, %vm2302
    %v2304 = vsel %vm2303, %v2296, %v2300
    %v2305 = vand.u32 2147483647, %v2295
    %vm2306 = vcmp.eq.f32.partialorder %v2305, 8.507059e+37
    %v2307 = vand.u32 %v2295, 2147483648
    %v2308 = vor.u32 1.1754944e-38, %v2307
    %v2309 = vsel %vm2306, %v2308, %v2304
    %v2310 = vmul.f32 %v2294, %v2309
    %vm2311 = vcmask 0
    %2312 = vst.msk [vmem:[#allocation4] sm:$0x1] %vm2311, %v2310
    // Predicated region
    $region38: #{siamese_lstm_forward.1} parent=1 // pred_check
      _
    $region39: #{siamese_lstm_forward.1} parent=1 // pred_check_branch
      %2314 = sbr.rel (0) target = $region41
    $region40: #{siamese_lstm_forward.1} parent=1 // pred_region
      %2316 = vsyncadd [#allocation5], 0
      %s2318 = sshll.u32 [#allocation4], 4
      %s2319 = int_to_ptr.vmem [resolvable:$true] %s2318
      %s2320 = sshll.u32 %s9, 4
      %s2321 = int_to_ptr.hbm [resolvable:$true] %s2320
      %2323 = dma.vmem_to_hbm [thread:$0]  %s2319, 16, %s2321, [#allocation5]
    $region41: #{siamese_lstm_forward.1} parent=1 // pred_fallthru
      _
    // Predicated region
    $region42: #{siamese_lstm_forward.1} parent=1 // pred_check
      _
    $region43: #{siamese_lstm_forward.1} parent=1 // pred_check_branch
      %2325 = sbr.rel (0) target = $region45
    $region44: #{siamese_lstm_forward.1} parent=1 // pred_region
      %2327 = dma.done [#allocation5], 16
    $region45: #{siamese_lstm_forward.1} parent=1 // pred_fallthru
      _
    %2328 = vsyncpa [#allocation5], 1

</llo_original>
